<compile_context>
chip_gen: v6e
topology: v6e:2x2x1
jax: 0.10.0
libtpu: 0.0.40
codegen_flags: <defaults>
</compile_context>

<pallas_src>
import functools

import jax
import jax.numpy as jnp
from jax.experimental import pallas as pl
from jax.experimental.pallas import tpu as pltpu

LANE = 128


def _round_up(x, m):
    return ((x + m - 1) // m) * m


# ----------------------------------------------------------------------------
# Kernel: one GaussianConv layer, one TN-row tile per grid step.
#   gathered[n, k*D:(k+1)*D] = features[knn_idx[k, n], :]
#   out = gathered @ Wt + bias ; out = sigmoid(out) unless last layer
# ----------------------------------------------------------------------------
def _gather_rows(feat, idx, gather_mode):
    """Vectorized row gather: rows[i, :] = feat[idx[i], :]."""
    if gather_mode == "take":
        # Fast path: dynamic row gather from the VMEM-resident feature table.
        return jnp.take(feat, idx, axis=0, mode="clip")
    # Fallback (only used if this Mosaic build cannot lower the row gather):
    # one-hot selection matrix on the MXU -- still fully vectorized, no scalar
    # per-row loop.  Exact in f32 (multiplies by 0/1 only).
    n_rows = feat.shape[0]
    sel = (idx[:, None] ==
           jax.lax.broadcasted_iota(jnp.int32, (idx.shape[0], n_rows), 1))
    return jnp.dot(sel.astype(feat.dtype), feat,
                   preferred_element_type=jnp.float32)


def _gaussian_conv_layer_kernel(idx_ref, feat_ref, wt_ref, b_ref, out_ref,
                                gath_ref, *, K, D, apply_sigmoid, gather_mode):
    # idx_ref : VMEM int32 [K, TN]       KNN indices for this tile (transposed)
    # feat_ref: VMEM f32   [N_pad, D]    full feature table (resident over grid)
    # wt_ref  : VMEM f32   [K*D, Cpad]   transposed, lane-padded weight
    # b_ref   : VMEM f32   [1, Cpad]     lane-padded bias
    # out_ref : VMEM f32   [TN, Cpad]    lane-dense output tile
    # gath_ref: VMEM f32   [TN, K*D]     gathered neighborhood tile (scratch)
    feat = feat_ref[...]
    for k in range(K):                      # K is small & static -> unrolled
        gath_ref[:, k * D:(k + 1) * D] = _gather_rows(feat, idx_ref[k],
                                                      gather_mode)
    # One K*D-deep matmul on the MXU (e.g. contraction = 256 for K=8, D=32).
    acc = jnp.dot(gath_ref[...], wt_ref[...],
                  preferred_element_type=jnp.float32)
    acc = acc + b_ref[...]                  # (1, Cpad) broadcasts over rows
    if apply_sigmoid:
        acc = jax.nn.sigmoid(acc)           # exp + reciprocal on the EUP
    out_ref[...] = acc.astype(out_ref.dtype)


# ----------------------------------------------------------------------------
# Wrapper: tiled pallas_call per layer
# ----------------------------------------------------------------------------
_GATHER_MODE = ["take"]   # flips to "onehot" if jnp.take gather can't lower


def _layer_pallas_call(N_pad, D, C_pad, K, tn, apply_sigmoid, gather_mode):
    kernel = functools.partial(_gaussian_conv_layer_kernel, K=K, D=D,
                               apply_sigmoid=apply_sigmoid,
                               gather_mode=gather_mode)
    return pl.pallas_call(
        kernel,
        out_shape=jax.ShapeDtypeStruct((N_pad, C_pad), jnp.float32),
        grid=(N_pad // tn,),
        in_specs=[
            pl.BlockSpec((K, tn), lambda i: (0, i)),          # knn idx tile
            pl.BlockSpec((N_pad, D), lambda i: (0, 0)),       # features (resident)
            pl.BlockSpec((K * D, C_pad), lambda i: (0, 0)),   # weight
            pl.BlockSpec((1, C_pad), lambda i: (0, 0)),       # bias
        ],
        out_specs=pl.BlockSpec((tn, C_pad), lambda i: (i, 0)),
        scratch_shapes=[pltpu.VMEM((tn, K * D), jnp.float32)],
        compiler_params=pltpu.CompilerParams(
            dimension_semantics=("parallel",)),
    )


def gaussian_conv_layer(features, knn_idx_t, weight_t_pad, bias_pad, *, K,
                        out_ch, apply_sigmoid, tn=256):
    """One layer.  features [N, D] f32, knn_idx_t [K, N] i32,
    weight_t_pad [K*D, Cpad] f32, bias_pad [1, Cpad] f32 -> [N, out_ch] f32."""
    N, D = features.shape
    assert weight_t_pad.shape[0] == K * D
    C_pad = weight_t_pad.shape[1]
    tn = _round_up(min(tn, N), LANE)            # TN must be a multiple of 128
    N_pad = _round_up(N, tn)
    if N_pad != N:
        features = jnp.pad(features, ((0, N_pad - N), (0, 0)))
        knn_idx_t = jnp.pad(knn_idx_t, ((0, 0), (0, N_pad - N)))  # idx 0 is valid
    args = (knn_idx_t, features, weight_t_pad, bias_pad)
    try:
        out = _layer_pallas_call(N_pad, D, C_pad, K, tn, apply_sigmoid,
                                 _GATHER_MODE[0])(*args)
    except Exception:
        if _GATHER_MODE[0] == "onehot":
            raise
        _GATHER_MODE[0] = "onehot"   # this build can't lower jnp.take row gather
        out = _layer_pallas_call(N_pad, D, C_pad, K, tn, apply_sigmoid,
                                 "onehot")(*args)
    return out[:N, :out_ch]


# ----------------------------------------------------------------------------
# GaussianConv module (downsample_layer = upsample_layer = [])
# ----------------------------------------------------------------------------
def compute_knn_indices(xyz, K):
    """Exact brute-force KNN (includes the point itself, like sklearn on fit data)."""
    d2 = jnp.sum((xyz[:, None, :] - xyz[None, :, :]) ** 2, axis=-1)
    _, idx = jax.lax.top_k(-d2, K)       # ascending distance; self first
    return idx.astype(jnp.int32)         # [N, K]


def init_conv_params(key, input_channel, layers_channel, K):
    kernels, biases = [], []
    in_ch = input_channel
    for out_ch in layers_channel:
        key, sub = jax.random.split(key)
        kernels.append(jax.random.normal(sub, (out_ch, K * in_ch),
                                         dtype=jnp.float32) * 0.1)
        biases.append(jnp.zeros((1, out_ch), dtype=jnp.float32))
        in_ch = out_ch
    return kernels, biases


def prepare_conv_params(kernels, biases):
    """Transpose weights and pad output channels up to a 128-lane multiple once,
    so the per-forward hot path has no transposes and only full-vreg stores."""
    prepared = []
    for W, b in zip(kernels, biases):
        out_ch, kd = W.shape
        c_pad = _round_up(out_ch, LANE)
        wt = jnp.zeros((kd, c_pad), jnp.float32).at[:, :out_ch].set(W.T)
        bp = jnp.zeros((1, c_pad), jnp.float32).at[:, :out_ch].set(b)
        prepared.append((wt, bp, out_ch))
    return prepared


def gaussian_conv_forward(features, knn_idx, prepared_params, *, K, tn=256):
    knn_idx_t = knn_idx.T.astype(jnp.int32)      # [K, N]
    n_layers = len(prepared_params)
    for i, (wt, bp, out_ch) in enumerate(prepared_params):
        features = gaussian_conv_layer(
            features, knn_idx_t, wt, bp, K=K, out_ch=out_ch,
            apply_sigmoid=(i != n_layers - 1), tn=tn)
    return features


def gaussian_conv_reference(features, knn_idx, kernels, biases):
    """Pure-JAX reference mirroring the PyTorch forward."""
    num_layers = len(kernels)
    for i in range(num_layers):
        knn_feats = features[knn_idx]                       # [N, K, D]
        knn_feats = knn_feats.reshape(knn_feats.shape[0], -1)
        features = knn_feats @ kernels[i].T + biases[i]
        if i != num_layers - 1:
            features = jax.nn.sigmoid(features)
    return features


if __name__ == "__main__":
    # Small shapes consistent with the module (scaled down).
    N = 256             # number of points (2 tiles of TN=128)
    K = 8               # neighbors
    input_channel = 32
    layers_channel = [32, 16, 3]
    TN = 128

    key = jax.random.PRNGKey(0)
    k_xyz, k_feat, k_params = jax.random.split(key, 3)

    xyz = jax.random.normal(k_xyz, (N, 3), dtype=jnp.float32)
    features = jax.random.normal(k_feat, (N, input_channel), dtype=jnp.float32)

    knn_idx = compute_knn_indices(xyz, K)                        # [N, K]
    kernels, biases = init_conv_params(k_params, input_channel,
                                       layers_channel, K)
    prepared = prepare_conv_params(kernels, biases)

    out = gaussian_conv_forward(features, knn_idx, prepared, K=K, tn=TN)
    out = jax.block_until_ready(out)

    ref = jax.block_until_ready(
        gaussian_conv_reference(features, knn_idx, kernels, biases))

    assert out.shape == (N, layers_channel[-1])
    max_err = jnp.max(jnp.abs(out - ref))
    assert jnp.allclose(out, ref, atol=1e-3, rtol=1e-3), (
        f"max abs err = {max_err}")

    print("KERNEL_OK")
</pallas_src>

<mosaic_0001>
module attributes {stable_mosaic.version = 11 : i64} {
  func.func @_gaussian_conv_layer_kernel(%arg0: i32, %arg1: memref<8x128xi32, #tpu.memory_space<vmem>>, %arg2: memref<256x32xf32, #tpu.memory_space<vmem>>, %arg3: memref<256x128xf32, #tpu.memory_space<vmem>>, %arg4: memref<1x128xf32, #tpu.memory_space<vmem>>, %arg5: memref<128x128xf32, #tpu.memory_space<vmem>>, %arg6: memref<128x256xf32, #tpu.memory_space<vmem>>) attributes {dimension_semantics = [#tpu.dimension_semantics<parallel>], iteration_bounds = array<i64: 2>, scalar_prefetch = 0 : i64, scratch_operands = 1 : i64, tpu.core_type = #tpu.core_type<tc>, window_params = [{transform_indices = @transform_0, window_bounds = array<i64: 8, 128>}, {pipeline_mode = #tpu.pipeline_mode<synchronous>, transform_indices = @transform_1, window_bounds = array<i64: 256, 32>}, {pipeline_mode = #tpu.pipeline_mode<synchronous>, transform_indices = @transform_2, window_bounds = array<i64: 256, 128>}, {pipeline_mode = #tpu.pipeline_mode<synchronous>, transform_indices = @transform_3, window_bounds = array<i64: 1, 128>}, {transform_indices = @transform_4, window_bounds = array<i64: 128, 128>}]} {
    %c0 = arith.constant 0 : index
    %c0_0 = arith.constant 0 : index
    %0 = vector.load %arg2[%c0, %c0_0] : memref<256x32xf32, #tpu.memory_space<vmem>>, vector<256x32xf32>
    %c0_1 = arith.constant 0 : index
    %c0_2 = arith.constant 0 : index
    %1 = vector.load %arg1[%c0_1, %c0_2] : memref<8x128xi32, #tpu.memory_space<vmem>>, vector<1x128xi32>
    %2 = vector.shape_cast %1 : vector<1x128xi32> to vector<128xi32>
    %3 = vector.shape_cast %2 : vector<128xi32> to vector<128x1xi32>
    %4 = tpu.iota {dimensions = array<i32: 1>} : vector<128x256xi32>
    %5 = vector.broadcast %3 : vector<128x1xi32> to vector<128x256xi32>
    %6 = arith.cmpi eq, %5, %4 : vector<128x256xi32>
    %7 = arith.extui %6 : vector<128x256xi1> to vector<128x256xi32>
    %8 = arith.sitofp %7 : vector<128x256xi32> to vector<128x256xf32>
    %cst = arith.constant dense<0.000000e+00> : vector<128x32xf32>
    %9 = tpu.matmul %8, %0, %cst {dimension_numbers = #tpu.dot_dimension_numbers<[1], [0], [0], [1], [0, 0, 1, 1], [], []>} : vector<128x256xf32>, vector<256x32xf32>, vector<128x32xf32> -> vector<128x32xf32>
    %c0_3 = arith.constant 0 : index
    %c0_4 = arith.constant 0 : index
    %10 = vector.load %arg6[%c0_3, %c0_4] : memref<128x256xf32, #tpu.memory_space<vmem>>, vector<128x32xf32>
    tpu.vector_store %arg6[%c0_3, %c0_4], %9 {strides = array<i32>} : memref<128x256xf32, #tpu.memory_space<vmem>>, vector<128x32xf32>,
    %c1 = arith.constant 1 : index
    %c0_5 = arith.constant 0 : index
    %11 = vector.load %arg1[%c1, %c0_5] : memref<8x128xi32, #tpu.memory_space<vmem>>, vector<1x128xi32>
    %12 = vector.shape_cast %11 : vector<1x128xi32> to vector<128xi32>
    %13 = vector.shape_cast %12 : vector<128xi32> to vector<128x1xi32>
    %14 = tpu.iota {dimensions = array<i32: 1>} : vector<128x256xi32>
    %15 = vector.broadcast %13 : vector<128x1xi32> to vector<128x256xi32>
    %16 = arith.cmpi eq, %15, %14 : vector<128x256xi32>
    %17 = arith.extui %16 : vector<128x256xi1> to vector<128x256xi32>
    %18 = arith.sitofp %17 : vector<128x256xi32> to vector<128x256xf32>
    %cst_6 = arith.constant dense<0.000000e+00> : vector<128x32xf32>
    %19 = tpu.matmul %18, %0, %cst_6 {dimension_numbers = #tpu.dot_dimension_numbers<[1], [0], [0], [1], [0, 0, 1, 1], [], []>} : vector<128x256xf32>, vector<256x32xf32>, vector<128x32xf32> -> vector<128x32xf32>
    %c0_7 = arith.constant 0 : index
    %c32 = arith.constant 32 : index
    %20 = vector.load %arg6[%c0_7, %c32] : memref<128x256xf32, #tpu.memory_space<vmem>>, vector<128x32xf32>
    tpu.vector_store %arg6[%c0_7, %c32], %19 {strides = array<i32>} : memref<128x256xf32, #tpu.memory_space<vmem>>, vector<128x32xf32>,
    %c2 = arith.constant 2 : index
    %c0_8 = arith.constant 0 : index
    %21 = vector.load %arg1[%c2, %c0_8] : memref<8x128xi32, #tpu.memory_space<vmem>>, vector<1x128xi32>
    %22 = vector.shape_cast %21 : vector<1x128xi32> to vector<128xi32>
    %23 = vector.shape_cast %22 : vector<128xi32> to vector<128x1xi32>
    %24 = tpu.iota {dimensions = array<i32: 1>} : vector<128x256xi32>
    %25 = vector.broadcast %23 : vector<128x1xi32> to vector<128x256xi32>
    %26 = arith.cmpi eq, %25, %24 : vector<128x256xi32>
    %27 = arith.extui %26 : vector<128x256xi1> to vector<128x256xi32>
    %28 = arith.sitofp %27 : vector<128x256xi32> to vector<128x256xf32>
    %cst_9 = arith.constant dense<0.000000e+00> : vector<128x32xf32>
    %29 = tpu.matmul %28, %0, %cst_9 {dimension_numbers = #tpu.dot_dimension_numbers<[1], [0], [0], [1], [0, 0, 1, 1], [], []>} : vector<128x256xf32>, vector<256x32xf32>, vector<128x32xf32> -> vector<128x32xf32>
    %c0_10 = arith.constant 0 : index
    %c64 = arith.constant 64 : index
    %30 = vector.load %arg6[%c0_10, %c64] : memref<128x256xf32, #tpu.memory_space<vmem>>, vector<128x32xf32>
    tpu.vector_store %arg6[%c0_10, %c64], %29 {strides = array<i32>} : memref<128x256xf32, #tpu.memory_space<vmem>>, vector<128x32xf32>,
    %c3 = arith.constant 3 : index
    %c0_11 = arith.constant 0 : index
    %31 = vector.load %arg1[%c3, %c0_11] : memref<8x128xi32, #tpu.memory_space<vmem>>, vector<1x128xi32>
    %32 = vector.shape_cast %31 : vector<1x128xi32> to vector<128xi32>
    %33 = vector.shape_cast %32 : vector<128xi32> to vector<128x1xi32>
    %34 = tpu.iota {dimensions = array<i32: 1>} : vector<128x256xi32>
    %35 = vector.broadcast %33 : vector<128x1xi32> to vector<128x256xi32>
    %36 = arith.cmpi eq, %35, %34 : vector<128x256xi32>
    %37 = arith.extui %36 : vector<128x256xi1> to vector<128x256xi32>
    %38 = arith.sitofp %37 : vector<128x256xi32> to vector<128x256xf32>
    %cst_12 = arith.constant dense<0.000000e+00> : vector<128x32xf32>
    %39 = tpu.matmul %38, %0, %cst_12 {dimension_numbers = #tpu.dot_dimension_numbers<[1], [0], [0], [1], [0, 0, 1, 1], [], []>} : vector<128x256xf32>, vector<256x32xf32>, vector<128x32xf32> -> vector<128x32xf32>
    %c0_13 = arith.constant 0 : index
    %c96 = arith.constant 96 : index
    %40 = vector.load %arg6[%c0_13, %c96] : memref<128x256xf32, #tpu.memory_space<vmem>>, vector<128x32xf32>
    tpu.vector_store %arg6[%c0_13, %c96], %39 {strides = array<i32>} : memref<128x256xf32, #tpu.memory_space<vmem>>, vector<128x32xf32>,
    %c4 = arith.constant 4 : index
    %c0_14 = arith.constant 0 : index
    %41 = vector.load %arg1[%c4, %c0_14] : memref<8x128xi32, #tpu.memory_space<vmem>>, vector<1x128xi32>
    %42 = vector.shape_cast %41 : vector<1x128xi32> to vector<128xi32>
    %43 = vector.shape_cast %42 : vector<128xi32> to vector<128x1xi32>
    %44 = tpu.iota {dimensions = array<i32: 1>} : vector<128x256xi32>
    %45 = vector.broadcast %43 : vector<128x1xi32> to vector<128x256xi32>
    %46 = arith.cmpi eq, %45, %44 : vector<128x256xi32>
    %47 = arith.extui %46 : vector<128x256xi1> to vector<128x256xi32>
    %48 = arith.sitofp %47 : vector<128x256xi32> to vector<128x256xf32>
    %cst_15 = arith.constant dense<0.000000e+00> : vector<128x32xf32>
    %49 = tpu.matmul %48, %0, %cst_15 {dimension_numbers = #tpu.dot_dimension_numbers<[1], [0], [0], [1], [0, 0, 1, 1], [], []>} : vector<128x256xf32>, vector<256x32xf32>, vector<128x32xf32> -> vector<128x32xf32>
    %c0_16 = arith.constant 0 : index
    %c128 = arith.constant 128 : index
    %50 = vector.load %arg6[%c0_16, %c128] : memref<128x256xf32, #tpu.memory_space<vmem>>, vector<128x32xf32>
    tpu.vector_store %arg6[%c0_16, %c128], %49 {strides = array<i32>} : memref<128x256xf32, #tpu.memory_space<vmem>>, vector<128x32xf32>,
    %c5 = arith.constant 5 : index
    %c0_17 = arith.constant 0 : index
    %51 = vector.load %arg1[%c5, %c0_17] : memref<8x128xi32, #tpu.memory_space<vmem>>, vector<1x128xi32>
    %52 = vector.shape_cast %51 : vector<1x128xi32> to vector<128xi32>
    %53 = vector.shape_cast %52 : vector<128xi32> to vector<128x1xi32>
    %54 = tpu.iota {dimensions = array<i32: 1>} : vector<128x256xi32>
    %55 = vector.broadcast %53 : vector<128x1xi32> to vector<128x256xi32>
    %56 = arith.cmpi eq, %55, %54 : vector<128x256xi32>
    %57 = arith.extui %56 : vector<128x256xi1> to vector<128x256xi32>
    %58 = arith.sitofp %57 : vector<128x256xi32> to vector<128x256xf32>
    %cst_18 = arith.constant dense<0.000000e+00> : vector<128x32xf32>
    %59 = tpu.matmul %58, %0, %cst_18 {dimension_numbers = #tpu.dot_dimension_numbers<[1], [0], [0], [1], [0, 0, 1, 1], [], []>} : vector<128x256xf32>, vector<256x32xf32>, vector<128x32xf32> -> vector<128x32xf32>
    %c0_19 = arith.constant 0 : index
    %c160 = arith.constant 160 : index
    %60 = vector.load %arg6[%c0_19, %c160] : memref<128x256xf32, #tpu.memory_space<vmem>>, vector<128x32xf32>
    tpu.vector_store %arg6[%c0_19, %c160], %59 {strides = array<i32>} : memref<128x256xf32, #tpu.memory_space<vmem>>, vector<128x32xf32>,
    %c6 = arith.constant 6 : index
    %c0_20 = arith.constant 0 : index
    %61 = vector.load %arg1[%c6, %c0_20] : memref<8x128xi32, #tpu.memory_space<vmem>>, vector<1x128xi32>
    %62 = vector.shape_cast %61 : vector<1x128xi32> to vector<128xi32>
    %63 = vector.shape_cast %62 : vector<128xi32> to vector<128x1xi32>
    %64 = tpu.iota {dimensions = array<i32: 1>} : vector<128x256xi32>
    %65 = vector.broadcast %63 : vector<128x1xi32> to vector<128x256xi32>
    %66 = arith.cmpi eq, %65, %64 : vector<128x256xi32>
    %67 = arith.extui %66 : vector<128x256xi1> to vector<128x256xi32>
    %68 = arith.sitofp %67 : vector<128x256xi32> to vector<128x256xf32>
    %cst_21 = arith.constant dense<0.000000e+00> : vector<128x32xf32>
    %69 = tpu.matmul %68, %0, %cst_21 {dimension_numbers = #tpu.dot_dimension_numbers<[1], [0], [0], [1], [0, 0, 1, 1], [], []>} : vector<128x256xf32>, vector<256x32xf32>, vector<128x32xf32> -> vector<128x32xf32>
    %c0_22 = arith.constant 0 : index
    %c192 = arith.constant 192 : index
    %70 = vector.load %arg6[%c0_22, %c192] : memref<128x256xf32, #tpu.memory_space<vmem>>, vector<128x32xf32>
    tpu.vector_store %arg6[%c0_22, %c192], %69 {strides = array<i32>} : memref<128x256xf32, #tpu.memory_space<vmem>>, vector<128x32xf32>,
    %c7 = arith.constant 7 : index
    %c0_23 = arith.constant 0 : index
    %71 = vector.load %arg1[%c7, %c0_23] : memref<8x128xi32, #tpu.memory_space<vmem>>, vector<1x128xi32>
    %72 = vector.shape_cast %71 : vector<1x128xi32> to vector<128xi32>
    %73 = vector.shape_cast %72 : vector<128xi32> to vector<128x1xi32>
    %74 = tpu.iota {dimensions = array<i32: 1>} : vector<128x256xi32>
    %75 = vector.broadcast %73 : vector<128x1xi32> to vector<128x256xi32>
    %76 = arith.cmpi eq, %75, %74 : vector<128x256xi32>
    %77 = arith.extui %76 : vector<128x256xi1> to vector<128x256xi32>
    %78 = arith.sitofp %77 : vector<128x256xi32> to vector<128x256xf32>
    %cst_24 = arith.constant dense<0.000000e+00> : vector<128x32xf32>
    %79 = tpu.matmul %78, %0, %cst_24 {dimension_numbers = #tpu.dot_dimension_numbers<[1], [0], [0], [1], [0, 0, 1, 1], [], []>} : vector<128x256xf32>, vector<256x32xf32>, vector<128x32xf32> -> vector<128x32xf32>
    %c0_25 = arith.constant 0 : index
    %c224 = arith.constant 224 : index
    %80 = vector.load %arg6[%c0_25, %c224] : memref<128x256xf32, #tpu.memory_space<vmem>>, vector<128x32xf32>
    tpu.vector_store %arg6[%c0_25, %c224], %79 {strides = array<i32>} : memref<128x256xf32, #tpu.memory_space<vmem>>, vector<128x32xf32>,
    %c0_26 = arith.constant 0 : index
    %c0_27 = arith.constant 0 : index
    %81 = vector.load %arg6[%c0_26, %c0_27] : memref<128x256xf32, #tpu.memory_space<vmem>>, vector<128x256xf32>
    %c0_28 = arith.constant 0 : index
    %c0_29 = arith.constant 0 : index
    %82 = vector.load %arg3[%c0_28, %c0_29] : memref<256x128xf32, #tpu.memory_space<vmem>>, vector<256x128xf32>
    %cst_30 = arith.constant dense<0.000000e+00> : vector<128x128xf32>
    %83 = tpu.matmul %81, %82, %cst_30 {dimension_numbers = #tpu.dot_dimension_numbers<[1], [0], [0], [1], [0, 0, 1, 1], [], []>} : vector<128x256xf32>, vector<256x128xf32>, vector<128x128xf32> -> vector<128x128xf32>
    %c0_31 = arith.constant 0 : index
    %c0_32 = arith.constant 0 : index
    %84 = vector.load %arg4[%c0_31, %c0_32] : memref<1x128xf32, #tpu.memory_space<vmem>>, vector<1x128xf32>
    %85 = vector.broadcast %84 : vector<1x128xf32> to vector<128x128xf32>
    %86 = arith.addf %83, %85 : vector<128x128xf32>
    %87 = arith.negf %86 : vector<128x128xf32>
    %88 = math.exp %87 : vector<128x128xf32>
    %cst_33 = arith.constant 1.000000e+00 : f32
    %89 = vector.broadcast %cst_33 : f32 to vector<128x128xf32>
    %90 = arith.addf %89, %88 : vector<128x128xf32>
    %91 = arith.divf %89, %90 : vector<128x128xf32>
    %c0_34 = arith.constant 0 : index
    %c0_35 = arith.constant 0 : index
    %92 = vector.load %arg5[%c0_34, %c0_35] : memref<128x128xf32, #tpu.memory_space<vmem>>, vector<128x128xf32>
    tpu.vector_store %arg5[%c0_34, %c0_35], %91 {strides = array<i32>} : memref<128x128xf32, #tpu.memory_space<vmem>>, vector<128x128xf32>,
    return
  }
  func.func @transform_0(%arg0: i32) -> (i32, i32) {
    %c0_i32 = arith.constant 0 : i32
    %c0_i32_0 = arith.constant 0 : i32
    return %c0_i32, %arg0 : i32, i32
  }
  func.func @transform_1(%arg0: i32) -> (i32, i32) {
    %c0_i32 = arith.constant 0 : i32
    %c0_i32_0 = arith.constant 0 : i32
    %c0_i32_1 = arith.constant 0 : i32
    return %c0_i32, %c0_i32_0 : i32, i32
  }
  func.func @transform_2(%arg0: i32) -> (i32, i32) {
    %c0_i32 = arith.constant 0 : i32
    %c0_i32_0 = arith.constant 0 : i32
    %c0_i32_1 = arith.constant 0 : i32
    return %c0_i32, %c0_i32_0 : i32, i32
  }
  func.func @transform_3(%arg0: i32) -> (i32, i32) {
    %c0_i32 = arith.constant 0 : i32
    %c0_i32_0 = arith.constant 0 : i32
    %c0_i32_1 = arith.constant 0 : i32
    return %c0_i32, %c0_i32_0 : i32, i32
  }
  func.func @transform_4(%arg0: i32) -> (i32, i32) {
    %c0_i32 = arith.constant 0 : i32
    %c0_i32_0 = arith.constant 0 : i32
    return %arg0, %c0_i32 : i32, i32
  }
}

</mosaic_0001>

<llo_original>
// kernel: tpu_custom_call.1
$region0: #{tpu_custom_call.1}
  #allocation0 [shape = 'u32[]', space=smem, size = 0x4, offset = 0x4, fixed_abs, tag = 'smem constant byte address 0x4 - core index']
  #allocation1 [shape = 'u32[144,128]{1,0:T(1,128)}', space=vmem, size = 0x12000, scoped, tag = 'internal scratch']
  #allocation2 [shape = 'f32[128,256]{1,0:T(8,128)}', space=vmem, size = 0x20000, scoped, tag = 'scratch operand']
  %s0 = inlined_call_operand.vmem [shape: s32[8,256], index: 0, kind: input, shape index: {}]
  %s1 = inlined_call_operand.vmem [shape: f32[256,32], index: 1, kind: input, shape index: {}]
  %s2 = inlined_call_operand.vmem [shape: f32[256,128], index: 2, kind: input, shape index: {}]
  %s3 = inlined_call_operand.vmem [shape: f32[1,128], index: 3, kind: input, shape index: {}]
  %s4 = inlined_call_operand.hbm [shape: f32[256,128], index: 4, kind: output, shape index: {}]
  %s5 = sld [smem:[#allocation0]]
  $region49: #{tpu_custom_call.1} parent=0
    _
  %s7 = ssub.s32 1, %s5
  %s8 = scalar_select 0, %s7, %s5
  $region1: #{tpu_custom_call.1} parent=0
    #allocation3 [shape = 'u8[131072]{0}', space=vmem, size = 0x20000, scoped, tag = 'output window, operand 0']
    #allocation4 [shape = 's32[2]{0}', space=sflag, size = 0x8, scoped, tag = 'scoped memory for tpu_custom_call.1']
    %9 = vsyncpa [#allocation4], 0
    %s10 = scalar_lea.sflag [#allocation4], 1
    %11 = vsyncpa %s10, 0
    loop: start=0, step=1, limit=4
    $region2: #{tpu_custom_call.1} parent=1 // loop_pre_header
      _
    $region3: #{tpu_custom_call.1} parent=1 // loop_header
      %s13 = sphi 0, %s17
      %p14 = scmp.ge.s32.totalorder %s13, 4
      %s23 = sphi 0, %s25
      %s26 = sphi 0, %s23
      %s27 = sphi 0, %s26
      %s43 = sphi 0, %s27
      %s47 = sphi 0, %s47
      %s49 = sphi 0, %s47
      %s50 = sphi 0, %s49
      %s64 = sphi 0, %s50
      %s68 = sphi 0, %s68
      %s70 = sphi 0, %s68
      %s71 = sphi 0, %s70
      %s85 = sphi 0, %s71
      %s89 = sphi 0, %s89
      %s91 = sphi 0, %s89
      %s92 = sphi 0, %s91
      %s106 = sphi 0, %s92
      %s112 = sphi 0, %s114
      %s115 = sphi 0, %s112
      %s116 = sphi 0, %s115
      %s132 = sphi 0, %s116
    $region4: #{tpu_custom_call.1} parent=1 // loop_header_branch
      %16 = sbr.rel (%p14) target = $region8
    $region5: #{tpu_custom_call.1} parent=1 // loop_body
      %s18 = ssub.s32 %s13, 1
      %s19 = ssub.s32 %s13, 2
      %s20 = sadd.s32 %s13, 1
      %s21 = ssub.s32 %s13, %s20
      %p22 = scmp.eq.s32.totalorder %s21, 0
      %s24 = sadd.s32 %s23, 1
      %s25 = scalar_select %p22, %s23, %s24
      %p28 = pneg %p22
      %p29 = scmp.eq.s32.totalorder %s13, 1
      %p30 = por %p28, %p29
      %p31 = scmp.ne.s32.totalorder %s23, %s26
      %p32 = scmp.eq.s32.totalorder %s13, 0
      %p33 = por %p31, %p32
      %p34 = scmp.ne.s32.totalorder %s23, %s26
      %p35 = scmp.eq.s32.totalorder %s18, 1
      %p36 = por %p34, %p35
      %p37 = scmp.ne.s32.totalorder %s26, %s27
      %p38 = scmp.eq.s32.totalorder %s18, 0
      %p39 = por %p37, %p38
      %p40 = scmp.ne.s32.totalorder %s26, %s27
      %p41 = scmp.eq.s32.totalorder %s19, 1
      %p42 = por %p40, %p41
      %p44 = scmp.ne.s32.totalorder %s27, %s43
      %p45 = scmp.eq.s32.totalorder %s19, 0
      %p46 = por %p44, %p45
      %s48 = sadd.s32 %s47, 1
      %p51 = scmp.eq.s32.totalorder %s13, 1
      %p52 = scmp.ne.s32.totalorder %s47, %s49
      %p53 = scmp.eq.s32.totalorder %s13, 0
      %p54 = por %p52, %p53
      %p55 = scmp.ne.s32.totalorder %s47, %s49
      %p56 = scmp.eq.s32.totalorder %s18, 1
      %p57 = por %p55, %p56
      %p58 = scmp.ne.s32.totalorder %s49, %s50
      %p59 = scmp.eq.s32.totalorder %s18, 0
      %p60 = por %p58, %p59
      %p61 = scmp.ne.s32.totalorder %s49, %s50
      %p62 = scmp.eq.s32.totalorder %s19, 1
      %p63 = por %p61, %p62
      %p65 = scmp.ne.s32.totalorder %s50, %s64
      %p66 = scmp.eq.s32.totalorder %s19, 0
      %p67 = por %p65, %p66
      %s69 = sadd.s32 %s68, 1
      %p72 = scmp.eq.s32.totalorder %s13, 1
      %p73 = scmp.ne.s32.totalorder %s68, %s70
      %p74 = scmp.eq.s32.totalorder %s13, 0
      %p75 = por %p73, %p74
      %p76 = scmp.ne.s32.totalorder %s68, %s70
      %p77 = scmp.eq.s32.totalorder %s18, 1
      %p78 = por %p76, %p77
      %p79 = scmp.ne.s32.totalorder %s70, %s71
      %p80 = scmp.eq.s32.totalorder %s18, 0
      %p81 = por %p79, %p80
      %p82 = scmp.ne.s32.totalorder %s70, %s71
      %p83 = scmp.eq.s32.totalorder %s19, 1
      %p84 = por %p82, %p83
      %p86 = scmp.ne.s32.totalorder %s71, %s85
      %p87 = scmp.eq.s32.totalorder %s19, 0
      %p88 = por %p86, %p87
      %s90 = sadd.s32 %s89, 1
      %p93 = scmp.eq.s32.totalorder %s13, 1
      %p94 = scmp.ne.s32.totalorder %s89, %s91
      %p95 = scmp.eq.s32.totalorder %s13, 0
      %p96 = por %p94, %p95
      %p97 = scmp.ne.s32.totalorder %s89, %s91
      %p98 = scmp.eq.s32.totalorder %s18, 1
      %p99 = por %p97, %p98
      %p100 = scmp.ne.s32.totalorder %s91, %s92
      %p101 = scmp.eq.s32.totalorder %s18, 0
      %p102 = por %p100, %p101
      %p103 = scmp.ne.s32.totalorder %s91, %s92
      %p104 = scmp.eq.s32.totalorder %s19, 1
      %p105 = por %p103, %p104
      %p107 = scmp.ne.s32.totalorder %s92, %s106
      %p108 = scmp.eq.s32.totalorder %s19, 0
      %p109 = por %p107, %p108
      %s110 = ssub.s32 %s13, %s20
      %p111 = scmp.eq.s32.totalorder %s110, 0
      %s113 = sadd.s32 %s112, 1
      %s114 = scalar_select %p111, %s112, %s113
      %p117 = pneg %p111
      %p118 = scmp.eq.s32.totalorder %s13, 1
      %p119 = por %p117, %p118
      %p120 = scmp.ne.s32.totalorder %s112, %s115
      %p121 = scmp.eq.s32.totalorder %s13, 0
      %p122 = por %p120, %p121
      %p123 = scmp.ne.s32.totalorder %s112, %s115
      %p124 = scmp.eq.s32.totalorder %s18, 1
      %p125 = por %p123, %p124
      %p126 = scmp.ne.s32.totalorder %s115, %s116
      %p127 = scmp.eq.s32.totalorder %s18, 0
      %p128 = por %p126, %p127
      %p129 = scmp.ne.s32.totalorder %s115, %s116
      %p130 = scmp.eq.s32.totalorder %s19, 1
      %p131 = por %p129, %p130
      %p133 = scmp.ne.s32.totalorder %s116, %s132
      %p134 = scmp.eq.s32.totalorder %s19, 0
      %p135 = por %p133, %p134
      %p136 = scmp.le.s32.totalorder 1, %s13
      %p137 = scmp.lt.s32.totalorder %s13, 3
      %p138 = pnand %p136, %p137
      %p139 = pneg %p138
      // Predicated region
      $region9: #{tpu_custom_call.1} parent=5 // pred_check
        _
      $region10: #{tpu_custom_call.1} parent=5 // pred_check_branch
        %141 = sbr.rel (%p138) target = $region12
      $region11: #{tpu_custom_call.1} parent=5 // pred_region
        %s142 = ssub.s32 %s13, 1
        // Predicated region
        $region13: #{tpu_custom_call.1} parent=11 // pred_check
          %p143 = pneg %p60
        $region14: #{tpu_custom_call.1} parent=11 // pred_check_branch
          %145 = sbr.rel (%p143) target = $region16
        $region15: #{tpu_custom_call.1} parent=11 // pred_region
          _
        $region16: #{tpu_custom_call.1} parent=11 // pred_fallthru
          _
        // Predicated region
        $region17: #{tpu_custom_call.1} parent=11 // pred_check
          %p146 = pneg %p81
        $region18: #{tpu_custom_call.1} parent=11 // pred_check_branch
          %148 = sbr.rel (%p146) target = $region20
        $region19: #{tpu_custom_call.1} parent=11 // pred_region
          _
        $region20: #{tpu_custom_call.1} parent=11 // pred_fallthru
          _
        // Predicated region
        $region21: #{tpu_custom_call.1} parent=11 // pred_check
          %p149 = pneg %p102
        $region22: #{tpu_custom_call.1} parent=11 // pred_check_branch
          %151 = sbr.rel (%p149) target = $region24
        $region23: #{tpu_custom_call.1} parent=11 // pred_region
          _
        $region24: #{tpu_custom_call.1} parent=11 // pred_fallthru
          _
      $region12: #{tpu_custom_call.1} parent=5 // pred_fallthru
        _
      %p152 = scmp.lt.s32.totalorder %s13, 2
      // Predicated region
      $region25: #{tpu_custom_call.1} parent=5 // pred_check
        %p153 = pneg %p152
      $region26: #{tpu_custom_call.1} parent=5 // pred_check_branch
        %155 = sbr.rel (%p153) target = $region28
      $region27: #{tpu_custom_call.1} parent=5 // pred_region
        // Predicated region
        $region29: #{tpu_custom_call.1} parent=27 // pred_check
          %p156 = pneg %p33
        $region30: #{tpu_custom_call.1} parent=27 // pred_check_branch
          %158 = sbr.rel (%p156) target = $region32
        $region31: #{tpu_custom_call.1} parent=27 // pred_region
          %p159 = scmp.lt.s32.totalorder %s13, 1
          %s160 = scalar_select %p159, %s13, 1
          %s161 = smul.addr %s160, 8
          %s162 = scalar_lea.vmem %s0, %s161
        $region32: #{tpu_custom_call.1} parent=27 // pred_fallthru
          _
      $region28: #{tpu_custom_call.1} parent=5 // pred_fallthru
        _
      %p163 = scmp.le.s32.totalorder 1, %s13
      %p164 = scmp.lt.s32.totalorder %s13, 3
      %p165 = pnand %p163, %p164
      %p166 = pneg %p165
      // Predicated region
      $region33: #{tpu_custom_call.1} parent=5 // pred_check
        _
      $region34: #{tpu_custom_call.1} parent=5 // pred_check_branch
        %168 = sbr.rel (%p165) target = $region36
      $region35: #{tpu_custom_call.1} parent=5 // pred_region
        %s169 = ssub.s32 %s13, 1
        %p170 = scmp.lt.s32.totalorder %s18, 1
        %s171 = scalar_select %p170, %s18, 1
        %s172 = smul.addr %s171, 8
        %s173 = scalar_lea.vmem %s0, %s172
        %p174 = pneg %p39
        %p175 = pneg %p36
        %p176 = pneg %p60
        %p177 = pneg %p57
        %p178 = pneg %p81
        %p179 = pneg %p78
        %p180 = pneg %p102
        %p181 = pneg %p99
        %p182 = pneg %p128
        %p183 = pneg %p125
        %s184 = sand.u32 %s115, 1
        %s185 = scalar_lea.sflag [#allocation4], %s184
        %s186 = sand.u32 %s115, 1
        %s187 = smul.addr %s186, 128
        %s188 = scalar_lea.vmem [#allocation3], %s187
        %p189 = scmp.lt.s32.totalorder %s18, 1
        %s190 = scalar_select %p189, %s18, 1
        %s191 = smul.addr %s190, 8
        %s192 = scalar_lea.vmem %s0, %s191
        %s193 = smul.u32 16, %s18
        %v194 = vld [vmem:[%s1] sm:$0xff]
        %v195 = vld [vmem:[%s1 + $0x8] sm:$0xff]
        %v196 = vld [vmem:[%s1 + $0x10] sm:$0xff]
        %v197 = vld [vmem:[%s1 + $0x18] sm:$0xff]
        %v198 = vld [vmem:[%s1 + $0x20] sm:$0xff]
        %v199 = vld [vmem:[%s1 + $0x28] sm:$0xff]
        %v200 = vld [vmem:[%s1 + $0x30] sm:$0xff]
        %v201 = vld [vmem:[%s1 + $0x38] sm:$0xff]
        %v202 = vld [vmem:[%s1 + $0x40] sm:$0xff]
        %v203 = vld [vmem:[%s1 + $0x48] sm:$0xff]
        %v204 = vld [vmem:[%s1 + $0x50] sm:$0xff]
        %v205 = vld [vmem:[%s1 + $0x58] sm:$0xff]
        %v206 = vld [vmem:[%s1 + $0x60] sm:$0xff]
        %v207 = vld [vmem:[%s1 + $0x68] sm:$0xff]
        %v208 = vld [vmem:[%s1 + $0x70] sm:$0xff]
        %v209 = vld [vmem:[%s1 + $0x78] sm:$0xff]
        %v210 = vld [vmem:[%s1 + $0x80] sm:$0xff]
        %v211 = vld [vmem:[%s1 + $0x88] sm:$0xff]
        %v212 = vld [vmem:[%s1 + $0x90] sm:$0xff]
        %v213 = vld [vmem:[%s1 + $0x98] sm:$0xff]
        %v214 = vld [vmem:[%s1 + $0xa0] sm:$0xff]
        %v215 = vld [vmem:[%s1 + $0xa8] sm:$0xff]
        %v216 = vld [vmem:[%s1 + $0xb0] sm:$0xff]
        %v217 = vld [vmem:[%s1 + $0xb8] sm:$0xff]
        %v218 = vld [vmem:[%s1 + $0xc0] sm:$0xff]
        %v219 = vld [vmem:[%s1 + $0xc8] sm:$0xff]
        %v220 = vld [vmem:[%s1 + $0xd0] sm:$0xff]
        %v221 = vld [vmem:[%s1 + $0xd8] sm:$0xff]
        %v222 = vld [vmem:[%s1 + $0xe0] sm:$0xff]
        %v223 = vld [vmem:[%s1 + $0xe8] sm:$0xff]
        %v224 = vld [vmem:[%s1 + $0xf0] sm:$0xff]
        %v225 = vld [vmem:[%s1 + $0xf8] sm:$0xff]
        %v226 = vld [vmem:[%s192] sm:$0x1]
        %v227 = vlaneseq
        %v228 = vshrl.u32 %v227, 7
        %v229 = vsub.s32 0, %v228
        %v230 = vrot.slane %v226, %v229
        %232 = vbcast.lane.b32.xlu0 %v230, 256
        %v233 = vpop.permute.xlu0 %232
        %s235 = sor.u32 256, 8
        %236 = vbcast.lane.b32.xlu0 %v230, %s235
        %v237 = vpop.permute.xlu0 %236
        %s239 = sor.u32 256, 16
        %240 = vbcast.lane.b32.xlu0 %v230, %s239
        %v241 = vpop.permute.xlu0 %240
        %s243 = sor.u32 256, 24
        %244 = vbcast.lane.b32.xlu0 %v230, %s243
        %v245 = vpop.permute.xlu0 %244
        %s247 = sor.u32 256, 32
        %248 = vbcast.lane.b32.xlu0 %v230, %s247
        %v249 = vpop.permute.xlu0 %248
        %s251 = sor.u32 256, 40
        %252 = vbcast.lane.b32.xlu0 %v230, %s251
        %v253 = vpop.permute.xlu0 %252
        %s255 = sor.u32 256, 48
        %256 = vbcast.lane.b32.xlu0 %v230, %s255
        %v257 = vpop.permute.xlu0 %256
        %s259 = sor.u32 256, 56
        %260 = vbcast.lane.b32.xlu0 %v230, %s259
        %v261 = vpop.permute.xlu0 %260
        %s263 = sor.u32 256, 64
        %264 = vbcast.lane.b32.xlu0 %v230, %s263
        %v265 = vpop.permute.xlu0 %264
        %s267 = sor.u32 256, 72
        %268 = vbcast.lane.b32.xlu0 %v230, %s267
        %v269 = vpop.permute.xlu0 %268
        %s271 = sor.u32 256, 80
        %272 = vbcast.lane.b32.xlu0 %v230, %s271
        %v273 = vpop.permute.xlu0 %272
        %s275 = sor.u32 256, 88
        %276 = vbcast.lane.b32.xlu0 %v230, %s275
        %v277 = vpop.permute.xlu0 %276
        %s279 = sor.u32 256, 96
        %280 = vbcast.lane.b32.xlu0 %v230, %s279
        %v281 = vpop.permute.xlu0 %280
        %s283 = sor.u32 256, 104
        %284 = vbcast.lane.b32.xlu0 %v230, %s283
        %v285 = vpop.permute.xlu0 %284
        %s287 = sor.u32 256, 112
        %288 = vbcast.lane.b32.xlu0 %v230, %s287
        %v289 = vpop.permute.xlu0 %288
        %s291 = sor.u32 256, 120
        %292 = vbcast.lane.b32.xlu0 %v230, %s291
        %v293 = vpop.permute.xlu0 %292
        %v294 = vlaneseq
        %v295 = vand.u32 %v294, 127
        %v296 = vadd.s32 %v295, 128
        %vm297 = vcmp.eq.s32.totalorder %v233, %v295
        %vm298 = vcmp.eq.s32.totalorder %v233, %v296
        %vm299 = vcmp.eq.s32.totalorder %v237, %v295
        %vm300 = vcmp.eq.s32.totalorder %v237, %v296
        %vm301 = vcmp.eq.s32.totalorder %v241, %v295
        %vm302 = vcmp.eq.s32.totalorder %v241, %v296
        %vm303 = vcmp.eq.s32.totalorder %v245, %v295
        %vm304 = vcmp.eq.s32.totalorder %v245, %v296
        %vm305 = vcmp.eq.s32.totalorder %v249, %v295
        %vm306 = vcmp.eq.s32.totalorder %v249, %v296
        %vm307 = vcmp.eq.s32.totalorder %v253, %v295
        %vm308 = vcmp.eq.s32.totalorder %v253, %v296
        %vm309 = vcmp.eq.s32.totalorder %v257, %v295
        %vm310 = vcmp.eq.s32.totalorder %v257, %v296
        %vm311 = vcmp.eq.s32.totalorder %v261, %v295
        %vm312 = vcmp.eq.s32.totalorder %v261, %v296
        %vm313 = vcmp.eq.s32.totalorder %v265, %v295
        %vm314 = vcmp.eq.s32.totalorder %v265, %v296
        %vm315 = vcmp.eq.s32.totalorder %v269, %v295
        %vm316 = vcmp.eq.s32.totalorder %v269, %v296
        %vm317 = vcmp.eq.s32.totalorder %v273, %v295
        %vm318 = vcmp.eq.s32.totalorder %v273, %v296
        %vm319 = vcmp.eq.s32.totalorder %v277, %v295
        %vm320 = vcmp.eq.s32.totalorder %v277, %v296
        %vm321 = vcmp.eq.s32.totalorder %v281, %v295
        %vm322 = vcmp.eq.s32.totalorder %v281, %v296
        %vm323 = vcmp.eq.s32.totalorder %v285, %v295
        %vm324 = vcmp.eq.s32.totalorder %v285, %v296
        %vm325 = vcmp.eq.s32.totalorder %v289, %v295
        %vm326 = vcmp.eq.s32.totalorder %v289, %v296
        %vm327 = vcmp.eq.s32.totalorder %v293, %v295
        %vm328 = vcmp.eq.s32.totalorder %v293, %v296
        %v329 = vsel %vm297, 1, 0
        %v330 = vsel %vm298, 1, 0
        %v331 = vsel %vm299, 1, 0
        %v332 = vsel %vm300, 1, 0
        %v333 = vsel %vm301, 1, 0
        %v334 = vsel %vm302, 1, 0
        %v335 = vsel %vm303, 1, 0
        %v336 = vsel %vm304, 1, 0
        %v337 = vsel %vm305, 1, 0
        %v338 = vsel %vm306, 1, 0
        %v339 = vsel %vm307, 1, 0
        %v340 = vsel %vm308, 1, 0
        %v341 = vsel %vm309, 1, 0
        %v342 = vsel %vm310, 1, 0
        %v343 = vsel %vm311, 1, 0
        %v344 = vsel %vm312, 1, 0
        %v345 = vsel %vm313, 1, 0
        %v346 = vsel %vm314, 1, 0
        %v347 = vsel %vm315, 1, 0
        %v348 = vsel %vm316, 1, 0
        %v349 = vsel %vm317, 1, 0
        %v350 = vsel %vm318, 1, 0
        %v351 = vsel %vm319, 1, 0
        %v352 = vsel %vm320, 1, 0
        %v353 = vsel %vm321, 1, 0
        %v354 = vsel %vm322, 1, 0
        %v355 = vsel %vm323, 1, 0
        %v356 = vsel %vm324, 1, 0
        %v357 = vsel %vm325, 1, 0
        %v358 = vsel %vm326, 1, 0
        %v359 = vsel %vm327, 1, 0
        %v360 = vsel %vm328, 1, 0
        %v361 = vcvt.s32.f32 %v329
        %v362 = vcvt.s32.f32 %v330
        %v363 = vcvt.s32.f32 %v331
        %v364 = vcvt.s32.f32 %v332
        %v365 = vcvt.s32.f32 %v333
        %v366 = vcvt.s32.f32 %v334
        %v367 = vcvt.s32.f32 %v335
        %v368 = vcvt.s32.f32 %v336
        %v369 = vcvt.s32.f32 %v337
        %v370 = vcvt.s32.f32 %v338
        %v371 = vcvt.s32.f32 %v339
        %v372 = vcvt.s32.f32 %v340
        %v373 = vcvt.s32.f32 %v341
        %v374 = vcvt.s32.f32 %v342
        %v375 = vcvt.s32.f32 %v343
        %v376 = vcvt.s32.f32 %v344
        %v377 = vcvt.s32.f32 %v345
        %v378 = vcvt.s32.f32 %v346
        %v379 = vcvt.s32.f32 %v347
        %v380 = vcvt.s32.f32 %v348
        %v381 = vcvt.s32.f32 %v349
        %v382 = vcvt.s32.f32 %v350
        %v383 = vcvt.s32.f32 %v351
        %v384 = vcvt.s32.f32 %v352
        %v385 = vcvt.s32.f32 %v353
        %v386 = vcvt.s32.f32 %v354
        %v387 = vcvt.s32.f32 %v355
        %v388 = vcvt.s32.f32 %v356
        %v389 = vcvt.s32.f32 %v357
        %v390 = vcvt.s32.f32 %v358
        %v391 = vcvt.s32.f32 %v359
        %v392 = vcvt.s32.f32 %v360
        %393 = vmatprep.subr.mxu0 0.0
        %394 = vmatpush1.msra.mxu0 %v209
        %395 = vmatprep.subr.mxu0 0.0
        %396 = vmatpush1.msra.mxu0 %v208
        %397 = vmatprep.subr.mxu0 0.0
        %398 = vmatpush1.msra.mxu0 %v207
        %399 = vmatprep.subr.mxu0 0.0
        %400 = vmatpush1.msra.mxu0 %v206
        %401 = vmatprep.subr.mxu0 0.0
        %402 = vmatpush1.msra.mxu0 %v205
        %403 = vmatprep.subr.mxu0 0.0
        %404 = vmatpush1.msra.mxu0 %v204
        %405 = vmatprep.subr.mxu0 0.0
        %406 = vmatpush1.msra.mxu0 %v203
        %407 = vmatprep.subr.mxu0 0.0
        %408 = vmatpush1.msra.mxu0 %v202
        %409 = vmatprep.subr.mxu0 0.0
        %410 = vmatpush1.msra.mxu0 %v201
        %411 = vmatprep.subr.mxu0 0.0
        %412 = vmatpush1.msra.mxu0 %v200
        %413 = vmatprep.subr.mxu0 0.0
        %414 = vmatpush1.msra.mxu0 %v199
        %415 = vmatprep.subr.mxu0 0.0
        %416 = vmatpush1.msra.mxu0 %v198
        %417 = vmatprep.subr.mxu0 0.0
        %418 = vmatpush1.msra.mxu0 %v197
        %419 = vmatprep.subr.mxu0 0.0
        %420 = vmatpush1.msra.mxu0 %v196
        %421 = vmatprep.subr.mxu0 0.0
        %422 = vmatpush1.msra.mxu0 %v195
        %423 = vmatprep.subr.mxu0 0.0
        %424 = vmatpush1.msra.mxu0 %v194
        %425 = vmatprep.subr.mxu0 0.0
        %426 = vmatpush2.msra.mxu0 %v225
        %427 = vmatprep.subr.mxu0 0.0
        %428 = vmatpush2.msra.mxu0 %v224
        %429 = vmatprep.subr.mxu0 0.0
        %430 = vmatpush2.msra.mxu0 %v223
        %431 = vmatprep.subr.mxu0 0.0
        %432 = vmatpush2.msra.mxu0 %v222
        %433 = vmatprep.subr.mxu0 0.0
        %434 = vmatpush2.msra.mxu0 %v221
        %435 = vmatprep.subr.mxu0 0.0
        %436 = vmatpush2.msra.mxu0 %v220
        %437 = vmatprep.subr.mxu0 0.0
        %438 = vmatpush2.msra.mxu0 %v219
        %439 = vmatprep.subr.mxu0 0.0
        %440 = vmatpush2.msra.mxu0 %v218
        %441 = vmatprep.subr.mxu0 0.0
        %442 = vmatpush2.msra.mxu0 %v217
        %443 = vmatprep.subr.mxu0 0.0
        %444 = vmatpush2.msra.mxu0 %v216
        %445 = vmatprep.subr.mxu0 0.0
        %446 = vmatpush2.msra.mxu0 %v215
        %447 = vmatprep.subr.mxu0 0.0
        %448 = vmatpush2.msra.mxu0 %v214
        %449 = vmatprep.subr.mxu0 0.0
        %450 = vmatpush2.msra.mxu0 %v213
        %451 = vmatprep.subr.mxu0 0.0
        %452 = vmatpush2.msra.mxu0 %v212
        %453 = vmatprep.subr.mxu0 0.0
        %454 = vmatpush2.msra.mxu0 %v211
        %455 = vmatprep.subr.mxu0 0.0
        %456 = vmatpush2.msra.mxu0 %v210
        %457 = vmatprep.mubr.f32.mxu0 %v362
        %458 = vmatmul.mubr.f32.gmra.mxu0 %v361
        %v459 = vpop.f32.mrf.mxu0
        %v460 = vadd.f32 0.0, %v459
        %v461 = vpop.f32.mrf.mxu0
        %462 = vmatprep.mubr.f32.mxu0 %v364
        %463 = vmatmul.mubr.f32.gmra.mxu0 %v363
        %v464 = vpop.f32.mrf.mxu0
        %v465 = vadd.f32 0.0, %v464
        %v466 = vpop.f32.mrf.mxu0
        %467 = vmatprep.mubr.f32.mxu0 %v366
        %468 = vmatmul.mubr.f32.gmra.mxu0 %v365
        %v469 = vpop.f32.mrf.mxu0
        %v470 = vadd.f32 0.0, %v469
        %v471 = vpop.f32.mrf.mxu0
        %472 = vmatprep.mubr.f32.mxu0 %v368
        %473 = vmatmul.mubr.f32.gmra.mxu0 %v367
        %v474 = vpop.f32.mrf.mxu0
        %v475 = vadd.f32 0.0, %v474
        %v476 = vpop.f32.mrf.mxu0
        %477 = vmatprep.mubr.f32.mxu0 %v370
        %478 = vmatmul.mubr.f32.gmra.mxu0 %v369
        %v479 = vpop.f32.mrf.mxu0
        %v480 = vadd.f32 0.0, %v479
        %v481 = vpop.f32.mrf.mxu0
        %482 = vmatprep.mubr.f32.mxu0 %v372
        %483 = vmatmul.mubr.f32.gmra.mxu0 %v371
        %v484 = vpop.f32.mrf.mxu0
        %v485 = vadd.f32 0.0, %v484
        %v486 = vpop.f32.mrf.mxu0
        %487 = vmatprep.mubr.f32.mxu0 %v374
        %488 = vmatmul.mubr.f32.gmra.mxu0 %v373
        %v489 = vpop.f32.mrf.mxu0
        %v490 = vadd.f32 0.0, %v489
        %v491 = vpop.f32.mrf.mxu0
        %492 = vmatprep.mubr.f32.mxu0 %v376
        %493 = vmatmul.mubr.f32.gmra.mxu0 %v375
        %v494 = vpop.f32.mrf.mxu0
        %v495 = vadd.f32 0.0, %v494
        %v496 = vpop.f32.mrf.mxu0
        %497 = vmatprep.mubr.f32.mxu0 %v378
        %498 = vmatmul.mubr.f32.gmra.mxu0 %v377
        %v499 = vpop.f32.mrf.mxu0
        %v500 = vadd.f32 0.0, %v499
        %v501 = vpop.f32.mrf.mxu0
        %502 = vmatprep.mubr.f32.mxu0 %v380
        %503 = vmatmul.mubr.f32.gmra.mxu0 %v379
        %v504 = vpop.f32.mrf.mxu0
        %v505 = vadd.f32 0.0, %v504
        %v506 = vpop.f32.mrf.mxu0
        %507 = vmatprep.mubr.f32.mxu0 %v382
        %508 = vmatmul.mubr.f32.gmra.mxu0 %v381
        %v509 = vpop.f32.mrf.mxu0
        %v510 = vadd.f32 0.0, %v509
        %v511 = vpop.f32.mrf.mxu0
        %512 = vmatprep.mubr.f32.mxu0 %v384
        %513 = vmatmul.mubr.f32.gmra.mxu0 %v383
        %v514 = vpop.f32.mrf.mxu0
        %v515 = vadd.f32 0.0, %v514
        %v516 = vpop.f32.mrf.mxu0
        %517 = vmatprep.mubr.f32.mxu0 %v386
        %518 = vmatmul.mubr.f32.gmra.mxu0 %v385
        %v519 = vpop.f32.mrf.mxu0
        %v520 = vadd.f32 0.0, %v519
        %v521 = vpop.f32.mrf.mxu0
        %522 = vmatprep.mubr.f32.mxu0 %v388
        %523 = vmatmul.mubr.f32.gmra.mxu0 %v387
        %v524 = vpop.f32.mrf.mxu0
        %v525 = vadd.f32 0.0, %v524
        %v526 = vpop.f32.mrf.mxu0
        %527 = vmatprep.mubr.f32.mxu0 %v390
        %528 = vmatmul.mubr.f32.gmra.mxu0 %v389
        %v529 = vpop.f32.mrf.mxu0
        %v530 = vadd.f32 0.0, %v529
        %v531 = vpop.f32.mrf.mxu0
        %532 = vmatprep.mubr.f32.mxu0 %v392
        %533 = vmatmul.mubr.f32.gmra.mxu0 %v391
        %v534 = vpop.f32.mrf.mxu0
        %v535 = vadd.f32 0.0, %v534
        %v536 = vpop.f32.mrf.mxu0
        %537 = vdwg.mxu0
        %vm538 = vcmask 261120
        %539 = vst.msk [vmem:[#allocation2] sm:$0xff] %vm538, %v460
        %540 = vst.msk [vmem:[#allocation2 + $0x10] sm:$0xff] %vm538, %v465
        %541 = vst.msk [vmem:[#allocation2 + $0x20] sm:$0xff] %vm538, %v470
        %542 = vst.msk [vmem:[#allocation2 + $0x30] sm:$0xff] %vm538, %v475
        %543 = vst.msk [vmem:[#allocation2 + $0x40] sm:$0xff] %vm538, %v480
        %544 = vst.msk [vmem:[#allocation2 + $0x50] sm:$0xff] %vm538, %v485
        %545 = vst.msk [vmem:[#allocation2 + $0x60] sm:$0xff] %vm538, %v490
        %546 = vst.msk [vmem:[#allocation2 + $0x70] sm:$0xff] %vm538, %v495
        %547 = vst.msk [vmem:[#allocation2 + $0x80] sm:$0xff] %vm538, %v500
        %548 = vst.msk [vmem:[#allocation2 + $0x90] sm:$0xff] %vm538, %v505
        %549 = vst.msk [vmem:[#allocation2 + $0xa0] sm:$0xff] %vm538, %v510
        %550 = vst.msk [vmem:[#allocation2 + $0xb0] sm:$0xff] %vm538, %v515
        %551 = vst.msk [vmem:[#allocation2 + $0xc0] sm:$0xff] %vm538, %v520
        %552 = vst.msk [vmem:[#allocation2 + $0xd0] sm:$0xff] %vm538, %v525
        %553 = vst.msk [vmem:[#allocation2 + $0xe0] sm:$0xff] %vm538, %v530
        %554 = vst.msk [vmem:[#allocation2 + $0xf0] sm:$0xff] %vm538, %v535
        %v555 = vld [vmem:[%s192 + $0x1] sm:$0x1]
        %v556 = vlaneseq
        %v557 = vshrl.u32 %v556, 7
        %v558 = vsub.s32 0, %v557
        %v559 = vrot.slane %v555, %v558
        %561 = vbcast.lane.b32.xlu0 %v559, 256
        %v562 = vpop.permute.xlu0 %561
        %s564 = sor.u32 256, 8
        %565 = vbcast.lane.b32.xlu0 %v559, %s564
        %v566 = vpop.permute.xlu0 %565
        %s568 = sor.u32 256, 16
        %569 = vbcast.lane.b32.xlu0 %v559, %s568
        %v570 = vpop.permute.xlu0 %569
        %s572 = sor.u32 256, 24
        %573 = vbcast.lane.b32.xlu0 %v559, %s572
        %v574 = vpop.permute.xlu0 %573
        %s576 = sor.u32 256, 32
        %577 = vbcast.lane.b32.xlu0 %v559, %s576
        %v578 = vpop.permute.xlu0 %577
        %s580 = sor.u32 256, 40
        %581 = vbcast.lane.b32.xlu0 %v559, %s580
        %v582 = vpop.permute.xlu0 %581
        %s584 = sor.u32 256, 48
        %585 = vbcast.lane.b32.xlu0 %v559, %s584
        %v586 = vpop.permute.xlu0 %585
        %s588 = sor.u32 256, 56
        %589 = vbcast.lane.b32.xlu0 %v559, %s588
        %v590 = vpop.permute.xlu0 %589
        %s592 = sor.u32 256, 64
        %593 = vbcast.lane.b32.xlu0 %v559, %s592
        %v594 = vpop.permute.xlu0 %593
        %s596 = sor.u32 256, 72
        %597 = vbcast.lane.b32.xlu0 %v559, %s596
        %v598 = vpop.permute.xlu0 %597
        %s600 = sor.u32 256, 80
        %601 = vbcast.lane.b32.xlu0 %v559, %s600
        %v602 = vpop.permute.xlu0 %601
        %s604 = sor.u32 256, 88
        %605 = vbcast.lane.b32.xlu0 %v559, %s604
        %v606 = vpop.permute.xlu0 %605
        %s608 = sor.u32 256, 96
        %609 = vbcast.lane.b32.xlu0 %v559, %s608
        %v610 = vpop.permute.xlu0 %609
        %s612 = sor.u32 256, 104
        %613 = vbcast.lane.b32.xlu0 %v559, %s612
        %v614 = vpop.permute.xlu0 %613
        %s616 = sor.u32 256, 112
        %617 = vbcast.lane.b32.xlu0 %v559, %s616
        %v618 = vpop.permute.xlu0 %617
        %s620 = sor.u32 256, 120
        %621 = vbcast.lane.b32.xlu0 %v559, %s620
        %v622 = vpop.permute.xlu0 %621
        %vm623 = vcmp.eq.s32.totalorder %v562, %v295
        %vm624 = vcmp.eq.s32.totalorder %v562, %v296
        %vm625 = vcmp.eq.s32.totalorder %v566, %v295
        %vm626 = vcmp.eq.s32.totalorder %v566, %v296
        %vm627 = vcmp.eq.s32.totalorder %v570, %v295
        %vm628 = vcmp.eq.s32.totalorder %v570, %v296
        %vm629 = vcmp.eq.s32.totalorder %v574, %v295
        %vm630 = vcmp.eq.s32.totalorder %v574, %v296
        %vm631 = vcmp.eq.s32.totalorder %v578, %v295
        %vm632 = vcmp.eq.s32.totalorder %v578, %v296
        %vm633 = vcmp.eq.s32.totalorder %v582, %v295
        %vm634 = vcmp.eq.s32.totalorder %v582, %v296
        %vm635 = vcmp.eq.s32.totalorder %v586, %v295
        %vm636 = vcmp.eq.s32.totalorder %v586, %v296
        %vm637 = vcmp.eq.s32.totalorder %v590, %v295
        %vm638 = vcmp.eq.s32.totalorder %v590, %v296
        %vm639 = vcmp.eq.s32.totalorder %v594, %v295
        %vm640 = vcmp.eq.s32.totalorder %v594, %v296
        %vm641 = vcmp.eq.s32.totalorder %v598, %v295
        %vm642 = vcmp.eq.s32.totalorder %v598, %v296
        %vm643 = vcmp.eq.s32.totalorder %v602, %v295
        %vm644 = vcmp.eq.s32.totalorder %v602, %v296
        %vm645 = vcmp.eq.s32.totalorder %v606, %v295
        %vm646 = vcmp.eq.s32.totalorder %v606, %v296
        %vm647 = vcmp.eq.s32.totalorder %v610, %v295
        %vm648 = vcmp.eq.s32.totalorder %v610, %v296
        %vm649 = vcmp.eq.s32.totalorder %v614, %v295
        %vm650 = vcmp.eq.s32.totalorder %v614, %v296
        %vm651 = vcmp.eq.s32.totalorder %v618, %v295
        %vm652 = vcmp.eq.s32.totalorder %v618, %v296
        %vm653 = vcmp.eq.s32.totalorder %v622, %v295
        %vm654 = vcmp.eq.s32.totalorder %v622, %v296
        %v655 = vsel %vm623, 1, 0
        %v656 = vsel %vm624, 1, 0
        %v657 = vsel %vm625, 1, 0
        %v658 = vsel %vm626, 1, 0
        %v659 = vsel %vm627, 1, 0
        %v660 = vsel %vm628, 1, 0
        %v661 = vsel %vm629, 1, 0
        %v662 = vsel %vm630, 1, 0
        %v663 = vsel %vm631, 1, 0
        %v664 = vsel %vm632, 1, 0
        %v665 = vsel %vm633, 1, 0
        %v666 = vsel %vm634, 1, 0
        %v667 = vsel %vm635, 1, 0
        %v668 = vsel %vm636, 1, 0
        %v669 = vsel %vm637, 1, 0
        %v670 = vsel %vm638, 1, 0
        %v671 = vsel %vm639, 1, 0
        %v672 = vsel %vm640, 1, 0
        %v673 = vsel %vm641, 1, 0
        %v674 = vsel %vm642, 1, 0
        %v675 = vsel %vm643, 1, 0
        %v676 = vsel %vm644, 1, 0
        %v677 = vsel %vm645, 1, 0
        %v678 = vsel %vm646, 1, 0
        %v679 = vsel %vm647, 1, 0
        %v680 = vsel %vm648, 1, 0
        %v681 = vsel %vm649, 1, 0
        %v682 = vsel %vm650, 1, 0
        %v683 = vsel %vm651, 1, 0
        %v684 = vsel %vm652, 1, 0
        %v685 = vsel %vm653, 1, 0
        %v686 = vsel %vm654, 1, 0
        %v687 = vcvt.s32.f32 %v655
        %v688 = vcvt.s32.f32 %v656
        %v689 = vcvt.s32.f32 %v657
        %v690 = vcvt.s32.f32 %v658
        %v691 = vcvt.s32.f32 %v659
        %v692 = vcvt.s32.f32 %v660
        %v693 = vcvt.s32.f32 %v661
        %v694 = vcvt.s32.f32 %v662
        %v695 = vcvt.s32.f32 %v663
        %v696 = vcvt.s32.f32 %v664
        %v697 = vcvt.s32.f32 %v665
        %v698 = vcvt.s32.f32 %v666
        %v699 = vcvt.s32.f32 %v667
        %v700 = vcvt.s32.f32 %v668
        %v701 = vcvt.s32.f32 %v669
        %v702 = vcvt.s32.f32 %v670
        %v703 = vcvt.s32.f32 %v671
        %v704 = vcvt.s32.f32 %v672
        %v705 = vcvt.s32.f32 %v673
        %v706 = vcvt.s32.f32 %v674
        %v707 = vcvt.s32.f32 %v675
        %v708 = vcvt.s32.f32 %v676
        %v709 = vcvt.s32.f32 %v677
        %v710 = vcvt.s32.f32 %v678
        %v711 = vcvt.s32.f32 %v679
        %v712 = vcvt.s32.f32 %v680
        %v713 = vcvt.s32.f32 %v681
        %v714 = vcvt.s32.f32 %v682
        %v715 = vcvt.s32.f32 %v683
        %v716 = vcvt.s32.f32 %v684
        %v717 = vcvt.s32.f32 %v685
        %v718 = vcvt.s32.f32 %v686
        %719 = vmatprep.subr.mxu0 0.0
        %720 = vmatpush1.msra.mxu0 %v209
        %721 = vmatprep.subr.mxu0 0.0
        %722 = vmatpush1.msra.mxu0 %v208
        %723 = vmatprep.subr.mxu0 0.0
        %724 = vmatpush1.msra.mxu0 %v207
        %725 = vmatprep.subr.mxu0 0.0
        %726 = vmatpush1.msra.mxu0 %v206
        %727 = vmatprep.subr.mxu0 0.0
        %728 = vmatpush1.msra.mxu0 %v205
        %729 = vmatprep.subr.mxu0 0.0
        %730 = vmatpush1.msra.mxu0 %v204
        %731 = vmatprep.subr.mxu0 0.0
        %732 = vmatpush1.msra.mxu0 %v203
        %733 = vmatprep.subr.mxu0 0.0
        %734 = vmatpush1.msra.mxu0 %v202
        %735 = vmatprep.subr.mxu0 0.0
        %736 = vmatpush1.msra.mxu0 %v201
        %737 = vmatprep.subr.mxu0 0.0
        %738 = vmatpush1.msra.mxu0 %v200
        %739 = vmatprep.subr.mxu0 0.0
        %740 = vmatpush1.msra.mxu0 %v199
        %741 = vmatprep.subr.mxu0 0.0
        %742 = vmatpush1.msra.mxu0 %v198
        %743 = vmatprep.subr.mxu0 0.0
        %744 = vmatpush1.msra.mxu0 %v197
        %745 = vmatprep.subr.mxu0 0.0
        %746 = vmatpush1.msra.mxu0 %v196
        %747 = vmatprep.subr.mxu0 0.0
        %748 = vmatpush1.msra.mxu0 %v195
        %749 = vmatprep.subr.mxu0 0.0
        %750 = vmatpush1.msra.mxu0 %v194
        %751 = vmatprep.subr.mxu0 0.0
        %752 = vmatpush2.msra.mxu0 %v225
        %753 = vmatprep.subr.mxu0 0.0
        %754 = vmatpush2.msra.mxu0 %v224
        %755 = vmatprep.subr.mxu0 0.0
        %756 = vmatpush2.msra.mxu0 %v223
        %757 = vmatprep.subr.mxu0 0.0
        %758 = vmatpush2.msra.mxu0 %v222
        %759 = vmatprep.subr.mxu0 0.0
        %760 = vmatpush2.msra.mxu0 %v221
        %761 = vmatprep.subr.mxu0 0.0
        %762 = vmatpush2.msra.mxu0 %v220
        %763 = vmatprep.subr.mxu0 0.0
        %764 = vmatpush2.msra.mxu0 %v219
        %765 = vmatprep.subr.mxu0 0.0
        %766 = vmatpush2.msra.mxu0 %v218
        %767 = vmatprep.subr.mxu0 0.0
        %768 = vmatpush2.msra.mxu0 %v217
        %769 = vmatprep.subr.mxu0 0.0
        %770 = vmatpush2.msra.mxu0 %v216
        %771 = vmatprep.subr.mxu0 0.0
        %772 = vmatpush2.msra.mxu0 %v215
        %773 = vmatprep.subr.mxu0 0.0
        %774 = vmatpush2.msra.mxu0 %v214
        %775 = vmatprep.subr.mxu0 0.0
        %776 = vmatpush2.msra.mxu0 %v213
        %777 = vmatprep.subr.mxu0 0.0
        %778 = vmatpush2.msra.mxu0 %v212
        %779 = vmatprep.subr.mxu0 0.0
        %780 = vmatpush2.msra.mxu0 %v211
        %781 = vmatprep.subr.mxu0 0.0
        %782 = vmatpush2.msra.mxu0 %v210
        %783 = vmatprep.mubr.f32.mxu0 %v688
        %784 = vmatmul.mubr.f32.gmra.mxu0 %v687
        %v785 = vpop.f32.mrf.mxu0
        %v786 = vadd.f32 0.0, %v785
        %v787 = vpop.f32.mrf.mxu0
        %788 = vmatprep.mubr.f32.mxu0 %v690
        %789 = vmatmul.mubr.f32.gmra.mxu0 %v689
        %v790 = vpop.f32.mrf.mxu0
        %v791 = vadd.f32 0.0, %v790
        %v792 = vpop.f32.mrf.mxu0
        %793 = vmatprep.mubr.f32.mxu0 %v692
        %794 = vmatmul.mubr.f32.gmra.mxu0 %v691
        %v795 = vpop.f32.mrf.mxu0
        %v796 = vadd.f32 0.0, %v795
        %v797 = vpop.f32.mrf.mxu0
        %798 = vmatprep.mubr.f32.mxu0 %v694
        %799 = vmatmul.mubr.f32.gmra.mxu0 %v693
        %v800 = vpop.f32.mrf.mxu0
        %v801 = vadd.f32 0.0, %v800
        %v802 = vpop.f32.mrf.mxu0
        %803 = vmatprep.mubr.f32.mxu0 %v696
        %804 = vmatmul.mubr.f32.gmra.mxu0 %v695
        %v805 = vpop.f32.mrf.mxu0
        %v806 = vadd.f32 0.0, %v805
        %v807 = vpop.f32.mrf.mxu0
        %808 = vmatprep.mubr.f32.mxu0 %v698
        %809 = vmatmul.mubr.f32.gmra.mxu0 %v697
        %v810 = vpop.f32.mrf.mxu0
        %v811 = vadd.f32 0.0, %v810
        %v812 = vpop.f32.mrf.mxu0
        %813 = vmatprep.mubr.f32.mxu0 %v700
        %814 = vmatmul.mubr.f32.gmra.mxu0 %v699
        %v815 = vpop.f32.mrf.mxu0
        %v816 = vadd.f32 0.0, %v815
        %v817 = vpop.f32.mrf.mxu0
        %818 = vmatprep.mubr.f32.mxu0 %v702
        %819 = vmatmul.mubr.f32.gmra.mxu0 %v701
        %v820 = vpop.f32.mrf.mxu0
        %v821 = vadd.f32 0.0, %v820
        %v822 = vpop.f32.mrf.mxu0
        %823 = vmatprep.mubr.f32.mxu0 %v704
        %824 = vmatmul.mubr.f32.gmra.mxu0 %v703
        %v825 = vpop.f32.mrf.mxu0
        %v826 = vadd.f32 0.0, %v825
        %v827 = vpop.f32.mrf.mxu0
        %828 = vmatprep.mubr.f32.mxu0 %v706
        %829 = vmatmul.mubr.f32.gmra.mxu0 %v705
        %v830 = vpop.f32.mrf.mxu0
        %v831 = vadd.f32 0.0, %v830
        %v832 = vpop.f32.mrf.mxu0
        %833 = vmatprep.mubr.f32.mxu0 %v708
        %834 = vmatmul.mubr.f32.gmra.mxu0 %v707
        %v835 = vpop.f32.mrf.mxu0
        %v836 = vadd.f32 0.0, %v835
        %v837 = vpop.f32.mrf.mxu0
        %838 = vmatprep.mubr.f32.mxu0 %v710
        %839 = vmatmul.mubr.f32.gmra.mxu0 %v709
        %v840 = vpop.f32.mrf.mxu0
        %v841 = vadd.f32 0.0, %v840
        %v842 = vpop.f32.mrf.mxu0
        %843 = vmatprep.mubr.f32.mxu0 %v712
        %844 = vmatmul.mubr.f32.gmra.mxu0 %v711
        %v845 = vpop.f32.mrf.mxu0
        %v846 = vadd.f32 0.0, %v845
        %v847 = vpop.f32.mrf.mxu0
        %848 = vmatprep.mubr.f32.mxu0 %v714
        %849 = vmatmul.mubr.f32.gmra.mxu0 %v713
        %v850 = vpop.f32.mrf.mxu0
        %v851 = vadd.f32 0.0, %v850
        %v852 = vpop.f32.mrf.mxu0
        %853 = vmatprep.mubr.f32.mxu0 %v716
        %854 = vmatmul.mubr.f32.gmra.mxu0 %v715
        %v855 = vpop.f32.mrf.mxu0
        %v856 = vadd.f32 0.0, %v855
        %v857 = vpop.f32.mrf.mxu0
        %858 = vmatprep.mubr.f32.mxu0 %v718
        %859 = vmatmul.mubr.f32.gmra.mxu0 %v717
        %v860 = vpop.f32.mrf.mxu0
        %v861 = vadd.f32 0.0, %v860
        %v862 = vpop.f32.mrf.mxu0
        %863 = vdwg.mxu0
        %880 = vrot.lane.b32.xlu0 %v786, 32
        %v881 = vpop.permute.xlu0 %880
        %882 = vrot.lane.b32.xlu0 %v791, 32
        %v883 = vpop.permute.xlu0 %882
        %884 = vrot.lane.b32.xlu0 %v796, 32
        %v885 = vpop.permute.xlu0 %884
        %886 = vrot.lane.b32.xlu0 %v801, 32
        %v887 = vpop.permute.xlu0 %886
        %888 = vrot.lane.b32.xlu0 %v806, 32
        %v889 = vpop.permute.xlu0 %888
        %890 = vrot.lane.b32.xlu0 %v811, 32
        %v891 = vpop.permute.xlu0 %890
        %892 = vrot.lane.b32.xlu0 %v816, 32
        %v893 = vpop.permute.xlu0 %892
        %894 = vrot.lane.b32.xlu0 %v821, 32
        %v895 = vpop.permute.xlu0 %894
        %896 = vrot.lane.b32.xlu0 %v826, 32
        %v897 = vpop.permute.xlu0 %896
        %898 = vrot.lane.b32.xlu0 %v831, 32
        %v899 = vpop.permute.xlu0 %898
        %900 = vrot.lane.b32.xlu0 %v836, 32
        %v901 = vpop.permute.xlu0 %900
        %902 = vrot.lane.b32.xlu0 %v841, 32
        %v903 = vpop.permute.xlu0 %902
        %904 = vrot.lane.b32.xlu0 %v846, 32
        %v905 = vpop.permute.xlu0 %904
        %906 = vrot.lane.b32.xlu0 %v851, 32
        %v907 = vpop.permute.xlu0 %906
        %908 = vrot.lane.b32.xlu0 %v856, 32
        %v909 = vpop.permute.xlu0 %908
        %910 = vrot.lane.b32.xlu0 %v861, 32
        %v911 = vpop.permute.xlu0 %910
        %vm928 = vcmask 523520
        %929 = vst.msk [vmem:[#allocation2] sm:$0xff] %vm928, %v881
        %930 = vst.msk [vmem:[#allocation2 + $0x10] sm:$0xff] %vm928, %v883
        %931 = vst.msk [vmem:[#allocation2 + $0x20] sm:$0xff] %vm928, %v885
        %932 = vst.msk [vmem:[#allocation2 + $0x30] sm:$0xff] %vm928, %v887
        %933 = vst.msk [vmem:[#allocation2 + $0x40] sm:$0xff] %vm928, %v889
        %934 = vst.msk [vmem:[#allocation2 + $0x50] sm:$0xff] %vm928, %v891
        %935 = vst.msk [vmem:[#allocation2 + $0x60] sm:$0xff] %vm928, %v893
        %936 = vst.msk [vmem:[#allocation2 + $0x70] sm:$0xff] %vm928, %v895
        %937 = vst.msk [vmem:[#allocation2 + $0x80] sm:$0xff] %vm928, %v897
        %938 = vst.msk [vmem:[#allocation2 + $0x90] sm:$0xff] %vm928, %v899
        %939 = vst.msk [vmem:[#allocation2 + $0xa0] sm:$0xff] %vm928, %v901
        %940 = vst.msk [vmem:[#allocation2 + $0xb0] sm:$0xff] %vm928, %v903
        %941 = vst.msk [vmem:[#allocation2 + $0xc0] sm:$0xff] %vm928, %v905
        %942 = vst.msk [vmem:[#allocation2 + $0xd0] sm:$0xff] %vm928, %v907
        %943 = vst.msk [vmem:[#allocation2 + $0xe0] sm:$0xff] %vm928, %v909
        %944 = vst.msk [vmem:[#allocation2 + $0xf0] sm:$0xff] %vm928, %v911
        %v945 = vld [vmem:[%s192 + $0x2] sm:$0x1]
        %v946 = vlaneseq
        %v947 = vshrl.u32 %v946, 7
        %v948 = vsub.s32 0, %v947
        %v949 = vrot.slane %v945, %v948
        %951 = vbcast.lane.b32.xlu0 %v949, 256
        %v952 = vpop.permute.xlu0 %951
        %s954 = sor.u32 256, 8
        %955 = vbcast.lane.b32.xlu0 %v949, %s954
        %v956 = vpop.permute.xlu0 %955
        %s958 = sor.u32 256, 16
        %959 = vbcast.lane.b32.xlu0 %v949, %s958
        %v960 = vpop.permute.xlu0 %959
        %s962 = sor.u32 256, 24
        %963 = vbcast.lane.b32.xlu0 %v949, %s962
        %v964 = vpop.permute.xlu0 %963
        %s966 = sor.u32 256, 32
        %967 = vbcast.lane.b32.xlu0 %v949, %s966
        %v968 = vpop.permute.xlu0 %967
        %s970 = sor.u32 256, 40
        %971 = vbcast.lane.b32.xlu0 %v949, %s970
        %v972 = vpop.permute.xlu0 %971
        %s974 = sor.u32 256, 48
        %975 = vbcast.lane.b32.xlu0 %v949, %s974
        %v976 = vpop.permute.xlu0 %975
        %s978 = sor.u32 256, 56
        %979 = vbcast.lane.b32.xlu0 %v949, %s978
        %v980 = vpop.permute.xlu0 %979
        %s982 = sor.u32 256, 64
        %983 = vbcast.lane.b32.xlu0 %v949, %s982
        %v984 = vpop.permute.xlu0 %983
        %s986 = sor.u32 256, 72
        %987 = vbcast.lane.b32.xlu0 %v949, %s986
        %v988 = vpop.permute.xlu0 %987
        %s990 = sor.u32 256, 80
        %991 = vbcast.lane.b32.xlu0 %v949, %s990
        %v992 = vpop.permute.xlu0 %991
        %s994 = sor.u32 256, 88
        %995 = vbcast.lane.b32.xlu0 %v949, %s994
        %v996 = vpop.permute.xlu0 %995
        %s998 = sor.u32 256, 96
        %999 = vbcast.lane.b32.xlu0 %v949, %s998
        %v1000 = vpop.permute.xlu0 %999
        %s1002 = sor.u32 256, 104
        %1003 = vbcast.lane.b32.xlu0 %v949, %s1002
        %v1004 = vpop.permute.xlu0 %1003
        %s1006 = sor.u32 256, 112
        %1007 = vbcast.lane.b32.xlu0 %v949, %s1006
        %v1008 = vpop.permute.xlu0 %1007
        %s1010 = sor.u32 256, 120
        %1011 = vbcast.lane.b32.xlu0 %v949, %s1010
        %v1012 = vpop.permute.xlu0 %1011
        %vm1013 = vcmp.eq.s32.totalorder %v952, %v295
        %vm1014 = vcmp.eq.s32.totalorder %v952, %v296
        %vm1015 = vcmp.eq.s32.totalorder %v956, %v295
        %vm1016 = vcmp.eq.s32.totalorder %v956, %v296
        %vm1017 = vcmp.eq.s32.totalorder %v960, %v295
        %vm1018 = vcmp.eq.s32.totalorder %v960, %v296
        %vm1019 = vcmp.eq.s32.totalorder %v964, %v295
        %vm1020 = vcmp.eq.s32.totalorder %v964, %v296
        %vm1021 = vcmp.eq.s32.totalorder %v968, %v295
        %vm1022 = vcmp.eq.s32.totalorder %v968, %v296
        %vm1023 = vcmp.eq.s32.totalorder %v972, %v295
        %vm1024 = vcmp.eq.s32.totalorder %v972, %v296
        %vm1025 = vcmp.eq.s32.totalorder %v976, %v295
        %vm1026 = vcmp.eq.s32.totalorder %v976, %v296
        %vm1027 = vcmp.eq.s32.totalorder %v980, %v295
        %vm1028 = vcmp.eq.s32.totalorder %v980, %v296
        %vm1029 = vcmp.eq.s32.totalorder %v984, %v295
        %vm1030 = vcmp.eq.s32.totalorder %v984, %v296
        %vm1031 = vcmp.eq.s32.totalorder %v988, %v295
        %vm1032 = vcmp.eq.s32.totalorder %v988, %v296
        %vm1033 = vcmp.eq.s32.totalorder %v992, %v295
        %vm1034 = vcmp.eq.s32.totalorder %v992, %v296
        %vm1035 = vcmp.eq.s32.totalorder %v996, %v295
        %vm1036 = vcmp.eq.s32.totalorder %v996, %v296
        %vm1037 = vcmp.eq.s32.totalorder %v1000, %v295
        %vm1038 = vcmp.eq.s32.totalorder %v1000, %v296
        %vm1039 = vcmp.eq.s32.totalorder %v1004, %v295
        %vm1040 = vcmp.eq.s32.totalorder %v1004, %v296
        %vm1041 = vcmp.eq.s32.totalorder %v1008, %v295
        %vm1042 = vcmp.eq.s32.totalorder %v1008, %v296
        %vm1043 = vcmp.eq.s32.totalorder %v1012, %v295
        %vm1044 = vcmp.eq.s32.totalorder %v1012, %v296
        %v1045 = vsel %vm1013, 1, 0
        %v1046 = vsel %vm1014, 1, 0
        %v1047 = vsel %vm1015, 1, 0
        %v1048 = vsel %vm1016, 1, 0
        %v1049 = vsel %vm1017, 1, 0
        %v1050 = vsel %vm1018, 1, 0
        %v1051 = vsel %vm1019, 1, 0
        %v1052 = vsel %vm1020, 1, 0
        %v1053 = vsel %vm1021, 1, 0
        %v1054 = vsel %vm1022, 1, 0
        %v1055 = vsel %vm1023, 1, 0
        %v1056 = vsel %vm1024, 1, 0
        %v1057 = vsel %vm1025, 1, 0
        %v1058 = vsel %vm1026, 1, 0
        %v1059 = vsel %vm1027, 1, 0
        %v1060 = vsel %vm1028, 1, 0
        %v1061 = vsel %vm1029, 1, 0
        %v1062 = vsel %vm1030, 1, 0
        %v1063 = vsel %vm1031, 1, 0
        %v1064 = vsel %vm1032, 1, 0
        %v1065 = vsel %vm1033, 1, 0
        %v1066 = vsel %vm1034, 1, 0
        %v1067 = vsel %vm1035, 1, 0
        %v1068 = vsel %vm1036, 1, 0
        %v1069 = vsel %vm1037, 1, 0
        %v1070 = vsel %vm1038, 1, 0
        %v1071 = vsel %vm1039, 1, 0
        %v1072 = vsel %vm1040, 1, 0
        %v1073 = vsel %vm1041, 1, 0
        %v1074 = vsel %vm1042, 1, 0
        %v1075 = vsel %vm1043, 1, 0
        %v1076 = vsel %vm1044, 1, 0
        %v1077 = vcvt.s32.f32 %v1045
        %v1078 = vcvt.s32.f32 %v1046
        %v1079 = vcvt.s32.f32 %v1047
        %v1080 = vcvt.s32.f32 %v1048
        %v1081 = vcvt.s32.f32 %v1049
        %v1082 = vcvt.s32.f32 %v1050
        %v1083 = vcvt.s32.f32 %v1051
        %v1084 = vcvt.s32.f32 %v1052
        %v1085 = vcvt.s32.f32 %v1053
        %v1086 = vcvt.s32.f32 %v1054
        %v1087 = vcvt.s32.f32 %v1055
        %v1088 = vcvt.s32.f32 %v1056
        %v1089 = vcvt.s32.f32 %v1057
        %v1090 = vcvt.s32.f32 %v1058
        %v1091 = vcvt.s32.f32 %v1059
        %v1092 = vcvt.s32.f32 %v1060
        %v1093 = vcvt.s32.f32 %v1061
        %v1094 = vcvt.s32.f32 %v1062
        %v1095 = vcvt.s32.f32 %v1063
        %v1096 = vcvt.s32.f32 %v1064
        %v1097 = vcvt.s32.f32 %v1065
        %v1098 = vcvt.s32.f32 %v1066
        %v1099 = vcvt.s32.f32 %v1067
        %v1100 = vcvt.s32.f32 %v1068
        %v1101 = vcvt.s32.f32 %v1069
        %v1102 = vcvt.s32.f32 %v1070
        %v1103 = vcvt.s32.f32 %v1071
        %v1104 = vcvt.s32.f32 %v1072
        %v1105 = vcvt.s32.f32 %v1073
        %v1106 = vcvt.s32.f32 %v1074
        %v1107 = vcvt.s32.f32 %v1075
        %v1108 = vcvt.s32.f32 %v1076
        %1109 = vmatprep.subr.mxu0 0.0
        %1110 = vmatpush1.msra.mxu0 %v209
        %1111 = vmatprep.subr.mxu0 0.0
        %1112 = vmatpush1.msra.mxu0 %v208
        %1113 = vmatprep.subr.mxu0 0.0
        %1114 = vmatpush1.msra.mxu0 %v207
        %1115 = vmatprep.subr.mxu0 0.0
        %1116 = vmatpush1.msra.mxu0 %v206
        %1117 = vmatprep.subr.mxu0 0.0
        %1118 = vmatpush1.msra.mxu0 %v205
        %1119 = vmatprep.subr.mxu0 0.0
        %1120 = vmatpush1.msra.mxu0 %v204
        %1121 = vmatprep.subr.mxu0 0.0
        %1122 = vmatpush1.msra.mxu0 %v203
        %1123 = vmatprep.subr.mxu0 0.0
        %1124 = vmatpush1.msra.mxu0 %v202
        %1125 = vmatprep.subr.mxu0 0.0
        %1126 = vmatpush1.msra.mxu0 %v201
        %1127 = vmatprep.subr.mxu0 0.0
        %1128 = vmatpush1.msra.mxu0 %v200
        %1129 = vmatprep.subr.mxu0 0.0
        %1130 = vmatpush1.msra.mxu0 %v199
        %1131 = vmatprep.subr.mxu0 0.0
        %1132 = vmatpush1.msra.mxu0 %v198
        %1133 = vmatprep.subr.mxu0 0.0
        %1134 = vmatpush1.msra.mxu0 %v197
        %1135 = vmatprep.subr.mxu0 0.0
        %1136 = vmatpush1.msra.mxu0 %v196
        %1137 = vmatprep.subr.mxu0 0.0
        %1138 = vmatpush1.msra.mxu0 %v195
        %1139 = vmatprep.subr.mxu0 0.0
        %1140 = vmatpush1.msra.mxu0 %v194
        %1141 = vmatprep.subr.mxu0 0.0
        %1142 = vmatpush2.msra.mxu0 %v225
        %1143 = vmatprep.subr.mxu0 0.0
        %1144 = vmatpush2.msra.mxu0 %v224
        %1145 = vmatprep.subr.mxu0 0.0
        %1146 = vmatpush2.msra.mxu0 %v223
        %1147 = vmatprep.subr.mxu0 0.0
        %1148 = vmatpush2.msra.mxu0 %v222
        %1149 = vmatprep.subr.mxu0 0.0
        %1150 = vmatpush2.msra.mxu0 %v221
        %1151 = vmatprep.subr.mxu0 0.0
        %1152 = vmatpush2.msra.mxu0 %v220
        %1153 = vmatprep.subr.mxu0 0.0
        %1154 = vmatpush2.msra.mxu0 %v219
        %1155 = vmatprep.subr.mxu0 0.0
        %1156 = vmatpush2.msra.mxu0 %v218
        %1157 = vmatprep.subr.mxu0 0.0
        %1158 = vmatpush2.msra.mxu0 %v217
        %1159 = vmatprep.subr.mxu0 0.0
        %1160 = vmatpush2.msra.mxu0 %v216
        %1161 = vmatprep.subr.mxu0 0.0
        %1162 = vmatpush2.msra.mxu0 %v215
        %1163 = vmatprep.subr.mxu0 0.0
        %1164 = vmatpush2.msra.mxu0 %v214
        %1165 = vmatprep.subr.mxu0 0.0
        %1166 = vmatpush2.msra.mxu0 %v213
        %1167 = vmatprep.subr.mxu0 0.0
        %1168 = vmatpush2.msra.mxu0 %v212
        %1169 = vmatprep.subr.mxu0 0.0
        %1170 = vmatpush2.msra.mxu0 %v211
        %1171 = vmatprep.subr.mxu0 0.0
        %1172 = vmatpush2.msra.mxu0 %v210
        %1173 = vmatprep.mubr.f32.mxu0 %v1078
        %1174 = vmatmul.mubr.f32.gmra.mxu0 %v1077
        %v1175 = vpop.f32.mrf.mxu0
        %v1176 = vadd.f32 0.0, %v1175
        %v1177 = vpop.f32.mrf.mxu0
        %1178 = vmatprep.mubr.f32.mxu0 %v1080
        %1179 = vmatmul.mubr.f32.gmra.mxu0 %v1079
        %v1180 = vpop.f32.mrf.mxu0
        %v1181 = vadd.f32 0.0, %v1180
        %v1182 = vpop.f32.mrf.mxu0
        %1183 = vmatprep.mubr.f32.mxu0 %v1082
        %1184 = vmatmul.mubr.f32.gmra.mxu0 %v1081
        %v1185 = vpop.f32.mrf.mxu0
        %v1186 = vadd.f32 0.0, %v1185
        %v1187 = vpop.f32.mrf.mxu0
        %1188 = vmatprep.mubr.f32.mxu0 %v1084
        %1189 = vmatmul.mubr.f32.gmra.mxu0 %v1083
        %v1190 = vpop.f32.mrf.mxu0
        %v1191 = vadd.f32 0.0, %v1190
        %v1192 = vpop.f32.mrf.mxu0
        %1193 = vmatprep.mubr.f32.mxu0 %v1086
        %1194 = vmatmul.mubr.f32.gmra.mxu0 %v1085
        %v1195 = vpop.f32.mrf.mxu0
        %v1196 = vadd.f32 0.0, %v1195
        %v1197 = vpop.f32.mrf.mxu0
        %1198 = vmatprep.mubr.f32.mxu0 %v1088
        %1199 = vmatmul.mubr.f32.gmra.mxu0 %v1087
        %v1200 = vpop.f32.mrf.mxu0
        %v1201 = vadd.f32 0.0, %v1200
        %v1202 = vpop.f32.mrf.mxu0
        %1203 = vmatprep.mubr.f32.mxu0 %v1090
        %1204 = vmatmul.mubr.f32.gmra.mxu0 %v1089
        %v1205 = vpop.f32.mrf.mxu0
        %v1206 = vadd.f32 0.0, %v1205
        %v1207 = vpop.f32.mrf.mxu0
        %1208 = vmatprep.mubr.f32.mxu0 %v1092
        %1209 = vmatmul.mubr.f32.gmra.mxu0 %v1091
        %v1210 = vpop.f32.mrf.mxu0
        %v1211 = vadd.f32 0.0, %v1210
        %v1212 = vpop.f32.mrf.mxu0
        %1213 = vmatprep.mubr.f32.mxu0 %v1094
        %1214 = vmatmul.mubr.f32.gmra.mxu0 %v1093
        %v1215 = vpop.f32.mrf.mxu0
        %v1216 = vadd.f32 0.0, %v1215
        %v1217 = vpop.f32.mrf.mxu0
        %1218 = vmatprep.mubr.f32.mxu0 %v1096
        %1219 = vmatmul.mubr.f32.gmra.mxu0 %v1095
        %v1220 = vpop.f32.mrf.mxu0
        %v1221 = vadd.f32 0.0, %v1220
        %v1222 = vpop.f32.mrf.mxu0
        %1223 = vmatprep.mubr.f32.mxu0 %v1098
        %1224 = vmatmul.mubr.f32.gmra.mxu0 %v1097
        %v1225 = vpop.f32.mrf.mxu0
        %v1226 = vadd.f32 0.0, %v1225
        %v1227 = vpop.f32.mrf.mxu0
        %1228 = vmatprep.mubr.f32.mxu0 %v1100
        %1229 = vmatmul.mubr.f32.gmra.mxu0 %v1099
        %v1230 = vpop.f32.mrf.mxu0
        %v1231 = vadd.f32 0.0, %v1230
        %v1232 = vpop.f32.mrf.mxu0
        %1233 = vmatprep.mubr.f32.mxu0 %v1102
        %1234 = vmatmul.mubr.f32.gmra.mxu0 %v1101
        %v1235 = vpop.f32.mrf.mxu0
        %v1236 = vadd.f32 0.0, %v1235
        %v1237 = vpop.f32.mrf.mxu0
        %1238 = vmatprep.mubr.f32.mxu0 %v1104
        %1239 = vmatmul.mubr.f32.gmra.mxu0 %v1103
        %v1240 = vpop.f32.mrf.mxu0
        %v1241 = vadd.f32 0.0, %v1240
        %v1242 = vpop.f32.mrf.mxu0
        %1243 = vmatprep.mubr.f32.mxu0 %v1106
        %1244 = vmatmul.mubr.f32.gmra.mxu0 %v1105
        %v1245 = vpop.f32.mrf.mxu0
        %v1246 = vadd.f32 0.0, %v1245
        %v1247 = vpop.f32.mrf.mxu0
        %1248 = vmatprep.mubr.f32.mxu0 %v1108
        %1249 = vmatmul.mubr.f32.gmra.mxu0 %v1107
        %v1250 = vpop.f32.mrf.mxu0
        %v1251 = vadd.f32 0.0, %v1250
        %v1252 = vpop.f32.mrf.mxu0
        %1253 = vdwg.mxu0
        %1270 = vrot.lane.b32.xlu0 %v1176, 64
        %v1271 = vpop.permute.xlu0 %1270
        %1272 = vrot.lane.b32.xlu0 %v1181, 64
        %v1273 = vpop.permute.xlu0 %1272
        %1274 = vrot.lane.b32.xlu0 %v1186, 64
        %v1275 = vpop.permute.xlu0 %1274
        %1276 = vrot.lane.b32.xlu0 %v1191, 64
        %v1277 = vpop.permute.xlu0 %1276
        %1278 = vrot.lane.b32.xlu0 %v1196, 64
        %v1279 = vpop.permute.xlu0 %1278
        %1280 = vrot.lane.b32.xlu0 %v1201, 64
        %v1281 = vpop.permute.xlu0 %1280
        %1282 = vrot.lane.b32.xlu0 %v1206, 64
        %v1283 = vpop.permute.xlu0 %1282
        %1284 = vrot.lane.b32.xlu0 %v1211, 64
        %v1285 = vpop.permute.xlu0 %1284
        %1286 = vrot.lane.b32.xlu0 %v1216, 64
        %v1287 = vpop.permute.xlu0 %1286
        %1288 = vrot.lane.b32.xlu0 %v1221, 64
        %v1289 = vpop.permute.xlu0 %1288
        %1290 = vrot.lane.b32.xlu0 %v1226, 64
        %v1291 = vpop.permute.xlu0 %1290
        %1292 = vrot.lane.b32.xlu0 %v1231, 64
        %v1293 = vpop.permute.xlu0 %1292
        %1294 = vrot.lane.b32.xlu0 %v1236, 64
        %v1295 = vpop.permute.xlu0 %1294
        %1296 = vrot.lane.b32.xlu0 %v1241, 64
        %v1297 = vpop.permute.xlu0 %1296
        %1298 = vrot.lane.b32.xlu0 %v1246, 64
        %v1299 = vpop.permute.xlu0 %1298
        %1300 = vrot.lane.b32.xlu0 %v1251, 64
        %v1301 = vpop.permute.xlu0 %1300
        %vm1318 = vcmask 785920
        %1319 = vst.msk [vmem:[#allocation2] sm:$0xff] %vm1318, %v1271
        %1320 = vst.msk [vmem:[#allocation2 + $0x10] sm:$0xff] %vm1318, %v1273
        %1321 = vst.msk [vmem:[#allocation2 + $0x20] sm:$0xff] %vm1318, %v1275
        %1322 = vst.msk [vmem:[#allocation2 + $0x30] sm:$0xff] %vm1318, %v1277
        %1323 = vst.msk [vmem:[#allocation2 + $0x40] sm:$0xff] %vm1318, %v1279
        %1324 = vst.msk [vmem:[#allocation2 + $0x50] sm:$0xff] %vm1318, %v1281
        %1325 = vst.msk [vmem:[#allocation2 + $0x60] sm:$0xff] %vm1318, %v1283
        %1326 = vst.msk [vmem:[#allocation2 + $0x70] sm:$0xff] %vm1318, %v1285
        %1327 = vst.msk [vmem:[#allocation2 + $0x80] sm:$0xff] %vm1318, %v1287
        %1328 = vst.msk [vmem:[#allocation2 + $0x90] sm:$0xff] %vm1318, %v1289
        %1329 = vst.msk [vmem:[#allocation2 + $0xa0] sm:$0xff] %vm1318, %v1291
        %1330 = vst.msk [vmem:[#allocation2 + $0xb0] sm:$0xff] %vm1318, %v1293
        %1331 = vst.msk [vmem:[#allocation2 + $0xc0] sm:$0xff] %vm1318, %v1295
        %1332 = vst.msk [vmem:[#allocation2 + $0xd0] sm:$0xff] %vm1318, %v1297
        %1333 = vst.msk [vmem:[#allocation2 + $0xe0] sm:$0xff] %vm1318, %v1299
        %1334 = vst.msk [vmem:[#allocation2 + $0xf0] sm:$0xff] %vm1318, %v1301
        %v1335 = vld [vmem:[%s192 + $0x3] sm:$0x1]
        %v1336 = vlaneseq
        %v1337 = vshrl.u32 %v1336, 7
        %v1338 = vsub.s32 0, %v1337
        %v1339 = vrot.slane %v1335, %v1338
        %1341 = vbcast.lane.b32.xlu0 %v1339, 256
        %v1342 = vpop.permute.xlu0 %1341
        %s1344 = sor.u32 256, 8
        %1345 = vbcast.lane.b32.xlu0 %v1339, %s1344
        %v1346 = vpop.permute.xlu0 %1345
        %s1348 = sor.u32 256, 16
        %1349 = vbcast.lane.b32.xlu0 %v1339, %s1348
        %v1350 = vpop.permute.xlu0 %1349
        %s1352 = sor.u32 256, 24
        %1353 = vbcast.lane.b32.xlu0 %v1339, %s1352
        %v1354 = vpop.permute.xlu0 %1353
        %s1356 = sor.u32 256, 32
        %1357 = vbcast.lane.b32.xlu0 %v1339, %s1356
        %v1358 = vpop.permute.xlu0 %1357
        %s1360 = sor.u32 256, 40
        %1361 = vbcast.lane.b32.xlu0 %v1339, %s1360
        %v1362 = vpop.permute.xlu0 %1361
        %s1364 = sor.u32 256, 48
        %1365 = vbcast.lane.b32.xlu0 %v1339, %s1364
        %v1366 = vpop.permute.xlu0 %1365
        %s1368 = sor.u32 256, 56
        %1369 = vbcast.lane.b32.xlu0 %v1339, %s1368
        %v1370 = vpop.permute.xlu0 %1369
        %s1372 = sor.u32 256, 64
        %1373 = vbcast.lane.b32.xlu0 %v1339, %s1372
        %v1374 = vpop.permute.xlu0 %1373
        %s1376 = sor.u32 256, 72
        %1377 = vbcast.lane.b32.xlu0 %v1339, %s1376
        %v1378 = vpop.permute.xlu0 %1377
        %s1380 = sor.u32 256, 80
        %1381 = vbcast.lane.b32.xlu0 %v1339, %s1380
        %v1382 = vpop.permute.xlu0 %1381
        %s1384 = sor.u32 256, 88
        %1385 = vbcast.lane.b32.xlu0 %v1339, %s1384
        %v1386 = vpop.permute.xlu0 %1385
        %s1388 = sor.u32 256, 96
        %1389 = vbcast.lane.b32.xlu0 %v1339, %s1388
        %v1390 = vpop.permute.xlu0 %1389
        %s1392 = sor.u32 256, 104
        %1393 = vbcast.lane.b32.xlu0 %v1339, %s1392
        %v1394 = vpop.permute.xlu0 %1393
        %s1396 = sor.u32 256, 112
        %1397 = vbcast.lane.b32.xlu0 %v1339, %s1396
        %v1398 = vpop.permute.xlu0 %1397
        %s1400 = sor.u32 256, 120
        %1401 = vbcast.lane.b32.xlu0 %v1339, %s1400
        %v1402 = vpop.permute.xlu0 %1401
        %vm1403 = vcmp.eq.s32.totalorder %v1342, %v295
        %vm1404 = vcmp.eq.s32.totalorder %v1342, %v296
        %vm1405 = vcmp.eq.s32.totalorder %v1346, %v295
        %vm1406 = vcmp.eq.s32.totalorder %v1346, %v296
        %vm1407 = vcmp.eq.s32.totalorder %v1350, %v295
        %vm1408 = vcmp.eq.s32.totalorder %v1350, %v296
        %vm1409 = vcmp.eq.s32.totalorder %v1354, %v295
        %vm1410 = vcmp.eq.s32.totalorder %v1354, %v296
        %vm1411 = vcmp.eq.s32.totalorder %v1358, %v295
        %vm1412 = vcmp.eq.s32.totalorder %v1358, %v296
        %vm1413 = vcmp.eq.s32.totalorder %v1362, %v295
        %vm1414 = vcmp.eq.s32.totalorder %v1362, %v296
        %vm1415 = vcmp.eq.s32.totalorder %v1366, %v295
        %vm1416 = vcmp.eq.s32.totalorder %v1366, %v296
        %vm1417 = vcmp.eq.s32.totalorder %v1370, %v295
        %vm1418 = vcmp.eq.s32.totalorder %v1370, %v296
        %vm1419 = vcmp.eq.s32.totalorder %v1374, %v295
        %vm1420 = vcmp.eq.s32.totalorder %v1374, %v296
        %vm1421 = vcmp.eq.s32.totalorder %v1378, %v295
        %vm1422 = vcmp.eq.s32.totalorder %v1378, %v296
        %vm1423 = vcmp.eq.s32.totalorder %v1382, %v295
        %vm1424 = vcmp.eq.s32.totalorder %v1382, %v296
        %vm1425 = vcmp.eq.s32.totalorder %v1386, %v295
        %vm1426 = vcmp.eq.s32.totalorder %v1386, %v296
        %vm1427 = vcmp.eq.s32.totalorder %v1390, %v295
        %vm1428 = vcmp.eq.s32.totalorder %v1390, %v296
        %vm1429 = vcmp.eq.s32.totalorder %v1394, %v295
        %vm1430 = vcmp.eq.s32.totalorder %v1394, %v296
        %vm1431 = vcmp.eq.s32.totalorder %v1398, %v295
        %vm1432 = vcmp.eq.s32.totalorder %v1398, %v296
        %vm1433 = vcmp.eq.s32.totalorder %v1402, %v295
        %vm1434 = vcmp.eq.s32.totalorder %v1402, %v296
        %v1435 = vsel %vm1403, 1, 0
        %v1436 = vsel %vm1404, 1, 0
        %v1437 = vsel %vm1405, 1, 0
        %v1438 = vsel %vm1406, 1, 0
        %v1439 = vsel %vm1407, 1, 0
        %v1440 = vsel %vm1408, 1, 0
        %v1441 = vsel %vm1409, 1, 0
        %v1442 = vsel %vm1410, 1, 0
        %v1443 = vsel %vm1411, 1, 0
        %v1444 = vsel %vm1412, 1, 0
        %v1445 = vsel %vm1413, 1, 0
        %v1446 = vsel %vm1414, 1, 0
        %v1447 = vsel %vm1415, 1, 0
        %v1448 = vsel %vm1416, 1, 0
        %v1449 = vsel %vm1417, 1, 0
        %v1450 = vsel %vm1418, 1, 0
        %v1451 = vsel %vm1419, 1, 0
        %v1452 = vsel %vm1420, 1, 0
        %v1453 = vsel %vm1421, 1, 0
        %v1454 = vsel %vm1422, 1, 0
        %v1455 = vsel %vm1423, 1, 0
        %v1456 = vsel %vm1424, 1, 0
        %v1457 = vsel %vm1425, 1, 0
        %v1458 = vsel %vm1426, 1, 0
        %v1459 = vsel %vm1427, 1, 0
        %v1460 = vsel %vm1428, 1, 0
        %v1461 = vsel %vm1429, 1, 0
        %v1462 = vsel %vm1430, 1, 0
        %v1463 = vsel %vm1431, 1, 0
        %v1464 = vsel %vm1432, 1, 0
        %v1465 = vsel %vm1433, 1, 0
        %v1466 = vsel %vm1434, 1, 0
        %v1467 = vcvt.s32.f32 %v1435
        %v1468 = vcvt.s32.f32 %v1436
        %v1469 = vcvt.s32.f32 %v1437
        %v1470 = vcvt.s32.f32 %v1438
        %v1471 = vcvt.s32.f32 %v1439
        %v1472 = vcvt.s32.f32 %v1440
        %v1473 = vcvt.s32.f32 %v1441
        %v1474 = vcvt.s32.f32 %v1442
        %v1475 = vcvt.s32.f32 %v1443
        %v1476 = vcvt.s32.f32 %v1444
        %v1477 = vcvt.s32.f32 %v1445
        %v1478 = vcvt.s32.f32 %v1446
        %v1479 = vcvt.s32.f32 %v1447
        %v1480 = vcvt.s32.f32 %v1448
        %v1481 = vcvt.s32.f32 %v1449
        %v1482 = vcvt.s32.f32 %v1450
        %v1483 = vcvt.s32.f32 %v1451
        %v1484 = vcvt.s32.f32 %v1452
        %v1485 = vcvt.s32.f32 %v1453
        %v1486 = vcvt.s32.f32 %v1454
        %v1487 = vcvt.s32.f32 %v1455
        %v1488 = vcvt.s32.f32 %v1456
        %v1489 = vcvt.s32.f32 %v1457
        %v1490 = vcvt.s32.f32 %v1458
        %v1491 = vcvt.s32.f32 %v1459
        %v1492 = vcvt.s32.f32 %v1460
        %v1493 = vcvt.s32.f32 %v1461
        %v1494 = vcvt.s32.f32 %v1462
        %v1495 = vcvt.s32.f32 %v1463
        %v1496 = vcvt.s32.f32 %v1464
        %v1497 = vcvt.s32.f32 %v1465
        %v1498 = vcvt.s32.f32 %v1466
        %1499 = vmatprep.subr.mxu0 0.0
        %1500 = vmatpush1.msra.mxu0 %v209
        %1501 = vmatprep.subr.mxu0 0.0
        %1502 = vmatpush1.msra.mxu0 %v208
        %1503 = vmatprep.subr.mxu0 0.0
        %1504 = vmatpush1.msra.mxu0 %v207
        %1505 = vmatprep.subr.mxu0 0.0
        %1506 = vmatpush1.msra.mxu0 %v206
        %1507 = vmatprep.subr.mxu0 0.0
        %1508 = vmatpush1.msra.mxu0 %v205
        %1509 = vmatprep.subr.mxu0 0.0
        %1510 = vmatpush1.msra.mxu0 %v204
        %1511 = vmatprep.subr.mxu0 0.0
        %1512 = vmatpush1.msra.mxu0 %v203
        %1513 = vmatprep.subr.mxu0 0.0
        %1514 = vmatpush1.msra.mxu0 %v202
        %1515 = vmatprep.subr.mxu0 0.0
        %1516 = vmatpush1.msra.mxu0 %v201
        %1517 = vmatprep.subr.mxu0 0.0
        %1518 = vmatpush1.msra.mxu0 %v200
        %1519 = vmatprep.subr.mxu0 0.0
        %1520 = vmatpush1.msra.mxu0 %v199
        %1521 = vmatprep.subr.mxu0 0.0
        %1522 = vmatpush1.msra.mxu0 %v198
        %1523 = vmatprep.subr.mxu0 0.0
        %1524 = vmatpush1.msra.mxu0 %v197
        %1525 = vmatprep.subr.mxu0 0.0
        %1526 = vmatpush1.msra.mxu0 %v196
        %1527 = vmatprep.subr.mxu0 0.0
        %1528 = vmatpush1.msra.mxu0 %v195
        %1529 = vmatprep.subr.mxu0 0.0
        %1530 = vmatpush1.msra.mxu0 %v194
        %1531 = vmatprep.subr.mxu0 0.0
        %1532 = vmatpush2.msra.mxu0 %v225
        %1533 = vmatprep.subr.mxu0 0.0
        %1534 = vmatpush2.msra.mxu0 %v224
        %1535 = vmatprep.subr.mxu0 0.0
        %1536 = vmatpush2.msra.mxu0 %v223
        %1537 = vmatprep.subr.mxu0 0.0
        %1538 = vmatpush2.msra.mxu0 %v222
        %1539 = vmatprep.subr.mxu0 0.0
        %1540 = vmatpush2.msra.mxu0 %v221
        %1541 = vmatprep.subr.mxu0 0.0
        %1542 = vmatpush2.msra.mxu0 %v220
        %1543 = vmatprep.subr.mxu0 0.0
        %1544 = vmatpush2.msra.mxu0 %v219
        %1545 = vmatprep.subr.mxu0 0.0
        %1546 = vmatpush2.msra.mxu0 %v218
        %1547 = vmatprep.subr.mxu0 0.0
        %1548 = vmatpush2.msra.mxu0 %v217
        %1549 = vmatprep.subr.mxu0 0.0
        %1550 = vmatpush2.msra.mxu0 %v216
        %1551 = vmatprep.subr.mxu0 0.0
        %1552 = vmatpush2.msra.mxu0 %v215
        %1553 = vmatprep.subr.mxu0 0.0
        %1554 = vmatpush2.msra.mxu0 %v214
        %1555 = vmatprep.subr.mxu0 0.0
        %1556 = vmatpush2.msra.mxu0 %v213
        %1557 = vmatprep.subr.mxu0 0.0
        %1558 = vmatpush2.msra.mxu0 %v212
        %1559 = vmatprep.subr.mxu0 0.0
        %1560 = vmatpush2.msra.mxu0 %v211
        %1561 = vmatprep.subr.mxu0 0.0
        %1562 = vmatpush2.msra.mxu0 %v210
        %1563 = vmatprep.mubr.f32.mxu0 %v1468
        %1564 = vmatmul.mubr.f32.gmra.mxu0 %v1467
        %v1565 = vpop.f32.mrf.mxu0
        %v1566 = vadd.f32 0.0, %v1565
        %v1567 = vpop.f32.mrf.mxu0
        %1568 = vmatprep.mubr.f32.mxu0 %v1470
        %1569 = vmatmul.mubr.f32.gmra.mxu0 %v1469
        %v1570 = vpop.f32.mrf.mxu0
        %v1571 = vadd.f32 0.0, %v1570
        %v1572 = vpop.f32.mrf.mxu0
        %1573 = vmatprep.mubr.f32.mxu0 %v1472
        %1574 = vmatmul.mubr.f32.gmra.mxu0 %v1471
        %v1575 = vpop.f32.mrf.mxu0
        %v1576 = vadd.f32 0.0, %v1575
        %v1577 = vpop.f32.mrf.mxu0
        %1578 = vmatprep.mubr.f32.mxu0 %v1474
        %1579 = vmatmul.mubr.f32.gmra.mxu0 %v1473
        %v1580 = vpop.f32.mrf.mxu0
        %v1581 = vadd.f32 0.0, %v1580
        %v1582 = vpop.f32.mrf.mxu0
        %1583 = vmatprep.mubr.f32.mxu0 %v1476
        %1584 = vmatmul.mubr.f32.gmra.mxu0 %v1475
        %v1585 = vpop.f32.mrf.mxu0
        %v1586 = vadd.f32 0.0, %v1585
        %v1587 = vpop.f32.mrf.mxu0
        %1588 = vmatprep.mubr.f32.mxu0 %v1478
        %1589 = vmatmul.mubr.f32.gmra.mxu0 %v1477
        %v1590 = vpop.f32.mrf.mxu0
        %v1591 = vadd.f32 0.0, %v1590
        %v1592 = vpop.f32.mrf.mxu0
        %1593 = vmatprep.mubr.f32.mxu0 %v1480
        %1594 = vmatmul.mubr.f32.gmra.mxu0 %v1479
        %v1595 = vpop.f32.mrf.mxu0
        %v1596 = vadd.f32 0.0, %v1595
        %v1597 = vpop.f32.mrf.mxu0
        %1598 = vmatprep.mubr.f32.mxu0 %v1482
        %1599 = vmatmul.mubr.f32.gmra.mxu0 %v1481
        %v1600 = vpop.f32.mrf.mxu0
        %v1601 = vadd.f32 0.0, %v1600
        %v1602 = vpop.f32.mrf.mxu0
        %1603 = vmatprep.mubr.f32.mxu0 %v1484
        %1604 = vmatmul.mubr.f32.gmra.mxu0 %v1483
        %v1605 = vpop.f32.mrf.mxu0
        %v1606 = vadd.f32 0.0, %v1605
        %v1607 = vpop.f32.mrf.mxu0
        %1608 = vmatprep.mubr.f32.mxu0 %v1486
        %1609 = vmatmul.mubr.f32.gmra.mxu0 %v1485
        %v1610 = vpop.f32.mrf.mxu0
        %v1611 = vadd.f32 0.0, %v1610
        %v1612 = vpop.f32.mrf.mxu0
        %1613 = vmatprep.mubr.f32.mxu0 %v1488
        %1614 = vmatmul.mubr.f32.gmra.mxu0 %v1487
        %v1615 = vpop.f32.mrf.mxu0
        %v1616 = vadd.f32 0.0, %v1615
        %v1617 = vpop.f32.mrf.mxu0
        %1618 = vmatprep.mubr.f32.mxu0 %v1490
        %1619 = vmatmul.mubr.f32.gmra.mxu0 %v1489
        %v1620 = vpop.f32.mrf.mxu0
        %v1621 = vadd.f32 0.0, %v1620
        %v1622 = vpop.f32.mrf.mxu0
        %1623 = vmatprep.mubr.f32.mxu0 %v1492
        %1624 = vmatmul.mubr.f32.gmra.mxu0 %v1491
        %v1625 = vpop.f32.mrf.mxu0
        %v1626 = vadd.f32 0.0, %v1625
        %v1627 = vpop.f32.mrf.mxu0
        %1628 = vmatprep.mubr.f32.mxu0 %v1494
        %1629 = vmatmul.mubr.f32.gmra.mxu0 %v1493
        %v1630 = vpop.f32.mrf.mxu0
        %v1631 = vadd.f32 0.0, %v1630
        %v1632 = vpop.f32.mrf.mxu0
        %1633 = vmatprep.mubr.f32.mxu0 %v1496
        %1634 = vmatmul.mubr.f32.gmra.mxu0 %v1495
        %v1635 = vpop.f32.mrf.mxu0
        %v1636 = vadd.f32 0.0, %v1635
        %v1637 = vpop.f32.mrf.mxu0
        %1638 = vmatprep.mubr.f32.mxu0 %v1498
        %1639 = vmatmul.mubr.f32.gmra.mxu0 %v1497
        %v1640 = vpop.f32.mrf.mxu0
        %v1641 = vadd.f32 0.0, %v1640
        %v1642 = vpop.f32.mrf.mxu0
        %1643 = vdwg.mxu0
        %1660 = vrot.lane.b32.xlu0 %v1566, 96
        %v1661 = vpop.permute.xlu0 %1660
        %1662 = vrot.lane.b32.xlu0 %v1571, 96
        %v1663 = vpop.permute.xlu0 %1662
        %1664 = vrot.lane.b32.xlu0 %v1576, 96
        %v1665 = vpop.permute.xlu0 %1664
        %1666 = vrot.lane.b32.xlu0 %v1581, 96
        %v1667 = vpop.permute.xlu0 %1666
        %1668 = vrot.lane.b32.xlu0 %v1586, 96
        %v1669 = vpop.permute.xlu0 %1668
        %1670 = vrot.lane.b32.xlu0 %v1591, 96
        %v1671 = vpop.permute.xlu0 %1670
        %1672 = vrot.lane.b32.xlu0 %v1596, 96
        %v1673 = vpop.permute.xlu0 %1672
        %1674 = vrot.lane.b32.xlu0 %v1601, 96
        %v1675 = vpop.permute.xlu0 %1674
        %1676 = vrot.lane.b32.xlu0 %v1606, 96
        %v1677 = vpop.permute.xlu0 %1676
        %1678 = vrot.lane.b32.xlu0 %v1611, 96
        %v1679 = vpop.permute.xlu0 %1678
        %1680 = vrot.lane.b32.xlu0 %v1616, 96
        %v1681 = vpop.permute.xlu0 %1680
        %1682 = vrot.lane.b32.xlu0 %v1621, 96
        %v1683 = vpop.permute.xlu0 %1682
        %1684 = vrot.lane.b32.xlu0 %v1626, 96
        %v1685 = vpop.permute.xlu0 %1684
        %1686 = vrot.lane.b32.xlu0 %v1631, 96
        %v1687 = vpop.permute.xlu0 %1686
        %1688 = vrot.lane.b32.xlu0 %v1636, 96
        %v1689 = vpop.permute.xlu0 %1688
        %1690 = vrot.lane.b32.xlu0 %v1641, 96
        %v1691 = vpop.permute.xlu0 %1690
        %vm1708 = vcmask 1048320
        %1709 = vst.msk [vmem:[#allocation2] sm:$0xff] %vm1708, %v1661
        %1710 = vst.msk [vmem:[#allocation2 + $0x10] sm:$0xff] %vm1708, %v1663
        %1711 = vst.msk [vmem:[#allocation2 + $0x20] sm:$0xff] %vm1708, %v1665
        %1712 = vst.msk [vmem:[#allocation2 + $0x30] sm:$0xff] %vm1708, %v1667
        %1713 = vst.msk [vmem:[#allocation2 + $0x40] sm:$0xff] %vm1708, %v1669
        %1714 = vst.msk [vmem:[#allocation2 + $0x50] sm:$0xff] %vm1708, %v1671
        %1715 = vst.msk [vmem:[#allocation2 + $0x60] sm:$0xff] %vm1708, %v1673
        %1716 = vst.msk [vmem:[#allocation2 + $0x70] sm:$0xff] %vm1708, %v1675
        %1717 = vst.msk [vmem:[#allocation2 + $0x80] sm:$0xff] %vm1708, %v1677
        %1718 = vst.msk [vmem:[#allocation2 + $0x90] sm:$0xff] %vm1708, %v1679
        %1719 = vst.msk [vmem:[#allocation2 + $0xa0] sm:$0xff] %vm1708, %v1681
        %1720 = vst.msk [vmem:[#allocation2 + $0xb0] sm:$0xff] %vm1708, %v1683
        %1721 = vst.msk [vmem:[#allocation2 + $0xc0] sm:$0xff] %vm1708, %v1685
        %1722 = vst.msk [vmem:[#allocation2 + $0xd0] sm:$0xff] %vm1708, %v1687
        %1723 = vst.msk [vmem:[#allocation2 + $0xe0] sm:$0xff] %vm1708, %v1689
        %1724 = vst.msk [vmem:[#allocation2 + $0xf0] sm:$0xff] %vm1708, %v1691
        %v1725 = vld [vmem:[%s192 + $0x4] sm:$0x1]
        %v1726 = vlaneseq
        %v1727 = vshrl.u32 %v1726, 7
        %v1728 = vsub.s32 0, %v1727
        %v1729 = vrot.slane %v1725, %v1728
        %1731 = vbcast.lane.b32.xlu0 %v1729, 256
        %v1732 = vpop.permute.xlu0 %1731
        %s1734 = sor.u32 256, 8
        %1735 = vbcast.lane.b32.xlu0 %v1729, %s1734
        %v1736 = vpop.permute.xlu0 %1735
        %s1738 = sor.u32 256, 16
        %1739 = vbcast.lane.b32.xlu0 %v1729, %s1738
        %v1740 = vpop.permute.xlu0 %1739
        %s1742 = sor.u32 256, 24
        %1743 = vbcast.lane.b32.xlu0 %v1729, %s1742
        %v1744 = vpop.permute.xlu0 %1743
        %s1746 = sor.u32 256, 32
        %1747 = vbcast.lane.b32.xlu0 %v1729, %s1746
        %v1748 = vpop.permute.xlu0 %1747
        %s1750 = sor.u32 256, 40
        %1751 = vbcast.lane.b32.xlu0 %v1729, %s1750
        %v1752 = vpop.permute.xlu0 %1751
        %s1754 = sor.u32 256, 48
        %1755 = vbcast.lane.b32.xlu0 %v1729, %s1754
        %v1756 = vpop.permute.xlu0 %1755
        %s1758 = sor.u32 256, 56
        %1759 = vbcast.lane.b32.xlu0 %v1729, %s1758
        %v1760 = vpop.permute.xlu0 %1759
        %s1762 = sor.u32 256, 64
        %1763 = vbcast.lane.b32.xlu0 %v1729, %s1762
        %v1764 = vpop.permute.xlu0 %1763
        %s1766 = sor.u32 256, 72
        %1767 = vbcast.lane.b32.xlu0 %v1729, %s1766
        %v1768 = vpop.permute.xlu0 %1767
        %s1770 = sor.u32 256, 80
        %1771 = vbcast.lane.b32.xlu0 %v1729, %s1770
        %v1772 = vpop.permute.xlu0 %1771
        %s1774 = sor.u32 256, 88
        %1775 = vbcast.lane.b32.xlu0 %v1729, %s1774
        %v1776 = vpop.permute.xlu0 %1775
        %s1778 = sor.u32 256, 96
        %1779 = vbcast.lane.b32.xlu0 %v1729, %s1778
        %v1780 = vpop.permute.xlu0 %1779
        %s1782 = sor.u32 256, 104
        %1783 = vbcast.lane.b32.xlu0 %v1729, %s1782
        %v1784 = vpop.permute.xlu0 %1783
        %s1786 = sor.u32 256, 112
        %1787 = vbcast.lane.b32.xlu0 %v1729, %s1786
        %v1788 = vpop.permute.xlu0 %1787
        %s1790 = sor.u32 256, 120
        %1791 = vbcast.lane.b32.xlu0 %v1729, %s1790
        %v1792 = vpop.permute.xlu0 %1791
        %vm1793 = vcmp.eq.s32.totalorder %v1732, %v295
        %vm1794 = vcmp.eq.s32.totalorder %v1732, %v296
        %vm1795 = vcmp.eq.s32.totalorder %v1736, %v295
        %vm1796 = vcmp.eq.s32.totalorder %v1736, %v296
        %vm1797 = vcmp.eq.s32.totalorder %v1740, %v295
        %vm1798 = vcmp.eq.s32.totalorder %v1740, %v296
        %vm1799 = vcmp.eq.s32.totalorder %v1744, %v295
        %vm1800 = vcmp.eq.s32.totalorder %v1744, %v296
        %vm1801 = vcmp.eq.s32.totalorder %v1748, %v295
        %vm1802 = vcmp.eq.s32.totalorder %v1748, %v296
        %vm1803 = vcmp.eq.s32.totalorder %v1752, %v295
        %vm1804 = vcmp.eq.s32.totalorder %v1752, %v296
        %vm1805 = vcmp.eq.s32.totalorder %v1756, %v295
        %vm1806 = vcmp.eq.s32.totalorder %v1756, %v296
        %vm1807 = vcmp.eq.s32.totalorder %v1760, %v295
        %vm1808 = vcmp.eq.s32.totalorder %v1760, %v296
        %vm1809 = vcmp.eq.s32.totalorder %v1764, %v295
        %vm1810 = vcmp.eq.s32.totalorder %v1764, %v296
        %vm1811 = vcmp.eq.s32.totalorder %v1768, %v295
        %vm1812 = vcmp.eq.s32.totalorder %v1768, %v296
        %vm1813 = vcmp.eq.s32.totalorder %v1772, %v295
        %vm1814 = vcmp.eq.s32.totalorder %v1772, %v296
        %vm1815 = vcmp.eq.s32.totalorder %v1776, %v295
        %vm1816 = vcmp.eq.s32.totalorder %v1776, %v296
        %vm1817 = vcmp.eq.s32.totalorder %v1780, %v295
        %vm1818 = vcmp.eq.s32.totalorder %v1780, %v296
        %vm1819 = vcmp.eq.s32.totalorder %v1784, %v295
        %vm1820 = vcmp.eq.s32.totalorder %v1784, %v296
        %vm1821 = vcmp.eq.s32.totalorder %v1788, %v295
        %vm1822 = vcmp.eq.s32.totalorder %v1788, %v296
        %vm1823 = vcmp.eq.s32.totalorder %v1792, %v295
        %vm1824 = vcmp.eq.s32.totalorder %v1792, %v296
        %v1825 = vsel %vm1793, 1, 0
        %v1826 = vsel %vm1794, 1, 0
        %v1827 = vsel %vm1795, 1, 0
        %v1828 = vsel %vm1796, 1, 0
        %v1829 = vsel %vm1797, 1, 0
        %v1830 = vsel %vm1798, 1, 0
        %v1831 = vsel %vm1799, 1, 0
        %v1832 = vsel %vm1800, 1, 0
        %v1833 = vsel %vm1801, 1, 0
        %v1834 = vsel %vm1802, 1, 0
        %v1835 = vsel %vm1803, 1, 0
        %v1836 = vsel %vm1804, 1, 0
        %v1837 = vsel %vm1805, 1, 0
        %v1838 = vsel %vm1806, 1, 0
        %v1839 = vsel %vm1807, 1, 0
        %v1840 = vsel %vm1808, 1, 0
        %v1841 = vsel %vm1809, 1, 0
        %v1842 = vsel %vm1810, 1, 0
        %v1843 = vsel %vm1811, 1, 0
        %v1844 = vsel %vm1812, 1, 0
        %v1845 = vsel %vm1813, 1, 0
        %v1846 = vsel %vm1814, 1, 0
        %v1847 = vsel %vm1815, 1, 0
        %v1848 = vsel %vm1816, 1, 0
        %v1849 = vsel %vm1817, 1, 0
        %v1850 = vsel %vm1818, 1, 0
        %v1851 = vsel %vm1819, 1, 0
        %v1852 = vsel %vm1820, 1, 0
        %v1853 = vsel %vm1821, 1, 0
        %v1854 = vsel %vm1822, 1, 0
        %v1855 = vsel %vm1823, 1, 0
        %v1856 = vsel %vm1824, 1, 0
        %v1857 = vcvt.s32.f32 %v1825
        %v1858 = vcvt.s32.f32 %v1826
        %v1859 = vcvt.s32.f32 %v1827
        %v1860 = vcvt.s32.f32 %v1828
        %v1861 = vcvt.s32.f32 %v1829
        %v1862 = vcvt.s32.f32 %v1830
        %v1863 = vcvt.s32.f32 %v1831
        %v1864 = vcvt.s32.f32 %v1832
        %v1865 = vcvt.s32.f32 %v1833
        %v1866 = vcvt.s32.f32 %v1834
        %v1867 = vcvt.s32.f32 %v1835
        %v1868 = vcvt.s32.f32 %v1836
        %v1869 = vcvt.s32.f32 %v1837
        %v1870 = vcvt.s32.f32 %v1838
        %v1871 = vcvt.s32.f32 %v1839
        %v1872 = vcvt.s32.f32 %v1840
        %v1873 = vcvt.s32.f32 %v1841
        %v1874 = vcvt.s32.f32 %v1842
        %v1875 = vcvt.s32.f32 %v1843
        %v1876 = vcvt.s32.f32 %v1844
        %v1877 = vcvt.s32.f32 %v1845
        %v1878 = vcvt.s32.f32 %v1846
        %v1879 = vcvt.s32.f32 %v1847
        %v1880 = vcvt.s32.f32 %v1848
        %v1881 = vcvt.s32.f32 %v1849
        %v1882 = vcvt.s32.f32 %v1850
        %v1883 = vcvt.s32.f32 %v1851
        %v1884 = vcvt.s32.f32 %v1852
        %v1885 = vcvt.s32.f32 %v1853
        %v1886 = vcvt.s32.f32 %v1854
        %v1887 = vcvt.s32.f32 %v1855
        %v1888 = vcvt.s32.f32 %v1856
        %1889 = vmatprep.subr.mxu0 0.0
        %1890 = vmatpush1.msra.mxu0 %v209
        %1891 = vmatprep.subr.mxu0 0.0
        %1892 = vmatpush1.msra.mxu0 %v208
        %1893 = vmatprep.subr.mxu0 0.0
        %1894 = vmatpush1.msra.mxu0 %v207
        %1895 = vmatprep.subr.mxu0 0.0
        %1896 = vmatpush1.msra.mxu0 %v206
        %1897 = vmatprep.subr.mxu0 0.0
        %1898 = vmatpush1.msra.mxu0 %v205
        %1899 = vmatprep.subr.mxu0 0.0
        %1900 = vmatpush1.msra.mxu0 %v204
        %1901 = vmatprep.subr.mxu0 0.0
        %1902 = vmatpush1.msra.mxu0 %v203
        %1903 = vmatprep.subr.mxu0 0.0
        %1904 = vmatpush1.msra.mxu0 %v202
        %1905 = vmatprep.subr.mxu0 0.0
        %1906 = vmatpush1.msra.mxu0 %v201
        %1907 = vmatprep.subr.mxu0 0.0
        %1908 = vmatpush1.msra.mxu0 %v200
        %1909 = vmatprep.subr.mxu0 0.0
        %1910 = vmatpush1.msra.mxu0 %v199
        %1911 = vmatprep.subr.mxu0 0.0
        %1912 = vmatpush1.msra.mxu0 %v198
        %1913 = vmatprep.subr.mxu0 0.0
        %1914 = vmatpush1.msra.mxu0 %v197
        %1915 = vmatprep.subr.mxu0 0.0
        %1916 = vmatpush1.msra.mxu0 %v196
        %1917 = vmatprep.subr.mxu0 0.0
        %1918 = vmatpush1.msra.mxu0 %v195
        %1919 = vmatprep.subr.mxu0 0.0
        %1920 = vmatpush1.msra.mxu0 %v194
        %1921 = vmatprep.subr.mxu0 0.0
        %1922 = vmatpush2.msra.mxu0 %v225
        %1923 = vmatprep.subr.mxu0 0.0
        %1924 = vmatpush2.msra.mxu0 %v224
        %1925 = vmatprep.subr.mxu0 0.0
        %1926 = vmatpush2.msra.mxu0 %v223
        %1927 = vmatprep.subr.mxu0 0.0
        %1928 = vmatpush2.msra.mxu0 %v222
        %1929 = vmatprep.subr.mxu0 0.0
        %1930 = vmatpush2.msra.mxu0 %v221
        %1931 = vmatprep.subr.mxu0 0.0
        %1932 = vmatpush2.msra.mxu0 %v220
        %1933 = vmatprep.subr.mxu0 0.0
        %1934 = vmatpush2.msra.mxu0 %v219
        %1935 = vmatprep.subr.mxu0 0.0
        %1936 = vmatpush2.msra.mxu0 %v218
        %1937 = vmatprep.subr.mxu0 0.0
        %1938 = vmatpush2.msra.mxu0 %v217
        %1939 = vmatprep.subr.mxu0 0.0
        %1940 = vmatpush2.msra.mxu0 %v216
        %1941 = vmatprep.subr.mxu0 0.0
        %1942 = vmatpush2.msra.mxu0 %v215
        %1943 = vmatprep.subr.mxu0 0.0
        %1944 = vmatpush2.msra.mxu0 %v214
        %1945 = vmatprep.subr.mxu0 0.0
        %1946 = vmatpush2.msra.mxu0 %v213
        %1947 = vmatprep.subr.mxu0 0.0
        %1948 = vmatpush2.msra.mxu0 %v212
        %1949 = vmatprep.subr.mxu0 0.0
        %1950 = vmatpush2.msra.mxu0 %v211
        %1951 = vmatprep.subr.mxu0 0.0
        %1952 = vmatpush2.msra.mxu0 %v210
        %1953 = vmatprep.mubr.f32.mxu0 %v1858
        %1954 = vmatmul.mubr.f32.gmra.mxu0 %v1857
        %v1955 = vpop.f32.mrf.mxu0
        %v1956 = vadd.f32 0.0, %v1955
        %v1957 = vpop.f32.mrf.mxu0
        %1958 = vmatprep.mubr.f32.mxu0 %v1860
        %1959 = vmatmul.mubr.f32.gmra.mxu0 %v1859
        %v1960 = vpop.f32.mrf.mxu0
        %v1961 = vadd.f32 0.0, %v1960
        %v1962 = vpop.f32.mrf.mxu0
        %1963 = vmatprep.mubr.f32.mxu0 %v1862
        %1964 = vmatmul.mubr.f32.gmra.mxu0 %v1861
        %v1965 = vpop.f32.mrf.mxu0
        %v1966 = vadd.f32 0.0, %v1965
        %v1967 = vpop.f32.mrf.mxu0
        %1968 = vmatprep.mubr.f32.mxu0 %v1864
        %1969 = vmatmul.mubr.f32.gmra.mxu0 %v1863
        %v1970 = vpop.f32.mrf.mxu0
        %v1971 = vadd.f32 0.0, %v1970
        %v1972 = vpop.f32.mrf.mxu0
        %1973 = vmatprep.mubr.f32.mxu0 %v1866
        %1974 = vmatmul.mubr.f32.gmra.mxu0 %v1865
        %v1975 = vpop.f32.mrf.mxu0
        %v1976 = vadd.f32 0.0, %v1975
        %v1977 = vpop.f32.mrf.mxu0
        %1978 = vmatprep.mubr.f32.mxu0 %v1868
        %1979 = vmatmul.mubr.f32.gmra.mxu0 %v1867
        %v1980 = vpop.f32.mrf.mxu0
        %v1981 = vadd.f32 0.0, %v1980
        %v1982 = vpop.f32.mrf.mxu0
        %1983 = vmatprep.mubr.f32.mxu0 %v1870
        %1984 = vmatmul.mubr.f32.gmra.mxu0 %v1869
        %v1985 = vpop.f32.mrf.mxu0
        %v1986 = vadd.f32 0.0, %v1985
        %v1987 = vpop.f32.mrf.mxu0
        %1988 = vmatprep.mubr.f32.mxu0 %v1872
        %1989 = vmatmul.mubr.f32.gmra.mxu0 %v1871
        %v1990 = vpop.f32.mrf.mxu0
        %v1991 = vadd.f32 0.0, %v1990
        %v1992 = vpop.f32.mrf.mxu0
        %1993 = vmatprep.mubr.f32.mxu0 %v1874
        %1994 = vmatmul.mubr.f32.gmra.mxu0 %v1873
        %v1995 = vpop.f32.mrf.mxu0
        %v1996 = vadd.f32 0.0, %v1995
        %v1997 = vpop.f32.mrf.mxu0
        %1998 = vmatprep.mubr.f32.mxu0 %v1876
        %1999 = vmatmul.mubr.f32.gmra.mxu0 %v1875
        %v2000 = vpop.f32.mrf.mxu0
        %v2001 = vadd.f32 0.0, %v2000
        %v2002 = vpop.f32.mrf.mxu0
        %2003 = vmatprep.mubr.f32.mxu0 %v1878
        %2004 = vmatmul.mubr.f32.gmra.mxu0 %v1877
        %v2005 = vpop.f32.mrf.mxu0
        %v2006 = vadd.f32 0.0, %v2005
        %v2007 = vpop.f32.mrf.mxu0
        %2008 = vmatprep.mubr.f32.mxu0 %v1880
        %2009 = vmatmul.mubr.f32.gmra.mxu0 %v1879
        %v2010 = vpop.f32.mrf.mxu0
        %v2011 = vadd.f32 0.0, %v2010
        %v2012 = vpop.f32.mrf.mxu0
        %2013 = vmatprep.mubr.f32.mxu0 %v1882
        %2014 = vmatmul.mubr.f32.gmra.mxu0 %v1881
        %v2015 = vpop.f32.mrf.mxu0
        %v2016 = vadd.f32 0.0, %v2015
        %v2017 = vpop.f32.mrf.mxu0
        %2018 = vmatprep.mubr.f32.mxu0 %v1884
        %2019 = vmatmul.mubr.f32.gmra.mxu0 %v1883
        %v2020 = vpop.f32.mrf.mxu0
        %v2021 = vadd.f32 0.0, %v2020
        %v2022 = vpop.f32.mrf.mxu0
        %2023 = vmatprep.mubr.f32.mxu0 %v1886
        %2024 = vmatmul.mubr.f32.gmra.mxu0 %v1885
        %v2025 = vpop.f32.mrf.mxu0
        %v2026 = vadd.f32 0.0, %v2025
        %v2027 = vpop.f32.mrf.mxu0
        %2028 = vmatprep.mubr.f32.mxu0 %v1888
        %2029 = vmatmul.mubr.f32.gmra.mxu0 %v1887
        %v2030 = vpop.f32.mrf.mxu0
        %v2031 = vadd.f32 0.0, %v2030
        %v2032 = vpop.f32.mrf.mxu0
        %2033 = vdwg.mxu0
        %2034 = vst.msk [vmem:[#allocation2 + $0x8] sm:$0xff] %vm538, %v1956
        %2035 = vst.msk [vmem:[#allocation2 + $0x18] sm:$0xff] %vm538, %v1961
        %2036 = vst.msk [vmem:[#allocation2 + $0x28] sm:$0xff] %vm538, %v1966
        %2037 = vst.msk [vmem:[#allocation2 + $0x38] sm:$0xff] %vm538, %v1971
        %2038 = vst.msk [vmem:[#allocation2 + $0x48] sm:$0xff] %vm538, %v1976
        %2039 = vst.msk [vmem:[#allocation2 + $0x58] sm:$0xff] %vm538, %v1981
        %2040 = vst.msk [vmem:[#allocation2 + $0x68] sm:$0xff] %vm538, %v1986
        %2041 = vst.msk [vmem:[#allocation2 + $0x78] sm:$0xff] %vm538, %v1991
        %2042 = vst.msk [vmem:[#allocation2 + $0x88] sm:$0xff] %vm538, %v1996
        %2043 = vst.msk [vmem:[#allocation2 + $0x98] sm:$0xff] %vm538, %v2001
        %2044 = vst.msk [vmem:[#allocation2 + $0xa8] sm:$0xff] %vm538, %v2006
        %2045 = vst.msk [vmem:[#allocation2 + $0xb8] sm:$0xff] %vm538, %v2011
        %2046 = vst.msk [vmem:[#allocation2 + $0xc8] sm:$0xff] %vm538, %v2016
        %2047 = vst.msk [vmem:[#allocation2 + $0xd8] sm:$0xff] %vm538, %v2021
        %2048 = vst.msk [vmem:[#allocation2 + $0xe8] sm:$0xff] %vm538, %v2026
        %2049 = vst.msk [vmem:[#allocation2 + $0xf8] sm:$0xff] %vm538, %v2031
        %v2050 = vld [vmem:[%s192 + $0x5] sm:$0x1]
        %v2051 = vlaneseq
        %v2052 = vshrl.u32 %v2051, 7
        %v2053 = vsub.s32 0, %v2052
        %v2054 = vrot.slane %v2050, %v2053
        %2056 = vbcast.lane.b32.xlu0 %v2054, 256
        %v2057 = vpop.permute.xlu0 %2056
        %s2059 = sor.u32 256, 8
        %2060 = vbcast.lane.b32.xlu0 %v2054, %s2059
        %v2061 = vpop.permute.xlu0 %2060
        %s2063 = sor.u32 256, 16
        %2064 = vbcast.lane.b32.xlu0 %v2054, %s2063
        %v2065 = vpop.permute.xlu0 %2064
        %s2067 = sor.u32 256, 24
        %2068 = vbcast.lane.b32.xlu0 %v2054, %s2067
        %v2069 = vpop.permute.xlu0 %2068
        %s2071 = sor.u32 256, 32
        %2072 = vbcast.lane.b32.xlu0 %v2054, %s2071
        %v2073 = vpop.permute.xlu0 %2072
        %s2075 = sor.u32 256, 40
        %2076 = vbcast.lane.b32.xlu0 %v2054, %s2075
        %v2077 = vpop.permute.xlu0 %2076
        %s2079 = sor.u32 256, 48
        %2080 = vbcast.lane.b32.xlu0 %v2054, %s2079
        %v2081 = vpop.permute.xlu0 %2080
        %s2083 = sor.u32 256, 56
        %2084 = vbcast.lane.b32.xlu0 %v2054, %s2083
        %v2085 = vpop.permute.xlu0 %2084
        %s2087 = sor.u32 256, 64
        %2088 = vbcast.lane.b32.xlu0 %v2054, %s2087
        %v2089 = vpop.permute.xlu0 %2088
        %s2091 = sor.u32 256, 72
        %2092 = vbcast.lane.b32.xlu0 %v2054, %s2091
        %v2093 = vpop.permute.xlu0 %2092
        %s2095 = sor.u32 256, 80
        %2096 = vbcast.lane.b32.xlu0 %v2054, %s2095
        %v2097 = vpop.permute.xlu0 %2096
        %s2099 = sor.u32 256, 88
        %2100 = vbcast.lane.b32.xlu0 %v2054, %s2099
        %v2101 = vpop.permute.xlu0 %2100
        %s2103 = sor.u32 256, 96
        %2104 = vbcast.lane.b32.xlu0 %v2054, %s2103
        %v2105 = vpop.permute.xlu0 %2104
        %s2107 = sor.u32 256, 104
        %2108 = vbcast.lane.b32.xlu0 %v2054, %s2107
        %v2109 = vpop.permute.xlu0 %2108
        %s2111 = sor.u32 256, 112
        %2112 = vbcast.lane.b32.xlu0 %v2054, %s2111
        %v2113 = vpop.permute.xlu0 %2112
        %s2115 = sor.u32 256, 120
        %2116 = vbcast.lane.b32.xlu0 %v2054, %s2115
        %v2117 = vpop.permute.xlu0 %2116
        %vm2118 = vcmp.eq.s32.totalorder %v2057, %v295
        %vm2119 = vcmp.eq.s32.totalorder %v2057, %v296
        %vm2120 = vcmp.eq.s32.totalorder %v2061, %v295
        %vm2121 = vcmp.eq.s32.totalorder %v2061, %v296
        %vm2122 = vcmp.eq.s32.totalorder %v2065, %v295
        %vm2123 = vcmp.eq.s32.totalorder %v2065, %v296
        %vm2124 = vcmp.eq.s32.totalorder %v2069, %v295
        %vm2125 = vcmp.eq.s32.totalorder %v2069, %v296
        %vm2126 = vcmp.eq.s32.totalorder %v2073, %v295
        %vm2127 = vcmp.eq.s32.totalorder %v2073, %v296
        %vm2128 = vcmp.eq.s32.totalorder %v2077, %v295
        %vm2129 = vcmp.eq.s32.totalorder %v2077, %v296
        %vm2130 = vcmp.eq.s32.totalorder %v2081, %v295
        %vm2131 = vcmp.eq.s32.totalorder %v2081, %v296
        %vm2132 = vcmp.eq.s32.totalorder %v2085, %v295
        %vm2133 = vcmp.eq.s32.totalorder %v2085, %v296
        %vm2134 = vcmp.eq.s32.totalorder %v2089, %v295
        %vm2135 = vcmp.eq.s32.totalorder %v2089, %v296
        %vm2136 = vcmp.eq.s32.totalorder %v2093, %v295
        %vm2137 = vcmp.eq.s32.totalorder %v2093, %v296
        %vm2138 = vcmp.eq.s32.totalorder %v2097, %v295
        %vm2139 = vcmp.eq.s32.totalorder %v2097, %v296
        %vm2140 = vcmp.eq.s32.totalorder %v2101, %v295
        %vm2141 = vcmp.eq.s32.totalorder %v2101, %v296
        %vm2142 = vcmp.eq.s32.totalorder %v2105, %v295
        %vm2143 = vcmp.eq.s32.totalorder %v2105, %v296
        %vm2144 = vcmp.eq.s32.totalorder %v2109, %v295
        %vm2145 = vcmp.eq.s32.totalorder %v2109, %v296
        %vm2146 = vcmp.eq.s32.totalorder %v2113, %v295
        %vm2147 = vcmp.eq.s32.totalorder %v2113, %v296
        %vm2148 = vcmp.eq.s32.totalorder %v2117, %v295
        %vm2149 = vcmp.eq.s32.totalorder %v2117, %v296
        %v2150 = vsel %vm2118, 1, 0
        %v2151 = vsel %vm2119, 1, 0
        %v2152 = vsel %vm2120, 1, 0
        %v2153 = vsel %vm2121, 1, 0
        %v2154 = vsel %vm2122, 1, 0
        %v2155 = vsel %vm2123, 1, 0
        %v2156 = vsel %vm2124, 1, 0
        %v2157 = vsel %vm2125, 1, 0
        %v2158 = vsel %vm2126, 1, 0
        %v2159 = vsel %vm2127, 1, 0
        %v2160 = vsel %vm2128, 1, 0
        %v2161 = vsel %vm2129, 1, 0
        %v2162 = vsel %vm2130, 1, 0
        %v2163 = vsel %vm2131, 1, 0
        %v2164 = vsel %vm2132, 1, 0
        %v2165 = vsel %vm2133, 1, 0
        %v2166 = vsel %vm2134, 1, 0
        %v2167 = vsel %vm2135, 1, 0
        %v2168 = vsel %vm2136, 1, 0
        %v2169 = vsel %vm2137, 1, 0
        %v2170 = vsel %vm2138, 1, 0
        %v2171 = vsel %vm2139, 1, 0
        %v2172 = vsel %vm2140, 1, 0
        %v2173 = vsel %vm2141, 1, 0
        %v2174 = vsel %vm2142, 1, 0
        %v2175 = vsel %vm2143, 1, 0
        %v2176 = vsel %vm2144, 1, 0
        %v2177 = vsel %vm2145, 1, 0
        %v2178 = vsel %vm2146, 1, 0
        %v2179 = vsel %vm2147, 1, 0
        %v2180 = vsel %vm2148, 1, 0
        %v2181 = vsel %vm2149, 1, 0
        %v2182 = vcvt.s32.f32 %v2150
        %v2183 = vcvt.s32.f32 %v2151
        %v2184 = vcvt.s32.f32 %v2152
        %v2185 = vcvt.s32.f32 %v2153
        %v2186 = vcvt.s32.f32 %v2154
        %v2187 = vcvt.s32.f32 %v2155
        %v2188 = vcvt.s32.f32 %v2156
        %v2189 = vcvt.s32.f32 %v2157
        %v2190 = vcvt.s32.f32 %v2158
        %v2191 = vcvt.s32.f32 %v2159
        %v2192 = vcvt.s32.f32 %v2160
        %v2193 = vcvt.s32.f32 %v2161
        %v2194 = vcvt.s32.f32 %v2162
        %v2195 = vcvt.s32.f32 %v2163
        %v2196 = vcvt.s32.f32 %v2164
        %v2197 = vcvt.s32.f32 %v2165
        %v2198 = vcvt.s32.f32 %v2166
        %v2199 = vcvt.s32.f32 %v2167
        %v2200 = vcvt.s32.f32 %v2168
        %v2201 = vcvt.s32.f32 %v2169
        %v2202 = vcvt.s32.f32 %v2170
        %v2203 = vcvt.s32.f32 %v2171
        %v2204 = vcvt.s32.f32 %v2172
        %v2205 = vcvt.s32.f32 %v2173
        %v2206 = vcvt.s32.f32 %v2174
        %v2207 = vcvt.s32.f32 %v2175
        %v2208 = vcvt.s32.f32 %v2176
        %v2209 = vcvt.s32.f32 %v2177
        %v2210 = vcvt.s32.f32 %v2178
        %v2211 = vcvt.s32.f32 %v2179
        %v2212 = vcvt.s32.f32 %v2180
        %v2213 = vcvt.s32.f32 %v2181
        %2214 = vmatprep.subr.mxu0 0.0
        %2215 = vmatpush1.msra.mxu0 %v209
        %2216 = vmatprep.subr.mxu0 0.0
        %2217 = vmatpush1.msra.mxu0 %v208
        %2218 = vmatprep.subr.mxu0 0.0
        %2219 = vmatpush1.msra.mxu0 %v207
        %2220 = vmatprep.subr.mxu0 0.0
        %2221 = vmatpush1.msra.mxu0 %v206
        %2222 = vmatprep.subr.mxu0 0.0
        %2223 = vmatpush1.msra.mxu0 %v205
        %2224 = vmatprep.subr.mxu0 0.0
        %2225 = vmatpush1.msra.mxu0 %v204
        %2226 = vmatprep.subr.mxu0 0.0
        %2227 = vmatpush1.msra.mxu0 %v203
        %2228 = vmatprep.subr.mxu0 0.0
        %2229 = vmatpush1.msra.mxu0 %v202
        %2230 = vmatprep.subr.mxu0 0.0
        %2231 = vmatpush1.msra.mxu0 %v201
        %2232 = vmatprep.subr.mxu0 0.0
        %2233 = vmatpush1.msra.mxu0 %v200
        %2234 = vmatprep.subr.mxu0 0.0
        %2235 = vmatpush1.msra.mxu0 %v199
        %2236 = vmatprep.subr.mxu0 0.0
        %2237 = vmatpush1.msra.mxu0 %v198
        %2238 = vmatprep.subr.mxu0 0.0
        %2239 = vmatpush1.msra.mxu0 %v197
        %2240 = vmatprep.subr.mxu0 0.0
        %2241 = vmatpush1.msra.mxu0 %v196
        %2242 = vmatprep.subr.mxu0 0.0
        %2243 = vmatpush1.msra.mxu0 %v195
        %2244 = vmatprep.subr.mxu0 0.0
        %2245 = vmatpush1.msra.mxu0 %v194
        %2246 = vmatprep.subr.mxu0 0.0
        %2247 = vmatpush2.msra.mxu0 %v225
        %2248 = vmatprep.subr.mxu0 0.0
        %2249 = vmatpush2.msra.mxu0 %v224
        %2250 = vmatprep.subr.mxu0 0.0
        %2251 = vmatpush2.msra.mxu0 %v223
        %2252 = vmatprep.subr.mxu0 0.0
        %2253 = vmatpush2.msra.mxu0 %v222
        %2254 = vmatprep.subr.mxu0 0.0
        %2255 = vmatpush2.msra.mxu0 %v221
        %2256 = vmatprep.subr.mxu0 0.0
        %2257 = vmatpush2.msra.mxu0 %v220
        %2258 = vmatprep.subr.mxu0 0.0
        %2259 = vmatpush2.msra.mxu0 %v219
        %2260 = vmatprep.subr.mxu0 0.0
        %2261 = vmatpush2.msra.mxu0 %v218
        %2262 = vmatprep.subr.mxu0 0.0
        %2263 = vmatpush2.msra.mxu0 %v217
        %2264 = vmatprep.subr.mxu0 0.0
        %2265 = vmatpush2.msra.mxu0 %v216
        %2266 = vmatprep.subr.mxu0 0.0
        %2267 = vmatpush2.msra.mxu0 %v215
        %2268 = vmatprep.subr.mxu0 0.0
        %2269 = vmatpush2.msra.mxu0 %v214
        %2270 = vmatprep.subr.mxu0 0.0
        %2271 = vmatpush2.msra.mxu0 %v213
        %2272 = vmatprep.subr.mxu0 0.0
        %2273 = vmatpush2.msra.mxu0 %v212
        %2274 = vmatprep.subr.mxu0 0.0
        %2275 = vmatpush2.msra.mxu0 %v211
        %2276 = vmatprep.subr.mxu0 0.0
        %2277 = vmatpush2.msra.mxu0 %v210
        %2278 = vmatprep.mubr.f32.mxu0 %v2183
        %2279 = vmatmul.mubr.f32.gmra.mxu0 %v2182
        %v2280 = vpop.f32.mrf.mxu0
        %v2281 = vadd.f32 0.0, %v2280
        %v2282 = vpop.f32.mrf.mxu0
        %2283 = vmatprep.mubr.f32.mxu0 %v2185
        %2284 = vmatmul.mubr.f32.gmra.mxu0 %v2184
        %v2285 = vpop.f32.mrf.mxu0
        %v2286 = vadd.f32 0.0, %v2285
        %v2287 = vpop.f32.mrf.mxu0
        %2288 = vmatprep.mubr.f32.mxu0 %v2187
        %2289 = vmatmul.mubr.f32.gmra.mxu0 %v2186
        %v2290 = vpop.f32.mrf.mxu0
        %v2291 = vadd.f32 0.0, %v2290
        %v2292 = vpop.f32.mrf.mxu0
        %2293 = vmatprep.mubr.f32.mxu0 %v2189
        %2294 = vmatmul.mubr.f32.gmra.mxu0 %v2188
        %v2295 = vpop.f32.mrf.mxu0
        %v2296 = vadd.f32 0.0, %v2295
        %v2297 = vpop.f32.mrf.mxu0
        %2298 = vmatprep.mubr.f32.mxu0 %v2191
        %2299 = vmatmul.mubr.f32.gmra.mxu0 %v2190
        %v2300 = vpop.f32.mrf.mxu0
        %v2301 = vadd.f32 0.0, %v2300
        %v2302 = vpop.f32.mrf.mxu0
        %2303 = vmatprep.mubr.f32.mxu0 %v2193
        %2304 = vmatmul.mubr.f32.gmra.mxu0 %v2192
        %v2305 = vpop.f32.mrf.mxu0
        %v2306 = vadd.f32 0.0, %v2305
        %v2307 = vpop.f32.mrf.mxu0
        %2308 = vmatprep.mubr.f32.mxu0 %v2195
        %2309 = vmatmul.mubr.f32.gmra.mxu0 %v2194
        %v2310 = vpop.f32.mrf.mxu0
        %v2311 = vadd.f32 0.0, %v2310
        %v2312 = vpop.f32.mrf.mxu0
        %2313 = vmatprep.mubr.f32.mxu0 %v2197
        %2314 = vmatmul.mubr.f32.gmra.mxu0 %v2196
        %v2315 = vpop.f32.mrf.mxu0
        %v2316 = vadd.f32 0.0, %v2315
        %v2317 = vpop.f32.mrf.mxu0
        %2318 = vmatprep.mubr.f32.mxu0 %v2199
        %2319 = vmatmul.mubr.f32.gmra.mxu0 %v2198
        %v2320 = vpop.f32.mrf.mxu0
        %v2321 = vadd.f32 0.0, %v2320
        %v2322 = vpop.f32.mrf.mxu0
        %2323 = vmatprep.mubr.f32.mxu0 %v2201
        %2324 = vmatmul.mubr.f32.gmra.mxu0 %v2200
        %v2325 = vpop.f32.mrf.mxu0
        %v2326 = vadd.f32 0.0, %v2325
        %v2327 = vpop.f32.mrf.mxu0
        %2328 = vmatprep.mubr.f32.mxu0 %v2203
        %2329 = vmatmul.mubr.f32.gmra.mxu0 %v2202
        %v2330 = vpop.f32.mrf.mxu0
        %v2331 = vadd.f32 0.0, %v2330
        %v2332 = vpop.f32.mrf.mxu0
        %2333 = vmatprep.mubr.f32.mxu0 %v2205
        %2334 = vmatmul.mubr.f32.gmra.mxu0 %v2204
        %v2335 = vpop.f32.mrf.mxu0
        %v2336 = vadd.f32 0.0, %v2335
        %v2337 = vpop.f32.mrf.mxu0
        %2338 = vmatprep.mubr.f32.mxu0 %v2207
        %2339 = vmatmul.mubr.f32.gmra.mxu0 %v2206
        %v2340 = vpop.f32.mrf.mxu0
        %v2341 = vadd.f32 0.0, %v2340
        %v2342 = vpop.f32.mrf.mxu0
        %2343 = vmatprep.mubr.f32.mxu0 %v2209
        %2344 = vmatmul.mubr.f32.gmra.mxu0 %v2208
        %v2345 = vpop.f32.mrf.mxu0
        %v2346 = vadd.f32 0.0, %v2345
        %v2347 = vpop.f32.mrf.mxu0
        %2348 = vmatprep.mubr.f32.mxu0 %v2211
        %2349 = vmatmul.mubr.f32.gmra.mxu0 %v2210
        %v2350 = vpop.f32.mrf.mxu0
        %v2351 = vadd.f32 0.0, %v2350
        %v2352 = vpop.f32.mrf.mxu0
        %2353 = vmatprep.mubr.f32.mxu0 %v2213
        %2354 = vmatmul.mubr.f32.gmra.mxu0 %v2212
        %v2355 = vpop.f32.mrf.mxu0
        %v2356 = vadd.f32 0.0, %v2355
        %v2357 = vpop.f32.mrf.mxu0
        %2358 = vdwg.mxu0
        %2375 = vrot.lane.b32.xlu0 %v2281, 32
        %v2376 = vpop.permute.xlu0 %2375
        %2377 = vrot.lane.b32.xlu0 %v2286, 32
        %v2378 = vpop.permute.xlu0 %2377
        %2379 = vrot.lane.b32.xlu0 %v2291, 32
        %v2380 = vpop.permute.xlu0 %2379
        %2381 = vrot.lane.b32.xlu0 %v2296, 32
        %v2382 = vpop.permute.xlu0 %2381
        %2383 = vrot.lane.b32.xlu0 %v2301, 32
        %v2384 = vpop.permute.xlu0 %2383
        %2385 = vrot.lane.b32.xlu0 %v2306, 32
        %v2386 = vpop.permute.xlu0 %2385
        %2387 = vrot.lane.b32.xlu0 %v2311, 32
        %v2388 = vpop.permute.xlu0 %2387
        %2389 = vrot.lane.b32.xlu0 %v2316, 32
        %v2390 = vpop.permute.xlu0 %2389
        %2391 = vrot.lane.b32.xlu0 %v2321, 32
        %v2392 = vpop.permute.xlu0 %2391
        %2393 = vrot.lane.b32.xlu0 %v2326, 32
        %v2394 = vpop.permute.xlu0 %2393
        %2395 = vrot.lane.b32.xlu0 %v2331, 32
        %v2396 = vpop.permute.xlu0 %2395
        %2397 = vrot.lane.b32.xlu0 %v2336, 32
        %v2398 = vpop.permute.xlu0 %2397
        %2399 = vrot.lane.b32.xlu0 %v2341, 32
        %v2400 = vpop.permute.xlu0 %2399
        %2401 = vrot.lane.b32.xlu0 %v2346, 32
        %v2402 = vpop.permute.xlu0 %2401
        %2403 = vrot.lane.b32.xlu0 %v2351, 32
        %v2404 = vpop.permute.xlu0 %2403
        %2405 = vrot.lane.b32.xlu0 %v2356, 32
        %v2406 = vpop.permute.xlu0 %2405
        %2423 = vst.msk [vmem:[#allocation2 + $0x8] sm:$0xff] %vm928, %v2376
        %2424 = vst.msk [vmem:[#allocation2 + $0x18] sm:$0xff] %vm928, %v2378
        %2425 = vst.msk [vmem:[#allocation2 + $0x28] sm:$0xff] %vm928, %v2380
        %2426 = vst.msk [vmem:[#allocation2 + $0x38] sm:$0xff] %vm928, %v2382
        %2427 = vst.msk [vmem:[#allocation2 + $0x48] sm:$0xff] %vm928, %v2384
        %2428 = vst.msk [vmem:[#allocation2 + $0x58] sm:$0xff] %vm928, %v2386
        %2429 = vst.msk [vmem:[#allocation2 + $0x68] sm:$0xff] %vm928, %v2388
        %2430 = vst.msk [vmem:[#allocation2 + $0x78] sm:$0xff] %vm928, %v2390
        %2431 = vst.msk [vmem:[#allocation2 + $0x88] sm:$0xff] %vm928, %v2392
        %2432 = vst.msk [vmem:[#allocation2 + $0x98] sm:$0xff] %vm928, %v2394
        %2433 = vst.msk [vmem:[#allocation2 + $0xa8] sm:$0xff] %vm928, %v2396
        %2434 = vst.msk [vmem:[#allocation2 + $0xb8] sm:$0xff] %vm928, %v2398
        %2435 = vst.msk [vmem:[#allocation2 + $0xc8] sm:$0xff] %vm928, %v2400
        %2436 = vst.msk [vmem:[#allocation2 + $0xd8] sm:$0xff] %vm928, %v2402
        %2437 = vst.msk [vmem:[#allocation2 + $0xe8] sm:$0xff] %vm928, %v2404
        %2438 = vst.msk [vmem:[#allocation2 + $0xf8] sm:$0xff] %vm928, %v2406
        %v2439 = vld [vmem:[%s192 + $0x6] sm:$0x1]
        %v2440 = vlaneseq
        %v2441 = vshrl.u32 %v2440, 7
        %v2442 = vsub.s32 0, %v2441
        %v2443 = vrot.slane %v2439, %v2442
        %2445 = vbcast.lane.b32.xlu0 %v2443, 256
        %v2446 = vpop.permute.xlu0 %2445
        %s2448 = sor.u32 256, 8
        %2449 = vbcast.lane.b32.xlu0 %v2443, %s2448
        %v2450 = vpop.permute.xlu0 %2449
        %s2452 = sor.u32 256, 16
        %2453 = vbcast.lane.b32.xlu0 %v2443, %s2452
        %v2454 = vpop.permute.xlu0 %2453
        %s2456 = sor.u32 256, 24
        %2457 = vbcast.lane.b32.xlu0 %v2443, %s2456
        %v2458 = vpop.permute.xlu0 %2457
        %s2460 = sor.u32 256, 32
        %2461 = vbcast.lane.b32.xlu0 %v2443, %s2460
        %v2462 = vpop.permute.xlu0 %2461
        %s2464 = sor.u32 256, 40
        %2465 = vbcast.lane.b32.xlu0 %v2443, %s2464
        %v2466 = vpop.permute.xlu0 %2465
        %s2468 = sor.u32 256, 48
        %2469 = vbcast.lane.b32.xlu0 %v2443, %s2468
        %v2470 = vpop.permute.xlu0 %2469
        %s2472 = sor.u32 256, 56
        %2473 = vbcast.lane.b32.xlu0 %v2443, %s2472
        %v2474 = vpop.permute.xlu0 %2473
        %s2476 = sor.u32 256, 64
        %2477 = vbcast.lane.b32.xlu0 %v2443, %s2476
        %v2478 = vpop.permute.xlu0 %2477
        %s2480 = sor.u32 256, 72
        %2481 = vbcast.lane.b32.xlu0 %v2443, %s2480
        %v2482 = vpop.permute.xlu0 %2481
        %s2484 = sor.u32 256, 80
        %2485 = vbcast.lane.b32.xlu0 %v2443, %s2484
        %v2486 = vpop.permute.xlu0 %2485
        %s2488 = sor.u32 256, 88
        %2489 = vbcast.lane.b32.xlu0 %v2443, %s2488
        %v2490 = vpop.permute.xlu0 %2489
        %s2492 = sor.u32 256, 96
        %2493 = vbcast.lane.b32.xlu0 %v2443, %s2492
        %v2494 = vpop.permute.xlu0 %2493
        %s2496 = sor.u32 256, 104
        %2497 = vbcast.lane.b32.xlu0 %v2443, %s2496
        %v2498 = vpop.permute.xlu0 %2497
        %s2500 = sor.u32 256, 112
        %2501 = vbcast.lane.b32.xlu0 %v2443, %s2500
        %v2502 = vpop.permute.xlu0 %2501
        %s2504 = sor.u32 256, 120
        %2505 = vbcast.lane.b32.xlu0 %v2443, %s2504
        %v2506 = vpop.permute.xlu0 %2505
        %vm2507 = vcmp.eq.s32.totalorder %v2446, %v295
        %vm2508 = vcmp.eq.s32.totalorder %v2446, %v296
        %vm2509 = vcmp.eq.s32.totalorder %v2450, %v295
        %vm2510 = vcmp.eq.s32.totalorder %v2450, %v296
        %vm2511 = vcmp.eq.s32.totalorder %v2454, %v295
        %vm2512 = vcmp.eq.s32.totalorder %v2454, %v296
        %vm2513 = vcmp.eq.s32.totalorder %v2458, %v295
        %vm2514 = vcmp.eq.s32.totalorder %v2458, %v296
        %vm2515 = vcmp.eq.s32.totalorder %v2462, %v295
        %vm2516 = vcmp.eq.s32.totalorder %v2462, %v296
        %vm2517 = vcmp.eq.s32.totalorder %v2466, %v295
        %vm2518 = vcmp.eq.s32.totalorder %v2466, %v296
        %vm2519 = vcmp.eq.s32.totalorder %v2470, %v295
        %vm2520 = vcmp.eq.s32.totalorder %v2470, %v296
        %vm2521 = vcmp.eq.s32.totalorder %v2474, %v295
        %vm2522 = vcmp.eq.s32.totalorder %v2474, %v296
        %vm2523 = vcmp.eq.s32.totalorder %v2478, %v295
        %vm2524 = vcmp.eq.s32.totalorder %v2478, %v296
        %vm2525 = vcmp.eq.s32.totalorder %v2482, %v295
        %vm2526 = vcmp.eq.s32.totalorder %v2482, %v296
        %vm2527 = vcmp.eq.s32.totalorder %v2486, %v295
        %vm2528 = vcmp.eq.s32.totalorder %v2486, %v296
        %vm2529 = vcmp.eq.s32.totalorder %v2490, %v295
        %vm2530 = vcmp.eq.s32.totalorder %v2490, %v296
        %vm2531 = vcmp.eq.s32.totalorder %v2494, %v295
        %vm2532 = vcmp.eq.s32.totalorder %v2494, %v296
        %vm2533 = vcmp.eq.s32.totalorder %v2498, %v295
        %vm2534 = vcmp.eq.s32.totalorder %v2498, %v296
        %vm2535 = vcmp.eq.s32.totalorder %v2502, %v295
        %vm2536 = vcmp.eq.s32.totalorder %v2502, %v296
        %vm2537 = vcmp.eq.s32.totalorder %v2506, %v295
        %vm2538 = vcmp.eq.s32.totalorder %v2506, %v296
        %v2539 = vsel %vm2507, 1, 0
        %v2540 = vsel %vm2508, 1, 0
        %v2541 = vsel %vm2509, 1, 0
        %v2542 = vsel %vm2510, 1, 0
        %v2543 = vsel %vm2511, 1, 0
        %v2544 = vsel %vm2512, 1, 0
        %v2545 = vsel %vm2513, 1, 0
        %v2546 = vsel %vm2514, 1, 0
        %v2547 = vsel %vm2515, 1, 0
        %v2548 = vsel %vm2516, 1, 0
        %v2549 = vsel %vm2517, 1, 0
        %v2550 = vsel %vm2518, 1, 0
        %v2551 = vsel %vm2519, 1, 0
        %v2552 = vsel %vm2520, 1, 0
        %v2553 = vsel %vm2521, 1, 0
        %v2554 = vsel %vm2522, 1, 0
        %v2555 = vsel %vm2523, 1, 0
        %v2556 = vsel %vm2524, 1, 0
        %v2557 = vsel %vm2525, 1, 0
        %v2558 = vsel %vm2526, 1, 0
        %v2559 = vsel %vm2527, 1, 0
        %v2560 = vsel %vm2528, 1, 0
        %v2561 = vsel %vm2529, 1, 0
        %v2562 = vsel %vm2530, 1, 0
        %v2563 = vsel %vm2531, 1, 0
        %v2564 = vsel %vm2532, 1, 0
        %v2565 = vsel %vm2533, 1, 0
        %v2566 = vsel %vm2534, 1, 0
        %v2567 = vsel %vm2535, 1, 0
        %v2568 = vsel %vm2536, 1, 0
        %v2569 = vsel %vm2537, 1, 0
        %v2570 = vsel %vm2538, 1, 0
        %v2571 = vcvt.s32.f32 %v2539
        %v2572 = vcvt.s32.f32 %v2540
        %v2573 = vcvt.s32.f32 %v2541
        %v2574 = vcvt.s32.f32 %v2542
        %v2575 = vcvt.s32.f32 %v2543
        %v2576 = vcvt.s32.f32 %v2544
        %v2577 = vcvt.s32.f32 %v2545
        %v2578 = vcvt.s32.f32 %v2546
        %v2579 = vcvt.s32.f32 %v2547
        %v2580 = vcvt.s32.f32 %v2548
        %v2581 = vcvt.s32.f32 %v2549
        %v2582 = vcvt.s32.f32 %v2550
        %v2583 = vcvt.s32.f32 %v2551
        %v2584 = vcvt.s32.f32 %v2552
        %v2585 = vcvt.s32.f32 %v2553
        %v2586 = vcvt.s32.f32 %v2554
        %v2587 = vcvt.s32.f32 %v2555
        %v2588 = vcvt.s32.f32 %v2556
        %v2589 = vcvt.s32.f32 %v2557
        %v2590 = vcvt.s32.f32 %v2558
        %v2591 = vcvt.s32.f32 %v2559
        %v2592 = vcvt.s32.f32 %v2560
        %v2593 = vcvt.s32.f32 %v2561
        %v2594 = vcvt.s32.f32 %v2562
        %v2595 = vcvt.s32.f32 %v2563
        %v2596 = vcvt.s32.f32 %v2564
        %v2597 = vcvt.s32.f32 %v2565
        %v2598 = vcvt.s32.f32 %v2566
        %v2599 = vcvt.s32.f32 %v2567
        %v2600 = vcvt.s32.f32 %v2568
        %v2601 = vcvt.s32.f32 %v2569
        %v2602 = vcvt.s32.f32 %v2570
        %2603 = vmatprep.subr.mxu0 0.0
        %2604 = vmatpush1.msra.mxu0 %v209
        %2605 = vmatprep.subr.mxu0 0.0
        %2606 = vmatpush1.msra.mxu0 %v208
        %2607 = vmatprep.subr.mxu0 0.0
        %2608 = vmatpush1.msra.mxu0 %v207
        %2609 = vmatprep.subr.mxu0 0.0
        %2610 = vmatpush1.msra.mxu0 %v206
        %2611 = vmatprep.subr.mxu0 0.0
        %2612 = vmatpush1.msra.mxu0 %v205
        %2613 = vmatprep.subr.mxu0 0.0
        %2614 = vmatpush1.msra.mxu0 %v204
        %2615 = vmatprep.subr.mxu0 0.0
        %2616 = vmatpush1.msra.mxu0 %v203
        %2617 = vmatprep.subr.mxu0 0.0
        %2618 = vmatpush1.msra.mxu0 %v202
        %2619 = vmatprep.subr.mxu0 0.0
        %2620 = vmatpush1.msra.mxu0 %v201
        %2621 = vmatprep.subr.mxu0 0.0
        %2622 = vmatpush1.msra.mxu0 %v200
        %2623 = vmatprep.subr.mxu0 0.0
        %2624 = vmatpush1.msra.mxu0 %v199
        %2625 = vmatprep.subr.mxu0 0.0
        %2626 = vmatpush1.msra.mxu0 %v198
        %2627 = vmatprep.subr.mxu0 0.0
        %2628 = vmatpush1.msra.mxu0 %v197
        %2629 = vmatprep.subr.mxu0 0.0
        %2630 = vmatpush1.msra.mxu0 %v196
        %2631 = vmatprep.subr.mxu0 0.0
        %2632 = vmatpush1.msra.mxu0 %v195
        %2633 = vmatprep.subr.mxu0 0.0
        %2634 = vmatpush1.msra.mxu0 %v194
        %2635 = vmatprep.subr.mxu0 0.0
        %2636 = vmatpush2.msra.mxu0 %v225
        %2637 = vmatprep.subr.mxu0 0.0
        %2638 = vmatpush2.msra.mxu0 %v224
        %2639 = vmatprep.subr.mxu0 0.0
        %2640 = vmatpush2.msra.mxu0 %v223
        %2641 = vmatprep.subr.mxu0 0.0
        %2642 = vmatpush2.msra.mxu0 %v222
        %2643 = vmatprep.subr.mxu0 0.0
        %2644 = vmatpush2.msra.mxu0 %v221
        %2645 = vmatprep.subr.mxu0 0.0
        %2646 = vmatpush2.msra.mxu0 %v220
        %2647 = vmatprep.subr.mxu0 0.0
        %2648 = vmatpush2.msra.mxu0 %v219
        %2649 = vmatprep.subr.mxu0 0.0
        %2650 = vmatpush2.msra.mxu0 %v218
        %2651 = vmatprep.subr.mxu0 0.0
        %2652 = vmatpush2.msra.mxu0 %v217
        %2653 = vmatprep.subr.mxu0 0.0
        %2654 = vmatpush2.msra.mxu0 %v216
        %2655 = vmatprep.subr.mxu0 0.0
        %2656 = vmatpush2.msra.mxu0 %v215
        %2657 = vmatprep.subr.mxu0 0.0
        %2658 = vmatpush2.msra.mxu0 %v214
        %2659 = vmatprep.subr.mxu0 0.0
        %2660 = vmatpush2.msra.mxu0 %v213
        %2661 = vmatprep.subr.mxu0 0.0
        %2662 = vmatpush2.msra.mxu0 %v212
        %2663 = vmatprep.subr.mxu0 0.0
        %2664 = vmatpush2.msra.mxu0 %v211
        %2665 = vmatprep.subr.mxu0 0.0
        %2666 = vmatpush2.msra.mxu0 %v210
        %2667 = vmatprep.mubr.f32.mxu0 %v2572
        %2668 = vmatmul.mubr.f32.gmra.mxu0 %v2571
        %v2669 = vpop.f32.mrf.mxu0
        %v2670 = vadd.f32 0.0, %v2669
        %v2671 = vpop.f32.mrf.mxu0
        %2672 = vmatprep.mubr.f32.mxu0 %v2574
        %2673 = vmatmul.mubr.f32.gmra.mxu0 %v2573
        %v2674 = vpop.f32.mrf.mxu0
        %v2675 = vadd.f32 0.0, %v2674
        %v2676 = vpop.f32.mrf.mxu0
        %2677 = vmatprep.mubr.f32.mxu0 %v2576
        %2678 = vmatmul.mubr.f32.gmra.mxu0 %v2575
        %v2679 = vpop.f32.mrf.mxu0
        %v2680 = vadd.f32 0.0, %v2679
        %v2681 = vpop.f32.mrf.mxu0
        %2682 = vmatprep.mubr.f32.mxu0 %v2578
        %2683 = vmatmul.mubr.f32.gmra.mxu0 %v2577
        %v2684 = vpop.f32.mrf.mxu0
        %v2685 = vadd.f32 0.0, %v2684
        %v2686 = vpop.f32.mrf.mxu0
        %2687 = vmatprep.mubr.f32.mxu0 %v2580
        %2688 = vmatmul.mubr.f32.gmra.mxu0 %v2579
        %v2689 = vpop.f32.mrf.mxu0
        %v2690 = vadd.f32 0.0, %v2689
        %v2691 = vpop.f32.mrf.mxu0
        %2692 = vmatprep.mubr.f32.mxu0 %v2582
        %2693 = vmatmul.mubr.f32.gmra.mxu0 %v2581
        %v2694 = vpop.f32.mrf.mxu0
        %v2695 = vadd.f32 0.0, %v2694
        %v2696 = vpop.f32.mrf.mxu0
        %2697 = vmatprep.mubr.f32.mxu0 %v2584
        %2698 = vmatmul.mubr.f32.gmra.mxu0 %v2583
        %v2699 = vpop.f32.mrf.mxu0
        %v2700 = vadd.f32 0.0, %v2699
        %v2701 = vpop.f32.mrf.mxu0
        %2702 = vmatprep.mubr.f32.mxu0 %v2586
        %2703 = vmatmul.mubr.f32.gmra.mxu0 %v2585
        %v2704 = vpop.f32.mrf.mxu0
        %v2705 = vadd.f32 0.0, %v2704
        %v2706 = vpop.f32.mrf.mxu0
        %2707 = vmatprep.mubr.f32.mxu0 %v2588
        %2708 = vmatmul.mubr.f32.gmra.mxu0 %v2587
        %v2709 = vpop.f32.mrf.mxu0
        %v2710 = vadd.f32 0.0, %v2709
        %v2711 = vpop.f32.mrf.mxu0
        %2712 = vmatprep.mubr.f32.mxu0 %v2590
        %2713 = vmatmul.mubr.f32.gmra.mxu0 %v2589
        %v2714 = vpop.f32.mrf.mxu0
        %v2715 = vadd.f32 0.0, %v2714
        %v2716 = vpop.f32.mrf.mxu0
        %2717 = vmatprep.mubr.f32.mxu0 %v2592
        %2718 = vmatmul.mubr.f32.gmra.mxu0 %v2591
        %v2719 = vpop.f32.mrf.mxu0
        %v2720 = vadd.f32 0.0, %v2719
        %v2721 = vpop.f32.mrf.mxu0
        %2722 = vmatprep.mubr.f32.mxu0 %v2594
        %2723 = vmatmul.mubr.f32.gmra.mxu0 %v2593
        %v2724 = vpop.f32.mrf.mxu0
        %v2725 = vadd.f32 0.0, %v2724
        %v2726 = vpop.f32.mrf.mxu0
        %2727 = vmatprep.mubr.f32.mxu0 %v2596
        %2728 = vmatmul.mubr.f32.gmra.mxu0 %v2595
        %v2729 = vpop.f32.mrf.mxu0
        %v2730 = vadd.f32 0.0, %v2729
        %v2731 = vpop.f32.mrf.mxu0
        %2732 = vmatprep.mubr.f32.mxu0 %v2598
        %2733 = vmatmul.mubr.f32.gmra.mxu0 %v2597
        %v2734 = vpop.f32.mrf.mxu0
        %v2735 = vadd.f32 0.0, %v2734
        %v2736 = vpop.f32.mrf.mxu0
        %2737 = vmatprep.mubr.f32.mxu0 %v2600
        %2738 = vmatmul.mubr.f32.gmra.mxu0 %v2599
        %v2739 = vpop.f32.mrf.mxu0
        %v2740 = vadd.f32 0.0, %v2739
        %v2741 = vpop.f32.mrf.mxu0
        %2742 = vmatprep.mubr.f32.mxu0 %v2602
        %2743 = vmatmul.mubr.f32.gmra.mxu0 %v2601
        %v2744 = vpop.f32.mrf.mxu0
        %v2745 = vadd.f32 0.0, %v2744
        %v2746 = vpop.f32.mrf.mxu0
        %2747 = vdwg.mxu0
        %2764 = vrot.lane.b32.xlu0 %v2670, 64
        %v2765 = vpop.permute.xlu0 %2764
        %2766 = vrot.lane.b32.xlu0 %v2675, 64
        %v2767 = vpop.permute.xlu0 %2766
        %2768 = vrot.lane.b32.xlu0 %v2680, 64
        %v2769 = vpop.permute.xlu0 %2768
        %2770 = vrot.lane.b32.xlu0 %v2685, 64
        %v2771 = vpop.permute.xlu0 %2770
        %2772 = vrot.lane.b32.xlu0 %v2690, 64
        %v2773 = vpop.permute.xlu0 %2772
        %2774 = vrot.lane.b32.xlu0 %v2695, 64
        %v2775 = vpop.permute.xlu0 %2774
        %2776 = vrot.lane.b32.xlu0 %v2700, 64
        %v2777 = vpop.permute.xlu0 %2776
        %2778 = vrot.lane.b32.xlu0 %v2705, 64
        %v2779 = vpop.permute.xlu0 %2778
        %2780 = vrot.lane.b32.xlu0 %v2710, 64
        %v2781 = vpop.permute.xlu0 %2780
        %2782 = vrot.lane.b32.xlu0 %v2715, 64
        %v2783 = vpop.permute.xlu0 %2782
        %2784 = vrot.lane.b32.xlu0 %v2720, 64
        %v2785 = vpop.permute.xlu0 %2784
        %2786 = vrot.lane.b32.xlu0 %v2725, 64
        %v2787 = vpop.permute.xlu0 %2786
        %2788 = vrot.lane.b32.xlu0 %v2730, 64
        %v2789 = vpop.permute.xlu0 %2788
        %2790 = vrot.lane.b32.xlu0 %v2735, 64
        %v2791 = vpop.permute.xlu0 %2790
        %2792 = vrot.lane.b32.xlu0 %v2740, 64
        %v2793 = vpop.permute.xlu0 %2792
        %2794 = vrot.lane.b32.xlu0 %v2745, 64
        %v2795 = vpop.permute.xlu0 %2794
        %2812 = vst.msk [vmem:[#allocation2 + $0x8] sm:$0xff] %vm1318, %v2765
        %2813 = vst.msk [vmem:[#allocation2 + $0x18] sm:$0xff] %vm1318, %v2767
        %2814 = vst.msk [vmem:[#allocation2 + $0x28] sm:$0xff] %vm1318, %v2769
        %2815 = vst.msk [vmem:[#allocation2 + $0x38] sm:$0xff] %vm1318, %v2771
        %2816 = vst.msk [vmem:[#allocation2 + $0x48] sm:$0xff] %vm1318, %v2773
        %2817 = vst.msk [vmem:[#allocation2 + $0x58] sm:$0xff] %vm1318, %v2775
        %2818 = vst.msk [vmem:[#allocation2 + $0x68] sm:$0xff] %vm1318, %v2777
        %2819 = vst.msk [vmem:[#allocation2 + $0x78] sm:$0xff] %vm1318, %v2779
        %2820 = vst.msk [vmem:[#allocation2 + $0x88] sm:$0xff] %vm1318, %v2781
        %2821 = vst.msk [vmem:[#allocation2 + $0x98] sm:$0xff] %vm1318, %v2783
        %2822 = vst.msk [vmem:[#allocation2 + $0xa8] sm:$0xff] %vm1318, %v2785
        %2823 = vst.msk [vmem:[#allocation2 + $0xb8] sm:$0xff] %vm1318, %v2787
        %2824 = vst.msk [vmem:[#allocation2 + $0xc8] sm:$0xff] %vm1318, %v2789
        %2825 = vst.msk [vmem:[#allocation2 + $0xd8] sm:$0xff] %vm1318, %v2791
        %2826 = vst.msk [vmem:[#allocation2 + $0xe8] sm:$0xff] %vm1318, %v2793
        %2827 = vst.msk [vmem:[#allocation2 + $0xf8] sm:$0xff] %vm1318, %v2795
        %v2828 = vld [vmem:[%s192 + $0x7] sm:$0x1]
        %v2829 = vlaneseq
        %v2830 = vshrl.u32 %v2829, 7
        %v2831 = vsub.s32 0, %v2830
        %v2832 = vrot.slane %v2828, %v2831
        %2834 = vbcast.lane.b32.xlu0 %v2832, 256
        %v2835 = vpop.permute.xlu0 %2834
        %s2837 = sor.u32 256, 8
        %2838 = vbcast.lane.b32.xlu0 %v2832, %s2837
        %v2839 = vpop.permute.xlu0 %2838
        %s2841 = sor.u32 256, 16
        %2842 = vbcast.lane.b32.xlu0 %v2832, %s2841
        %v2843 = vpop.permute.xlu0 %2842
        %s2845 = sor.u32 256, 24
        %2846 = vbcast.lane.b32.xlu0 %v2832, %s2845
        %v2847 = vpop.permute.xlu0 %2846
        %s2849 = sor.u32 256, 32
        %2850 = vbcast.lane.b32.xlu0 %v2832, %s2849
        %v2851 = vpop.permute.xlu0 %2850
        %s2853 = sor.u32 256, 40
        %2854 = vbcast.lane.b32.xlu0 %v2832, %s2853
        %v2855 = vpop.permute.xlu0 %2854
        %s2857 = sor.u32 256, 48
        %2858 = vbcast.lane.b32.xlu0 %v2832, %s2857
        %v2859 = vpop.permute.xlu0 %2858
        %s2861 = sor.u32 256, 56
        %2862 = vbcast.lane.b32.xlu0 %v2832, %s2861
        %v2863 = vpop.permute.xlu0 %2862
        %s2865 = sor.u32 256, 64
        %2866 = vbcast.lane.b32.xlu0 %v2832, %s2865
        %v2867 = vpop.permute.xlu0 %2866
        %s2869 = sor.u32 256, 72
        %2870 = vbcast.lane.b32.xlu0 %v2832, %s2869
        %v2871 = vpop.permute.xlu0 %2870
        %s2873 = sor.u32 256, 80
        %2874 = vbcast.lane.b32.xlu0 %v2832, %s2873
        %v2875 = vpop.permute.xlu0 %2874
        %s2877 = sor.u32 256, 88
        %2878 = vbcast.lane.b32.xlu0 %v2832, %s2877
        %v2879 = vpop.permute.xlu0 %2878
        %s2881 = sor.u32 256, 96
        %2882 = vbcast.lane.b32.xlu0 %v2832, %s2881
        %v2883 = vpop.permute.xlu0 %2882
        %s2885 = sor.u32 256, 104
        %2886 = vbcast.lane.b32.xlu0 %v2832, %s2885
        %v2887 = vpop.permute.xlu0 %2886
        %s2889 = sor.u32 256, 112
        %2890 = vbcast.lane.b32.xlu0 %v2832, %s2889
        %v2891 = vpop.permute.xlu0 %2890
        %s2893 = sor.u32 256, 120
        %2894 = vbcast.lane.b32.xlu0 %v2832, %s2893
        %v2895 = vpop.permute.xlu0 %2894
        %vm2896 = vcmp.eq.s32.totalorder %v2835, %v295
        %vm2897 = vcmp.eq.s32.totalorder %v2835, %v296
        %vm2898 = vcmp.eq.s32.totalorder %v2839, %v295
        %vm2899 = vcmp.eq.s32.totalorder %v2839, %v296
        %vm2900 = vcmp.eq.s32.totalorder %v2843, %v295
        %vm2901 = vcmp.eq.s32.totalorder %v2843, %v296
        %vm2902 = vcmp.eq.s32.totalorder %v2847, %v295
        %vm2903 = vcmp.eq.s32.totalorder %v2847, %v296
        %vm2904 = vcmp.eq.s32.totalorder %v2851, %v295
        %vm2905 = vcmp.eq.s32.totalorder %v2851, %v296
        %vm2906 = vcmp.eq.s32.totalorder %v2855, %v295
        %vm2907 = vcmp.eq.s32.totalorder %v2855, %v296
        %vm2908 = vcmp.eq.s32.totalorder %v2859, %v295
        %vm2909 = vcmp.eq.s32.totalorder %v2859, %v296
        %vm2910 = vcmp.eq.s32.totalorder %v2863, %v295
        %vm2911 = vcmp.eq.s32.totalorder %v2863, %v296
        %vm2912 = vcmp.eq.s32.totalorder %v2867, %v295
        %vm2913 = vcmp.eq.s32.totalorder %v2867, %v296
        %vm2914 = vcmp.eq.s32.totalorder %v2871, %v295
        %vm2915 = vcmp.eq.s32.totalorder %v2871, %v296
        %vm2916 = vcmp.eq.s32.totalorder %v2875, %v295
        %vm2917 = vcmp.eq.s32.totalorder %v2875, %v296
        %vm2918 = vcmp.eq.s32.totalorder %v2879, %v295
        %vm2919 = vcmp.eq.s32.totalorder %v2879, %v296
        %vm2920 = vcmp.eq.s32.totalorder %v2883, %v295
        %vm2921 = vcmp.eq.s32.totalorder %v2883, %v296
        %vm2922 = vcmp.eq.s32.totalorder %v2887, %v295
        %vm2923 = vcmp.eq.s32.totalorder %v2887, %v296
        %vm2924 = vcmp.eq.s32.totalorder %v2891, %v295
        %vm2925 = vcmp.eq.s32.totalorder %v2891, %v296
        %vm2926 = vcmp.eq.s32.totalorder %v2895, %v295
        %vm2927 = vcmp.eq.s32.totalorder %v2895, %v296
        %v2928 = vsel %vm2896, 1, 0
        %v2929 = vsel %vm2897, 1, 0
        %v2930 = vsel %vm2898, 1, 0
        %v2931 = vsel %vm2899, 1, 0
        %v2932 = vsel %vm2900, 1, 0
        %v2933 = vsel %vm2901, 1, 0
        %v2934 = vsel %vm2902, 1, 0
        %v2935 = vsel %vm2903, 1, 0
        %v2936 = vsel %vm2904, 1, 0
        %v2937 = vsel %vm2905, 1, 0
        %v2938 = vsel %vm2906, 1, 0
        %v2939 = vsel %vm2907, 1, 0
        %v2940 = vsel %vm2908, 1, 0
        %v2941 = vsel %vm2909, 1, 0
        %v2942 = vsel %vm2910, 1, 0
        %v2943 = vsel %vm2911, 1, 0
        %v2944 = vsel %vm2912, 1, 0
        %v2945 = vsel %vm2913, 1, 0
        %v2946 = vsel %vm2914, 1, 0
        %v2947 = vsel %vm2915, 1, 0
        %v2948 = vsel %vm2916, 1, 0
        %v2949 = vsel %vm2917, 1, 0
        %v2950 = vsel %vm2918, 1, 0
        %v2951 = vsel %vm2919, 1, 0
        %v2952 = vsel %vm2920, 1, 0
        %v2953 = vsel %vm2921, 1, 0
        %v2954 = vsel %vm2922, 1, 0
        %v2955 = vsel %vm2923, 1, 0
        %v2956 = vsel %vm2924, 1, 0
        %v2957 = vsel %vm2925, 1, 0
        %v2958 = vsel %vm2926, 1, 0
        %v2959 = vsel %vm2927, 1, 0
        %v2960 = vcvt.s32.f32 %v2928
        %v2961 = vcvt.s32.f32 %v2929
        %v2962 = vcvt.s32.f32 %v2930
        %v2963 = vcvt.s32.f32 %v2931
        %v2964 = vcvt.s32.f32 %v2932
        %v2965 = vcvt.s32.f32 %v2933
        %v2966 = vcvt.s32.f32 %v2934
        %v2967 = vcvt.s32.f32 %v2935
        %v2968 = vcvt.s32.f32 %v2936
        %v2969 = vcvt.s32.f32 %v2937
        %v2970 = vcvt.s32.f32 %v2938
        %v2971 = vcvt.s32.f32 %v2939
        %v2972 = vcvt.s32.f32 %v2940
        %v2973 = vcvt.s32.f32 %v2941
        %v2974 = vcvt.s32.f32 %v2942
        %v2975 = vcvt.s32.f32 %v2943
        %v2976 = vcvt.s32.f32 %v2944
        %v2977 = vcvt.s32.f32 %v2945
        %v2978 = vcvt.s32.f32 %v2946
        %v2979 = vcvt.s32.f32 %v2947
        %v2980 = vcvt.s32.f32 %v2948
        %v2981 = vcvt.s32.f32 %v2949
        %v2982 = vcvt.s32.f32 %v2950
        %v2983 = vcvt.s32.f32 %v2951
        %v2984 = vcvt.s32.f32 %v2952
        %v2985 = vcvt.s32.f32 %v2953
        %v2986 = vcvt.s32.f32 %v2954
        %v2987 = vcvt.s32.f32 %v2955
        %v2988 = vcvt.s32.f32 %v2956
        %v2989 = vcvt.s32.f32 %v2957
        %v2990 = vcvt.s32.f32 %v2958
        %v2991 = vcvt.s32.f32 %v2959
        %2992 = vmatprep.subr.mxu0 0.0
        %2993 = vmatpush1.msra.mxu0 %v209
        %2994 = vmatprep.subr.mxu0 0.0
        %2995 = vmatpush1.msra.mxu0 %v208
        %2996 = vmatprep.subr.mxu0 0.0
        %2997 = vmatpush1.msra.mxu0 %v207
        %2998 = vmatprep.subr.mxu0 0.0
        %2999 = vmatpush1.msra.mxu0 %v206
        %3000 = vmatprep.subr.mxu0 0.0
        %3001 = vmatpush1.msra.mxu0 %v205
        %3002 = vmatprep.subr.mxu0 0.0
        %3003 = vmatpush1.msra.mxu0 %v204
        %3004 = vmatprep.subr.mxu0 0.0
        %3005 = vmatpush1.msra.mxu0 %v203
        %3006 = vmatprep.subr.mxu0 0.0
        %3007 = vmatpush1.msra.mxu0 %v202
        %3008 = vmatprep.subr.mxu0 0.0
        %3009 = vmatpush1.msra.mxu0 %v201
        %3010 = vmatprep.subr.mxu0 0.0
        %3011 = vmatpush1.msra.mxu0 %v200
        %3012 = vmatprep.subr.mxu0 0.0
        %3013 = vmatpush1.msra.mxu0 %v199
        %3014 = vmatprep.subr.mxu0 0.0
        %3015 = vmatpush1.msra.mxu0 %v198
        %3016 = vmatprep.subr.mxu0 0.0
        %3017 = vmatpush1.msra.mxu0 %v197
        %3018 = vmatprep.subr.mxu0 0.0
        %3019 = vmatpush1.msra.mxu0 %v196
        %3020 = vmatprep.subr.mxu0 0.0
        %3021 = vmatpush1.msra.mxu0 %v195
        %3022 = vmatprep.subr.mxu0 0.0
        %3023 = vmatpush1.msra.mxu0 %v194
        %3024 = vmatprep.subr.mxu0 0.0
        %3025 = vmatpush2.msra.mxu0 %v225
        %3026 = vmatprep.subr.mxu0 0.0
        %3027 = vmatpush2.msra.mxu0 %v224
        %3028 = vmatprep.subr.mxu0 0.0
        %3029 = vmatpush2.msra.mxu0 %v223
        %3030 = vmatprep.subr.mxu0 0.0
        %3031 = vmatpush2.msra.mxu0 %v222
        %3032 = vmatprep.subr.mxu0 0.0
        %3033 = vmatpush2.msra.mxu0 %v221
        %3034 = vmatprep.subr.mxu0 0.0
        %3035 = vmatpush2.msra.mxu0 %v220
        %3036 = vmatprep.subr.mxu0 0.0
        %3037 = vmatpush2.msra.mxu0 %v219
        %3038 = vmatprep.subr.mxu0 0.0
        %3039 = vmatpush2.msra.mxu0 %v218
        %3040 = vmatprep.subr.mxu0 0.0
        %3041 = vmatpush2.msra.mxu0 %v217
        %3042 = vmatprep.subr.mxu0 0.0
        %3043 = vmatpush2.msra.mxu0 %v216
        %3044 = vmatprep.subr.mxu0 0.0
        %3045 = vmatpush2.msra.mxu0 %v215
        %3046 = vmatprep.subr.mxu0 0.0
        %3047 = vmatpush2.msra.mxu0 %v214
        %3048 = vmatprep.subr.mxu0 0.0
        %3049 = vmatpush2.msra.mxu0 %v213
        %3050 = vmatprep.subr.mxu0 0.0
        %3051 = vmatpush2.msra.mxu0 %v212
        %3052 = vmatprep.subr.mxu0 0.0
        %3053 = vmatpush2.msra.mxu0 %v211
        %3054 = vmatprep.subr.mxu0 0.0
        %3055 = vmatpush2.msra.mxu0 %v210
        %3056 = vmatprep.mubr.f32.mxu0 %v2961
        %3057 = vmatmul.mubr.f32.gmra.mxu0 %v2960
        %v3058 = vpop.f32.mrf.mxu0
        %v3059 = vadd.f32 0.0, %v3058
        %v3060 = vpop.f32.mrf.mxu0
        %3061 = vmatprep.mubr.f32.mxu0 %v2963
        %3062 = vmatmul.mubr.f32.gmra.mxu0 %v2962
        %v3063 = vpop.f32.mrf.mxu0
        %v3064 = vadd.f32 0.0, %v3063
        %v3065 = vpop.f32.mrf.mxu0
        %3066 = vmatprep.mubr.f32.mxu0 %v2965
        %3067 = vmatmul.mubr.f32.gmra.mxu0 %v2964
        %v3068 = vpop.f32.mrf.mxu0
        %v3069 = vadd.f32 0.0, %v3068
        %v3070 = vpop.f32.mrf.mxu0
        %3071 = vmatprep.mubr.f32.mxu0 %v2967
        %3072 = vmatmul.mubr.f32.gmra.mxu0 %v2966
        %v3073 = vpop.f32.mrf.mxu0
        %v3074 = vadd.f32 0.0, %v3073
        %v3075 = vpop.f32.mrf.mxu0
        %3076 = vmatprep.mubr.f32.mxu0 %v2969
        %3077 = vmatmul.mubr.f32.gmra.mxu0 %v2968
        %v3078 = vpop.f32.mrf.mxu0
        %v3079 = vadd.f32 0.0, %v3078
        %v3080 = vpop.f32.mrf.mxu0
        %3081 = vmatprep.mubr.f32.mxu0 %v2971
        %3082 = vmatmul.mubr.f32.gmra.mxu0 %v2970
        %v3083 = vpop.f32.mrf.mxu0
        %v3084 = vadd.f32 0.0, %v3083
        %v3085 = vpop.f32.mrf.mxu0
        %3086 = vmatprep.mubr.f32.mxu0 %v2973
        %3087 = vmatmul.mubr.f32.gmra.mxu0 %v2972
        %v3088 = vpop.f32.mrf.mxu0
        %v3089 = vadd.f32 0.0, %v3088
        %v3090 = vpop.f32.mrf.mxu0
        %3091 = vmatprep.mubr.f32.mxu0 %v2975
        %3092 = vmatmul.mubr.f32.gmra.mxu0 %v2974
        %v3093 = vpop.f32.mrf.mxu0
        %v3094 = vadd.f32 0.0, %v3093
        %v3095 = vpop.f32.mrf.mxu0
        %3096 = vmatprep.mubr.f32.mxu0 %v2977
        %3097 = vmatmul.mubr.f32.gmra.mxu0 %v2976
        %v3098 = vpop.f32.mrf.mxu0
        %v3099 = vadd.f32 0.0, %v3098
        %v3100 = vpop.f32.mrf.mxu0
        %3101 = vmatprep.mubr.f32.mxu0 %v2979
        %3102 = vmatmul.mubr.f32.gmra.mxu0 %v2978
        %v3103 = vpop.f32.mrf.mxu0
        %v3104 = vadd.f32 0.0, %v3103
        %v3105 = vpop.f32.mrf.mxu0
        %3106 = vmatprep.mubr.f32.mxu0 %v2981
        %3107 = vmatmul.mubr.f32.gmra.mxu0 %v2980
        %v3108 = vpop.f32.mrf.mxu0
        %v3109 = vadd.f32 0.0, %v3108
        %v3110 = vpop.f32.mrf.mxu0
        %3111 = vmatprep.mubr.f32.mxu0 %v2983
        %3112 = vmatmul.mubr.f32.gmra.mxu0 %v2982
        %v3113 = vpop.f32.mrf.mxu0
        %v3114 = vadd.f32 0.0, %v3113
        %v3115 = vpop.f32.mrf.mxu0
        %3116 = vmatprep.mubr.f32.mxu0 %v2985
        %3117 = vmatmul.mubr.f32.gmra.mxu0 %v2984
        %v3118 = vpop.f32.mrf.mxu0
        %v3119 = vadd.f32 0.0, %v3118
        %v3120 = vpop.f32.mrf.mxu0
        %3121 = vmatprep.mubr.f32.mxu0 %v2987
        %3122 = vmatmul.mubr.f32.gmra.mxu0 %v2986
        %v3123 = vpop.f32.mrf.mxu0
        %v3124 = vadd.f32 0.0, %v3123
        %v3125 = vpop.f32.mrf.mxu0
        %3126 = vmatprep.mubr.f32.mxu0 %v2989
        %3127 = vmatmul.mubr.f32.gmra.mxu0 %v2988
        %v3128 = vpop.f32.mrf.mxu0
        %v3129 = vadd.f32 0.0, %v3128
        %v3130 = vpop.f32.mrf.mxu0
        %3131 = vmatprep.mubr.f32.mxu0 %v2991
        %3132 = vmatmul.mubr.f32.gmra.mxu0 %v2990
        %v3133 = vpop.f32.mrf.mxu0
        %v3134 = vadd.f32 0.0, %v3133
        %v3135 = vpop.f32.mrf.mxu0
        %3136 = vdwg.mxu0
        %3153 = vrot.lane.b32.xlu0 %v3059, 96
        %v3154 = vpop.permute.xlu0 %3153
        %3155 = vrot.lane.b32.xlu0 %v3064, 96
        %v3156 = vpop.permute.xlu0 %3155
        %3157 = vrot.lane.b32.xlu0 %v3069, 96
        %v3158 = vpop.permute.xlu0 %3157
        %3159 = vrot.lane.b32.xlu0 %v3074, 96
        %v3160 = vpop.permute.xlu0 %3159
        %3161 = vrot.lane.b32.xlu0 %v3079, 96
        %v3162 = vpop.permute.xlu0 %3161
        %3163 = vrot.lane.b32.xlu0 %v3084, 96
        %v3164 = vpop.permute.xlu0 %3163
        %3165 = vrot.lane.b32.xlu0 %v3089, 96
        %v3166 = vpop.permute.xlu0 %3165
        %3167 = vrot.lane.b32.xlu0 %v3094, 96
        %v3168 = vpop.permute.xlu0 %3167
        %3169 = vrot.lane.b32.xlu0 %v3099, 96
        %v3170 = vpop.permute.xlu0 %3169
        %3171 = vrot.lane.b32.xlu0 %v3104, 96
        %v3172 = vpop.permute.xlu0 %3171
        %3173 = vrot.lane.b32.xlu0 %v3109, 96
        %v3174 = vpop.permute.xlu0 %3173
        %3175 = vrot.lane.b32.xlu0 %v3114, 96
        %v3176 = vpop.permute.xlu0 %3175
        %3177 = vrot.lane.b32.xlu0 %v3119, 96
        %v3178 = vpop.permute.xlu0 %3177
        %3179 = vrot.lane.b32.xlu0 %v3124, 96
        %v3180 = vpop.permute.xlu0 %3179
        %3181 = vrot.lane.b32.xlu0 %v3129, 96
        %v3182 = vpop.permute.xlu0 %3181
        %3183 = vrot.lane.b32.xlu0 %v3134, 96
        %v3184 = vpop.permute.xlu0 %3183
        %3201 = vst.msk [vmem:[#allocation2 + $0x8] sm:$0xff] %vm1708, %v3154
        %3202 = vst.msk [vmem:[#allocation2 + $0x18] sm:$0xff] %vm1708, %v3156
        %3203 = vst.msk [vmem:[#allocation2 + $0x28] sm:$0xff] %vm1708, %v3158
        %3204 = vst.msk [vmem:[#allocation2 + $0x38] sm:$0xff] %vm1708, %v3160
        %3205 = vst.msk [vmem:[#allocation2 + $0x48] sm:$0xff] %vm1708, %v3162
        %3206 = vst.msk [vmem:[#allocation2 + $0x58] sm:$0xff] %vm1708, %v3164
        %3207 = vst.msk [vmem:[#allocation2 + $0x68] sm:$0xff] %vm1708, %v3166
        %3208 = vst.msk [vmem:[#allocation2 + $0x78] sm:$0xff] %vm1708, %v3168
        %3209 = vst.msk [vmem:[#allocation2 + $0x88] sm:$0xff] %vm1708, %v3170
        %3210 = vst.msk [vmem:[#allocation2 + $0x98] sm:$0xff] %vm1708, %v3172
        %3211 = vst.msk [vmem:[#allocation2 + $0xa8] sm:$0xff] %vm1708, %v3174
        %3212 = vst.msk [vmem:[#allocation2 + $0xb8] sm:$0xff] %vm1708, %v3176
        %3213 = vst.msk [vmem:[#allocation2 + $0xc8] sm:$0xff] %vm1708, %v3178
        %3214 = vst.msk [vmem:[#allocation2 + $0xd8] sm:$0xff] %vm1708, %v3180
        %3215 = vst.msk [vmem:[#allocation2 + $0xe8] sm:$0xff] %vm1708, %v3182
        %3216 = vst.msk [vmem:[#allocation2 + $0xf8] sm:$0xff] %vm1708, %v3184
        %v3217 = vld [vmem:[#allocation2] sm:$0xff]
        %v3218 = vld [vmem:[#allocation2 + $0x8] sm:$0xff]
        %v3219 = vld [vmem:[#allocation2 + $0x10] sm:$0xff]
        %v3220 = vld [vmem:[#allocation2 + $0x18] sm:$0xff]
        %v3221 = vld [vmem:[#allocation2 + $0x20] sm:$0xff]
        %v3222 = vld [vmem:[#allocation2 + $0x28] sm:$0xff]
        %v3223 = vld [vmem:[#allocation2 + $0x30] sm:$0xff]
        %v3224 = vld [vmem:[#allocation2 + $0x38] sm:$0xff]
        %v3225 = vld [vmem:[#allocation2 + $0x40] sm:$0xff]
        %v3226 = vld [vmem:[#allocation2 + $0x48] sm:$0xff]
        %v3227 = vld [vmem:[#allocation2 + $0x50] sm:$0xff]
        %v3228 = vld [vmem:[#allocation2 + $0x58] sm:$0xff]
        %v3229 = vld [vmem:[#allocation2 + $0x60] sm:$0xff]
        %v3230 = vld [vmem:[#allocation2 + $0x68] sm:$0xff]
        %v3231 = vld [vmem:[#allocation2 + $0x70] sm:$0xff]
        %v3232 = vld [vmem:[#allocation2 + $0x78] sm:$0xff]
        %v3233 = vld [vmem:[#allocation2 + $0x80] sm:$0xff]
        %v3234 = vld [vmem:[#allocation2 + $0x88] sm:$0xff]
        %v3235 = vld [vmem:[#allocation2 + $0x90] sm:$0xff]
        %v3236 = vld [vmem:[#allocation2 + $0x98] sm:$0xff]
        %v3237 = vld [vmem:[#allocation2 + $0xa0] sm:$0xff]
        %v3238 = vld [vmem:[#allocation2 + $0xa8] sm:$0xff]
        %v3239 = vld [vmem:[#allocation2 + $0xb0] sm:$0xff]
        %v3240 = vld [vmem:[#allocation2 + $0xb8] sm:$0xff]
        %v3241 = vld [vmem:[#allocation2 + $0xc0] sm:$0xff]
        %v3242 = vld [vmem:[#allocation2 + $0xc8] sm:$0xff]
        %v3243 = vld [vmem:[#allocation2 + $0xd0] sm:$0xff]
        %v3244 = vld [vmem:[#allocation2 + $0xd8] sm:$0xff]
        %v3245 = vld [vmem:[#allocation2 + $0xe0] sm:$0xff]
        %v3246 = vld [vmem:[#allocation2 + $0xe8] sm:$0xff]
        %v3247 = vld [vmem:[#allocation2 + $0xf0] sm:$0xff]
        %v3248 = vld [vmem:[#allocation2 + $0xf8] sm:$0xff]
        %v3249 = vld [vmem:[%s2] sm:$0xff]
        %v3250 = vld [vmem:[%s2 + $0x8] sm:$0xff]
        %v3251 = vld [vmem:[%s2 + $0x10] sm:$0xff]
        %v3252 = vld [vmem:[%s2 + $0x18] sm:$0xff]
        %v3253 = vld [vmem:[%s2 + $0x20] sm:$0xff]
        %v3254 = vld [vmem:[%s2 + $0x28] sm:$0xff]
        %v3255 = vld [vmem:[%s2 + $0x30] sm:$0xff]
        %v3256 = vld [vmem:[%s2 + $0x38] sm:$0xff]
        %v3257 = vld [vmem:[%s2 + $0x40] sm:$0xff]
        %v3258 = vld [vmem:[%s2 + $0x48] sm:$0xff]
        %v3259 = vld [vmem:[%s2 + $0x50] sm:$0xff]
        %v3260 = vld [vmem:[%s2 + $0x58] sm:$0xff]
        %v3261 = vld [vmem:[%s2 + $0x60] sm:$0xff]
        %v3262 = vld [vmem:[%s2 + $0x68] sm:$0xff]
        %v3263 = vld [vmem:[%s2 + $0x70] sm:$0xff]
        %v3264 = vld [vmem:[%s2 + $0x78] sm:$0xff]
        %v3265 = vld [vmem:[%s2 + $0x80] sm:$0xff]
        %v3266 = vld [vmem:[%s2 + $0x88] sm:$0xff]
        %v3267 = vld [vmem:[%s2 + $0x90] sm:$0xff]
        %v3268 = vld [vmem:[%s2 + $0x98] sm:$0xff]
        %v3269 = vld [vmem:[%s2 + $0xa0] sm:$0xff]
        %v3270 = vld [vmem:[%s2 + $0xa8] sm:$0xff]
        %v3271 = vld [vmem:[%s2 + $0xb0] sm:$0xff]
        %v3272 = vld [vmem:[%s2 + $0xb8] sm:$0xff]
        %v3273 = vld [vmem:[%s2 + $0xc0] sm:$0xff]
        %v3274 = vld [vmem:[%s2 + $0xc8] sm:$0xff]
        %v3275 = vld [vmem:[%s2 + $0xd0] sm:$0xff]
        %v3276 = vld [vmem:[%s2 + $0xd8] sm:$0xff]
        %v3277 = vld [vmem:[%s2 + $0xe0] sm:$0xff]
        %v3278 = vld [vmem:[%s2 + $0xe8] sm:$0xff]
        %v3279 = vld [vmem:[%s2 + $0xf0] sm:$0xff]
        %v3280 = vld [vmem:[%s2 + $0xf8] sm:$0xff]
        %v3281 = vld [vmem:[%s3] sm:$0x1]
        %v3283 = vlaneseq
        %v3284 = vshrl.u32 %v3283, 7
        %v3285 = vsub.s32 0, %v3284
        %v3286 = vrot.slane %v3281, %v3285
        %3288 = vmatprep.subr.mxu0 0.0
        %3289 = vmatpush1.msra.mxu0 %v3264
        %3290 = vmatprep.subr.mxu0 0.0
        %3291 = vmatpush1.msra.mxu0 %v3263
        %3292 = vmatprep.subr.mxu0 0.0
        %3293 = vmatpush1.msra.mxu0 %v3262
        %3294 = vmatprep.subr.mxu0 0.0
        %3295 = vmatpush1.msra.mxu0 %v3261
        %3296 = vmatprep.subr.mxu0 0.0
        %3297 = vmatpush1.msra.mxu0 %v3260
        %3298 = vmatprep.subr.mxu0 0.0
        %3299 = vmatpush1.msra.mxu0 %v3259
        %3300 = vmatprep.subr.mxu0 0.0
        %3301 = vmatpush1.msra.mxu0 %v3258
        %3302 = vmatprep.subr.mxu0 0.0
        %3303 = vmatpush1.msra.mxu0 %v3257
        %3304 = vmatprep.subr.mxu0 0.0
        %3305 = vmatpush1.msra.mxu0 %v3256
        %3306 = vmatprep.subr.mxu0 0.0
        %3307 = vmatpush1.msra.mxu0 %v3255
        %3308 = vmatprep.subr.mxu0 0.0
        %3309 = vmatpush1.msra.mxu0 %v3254
        %3310 = vmatprep.subr.mxu0 0.0
        %3311 = vmatpush1.msra.mxu0 %v3253
        %3312 = vmatprep.subr.mxu0 0.0
        %3313 = vmatpush1.msra.mxu0 %v3252
        %3314 = vmatprep.subr.mxu0 0.0
        %3315 = vmatpush1.msra.mxu0 %v3251
        %3316 = vmatprep.subr.mxu0 0.0
        %3317 = vmatpush1.msra.mxu0 %v3250
        %3318 = vmatprep.subr.mxu0 0.0
        %3319 = vmatpush1.msra.mxu0 %v3249
        %3320 = vmatprep.subr.mxu0 0.0
        %3321 = vmatpush2.msra.mxu0 %v3280
        %3322 = vmatprep.subr.mxu0 0.0
        %3323 = vmatpush2.msra.mxu0 %v3279
        %3324 = vmatprep.subr.mxu0 0.0
        %3325 = vmatpush2.msra.mxu0 %v3278
        %3326 = vmatprep.subr.mxu0 0.0
        %3327 = vmatpush2.msra.mxu0 %v3277
        %3328 = vmatprep.subr.mxu0 0.0
        %3329 = vmatpush2.msra.mxu0 %v3276
        %3330 = vmatprep.subr.mxu0 0.0
        %3331 = vmatpush2.msra.mxu0 %v3275
        %3332 = vmatprep.subr.mxu0 0.0
        %3333 = vmatpush2.msra.mxu0 %v3274
        %3334 = vmatprep.subr.mxu0 0.0
        %3335 = vmatpush2.msra.mxu0 %v3273
        %3336 = vmatprep.subr.mxu0 0.0
        %3337 = vmatpush2.msra.mxu0 %v3272
        %3338 = vmatprep.subr.mxu0 0.0
        %3339 = vmatpush2.msra.mxu0 %v3271
        %3340 = vmatprep.subr.mxu0 0.0
        %3341 = vmatpush2.msra.mxu0 %v3270
        %3342 = vmatprep.subr.mxu0 0.0
        %3343 = vmatpush2.msra.mxu0 %v3269
        %3344 = vmatprep.subr.mxu0 0.0
        %3345 = vmatpush2.msra.mxu0 %v3268
        %3346 = vmatprep.subr.mxu0 0.0
        %3347 = vmatpush2.msra.mxu0 %v3267
        %3348 = vmatprep.subr.mxu0 0.0
        %3349 = vmatpush2.msra.mxu0 %v3266
        %3350 = vmatprep.subr.mxu0 0.0
        %3351 = vmatpush2.msra.mxu0 %v3265
        %3352 = vmatprep.mubr.f32.mxu0 %v3218
        %3353 = vmatmul.mubr.f32.gmra.mxu0 %v3217
        %v3354 = vpop.f32.mrf.mxu0
        %v3355 = vadd.f32 %v3286, %v3354
        %v3356 = vpop.f32.mrf.mxu0
        %3357 = vmatprep.mubr.f32.mxu0 %v3220
        %3358 = vmatmul.mubr.f32.gmra.mxu0 %v3219
        %v3359 = vpop.f32.mrf.mxu0
        %v3360 = vadd.f32 %v3286, %v3359
        %v3361 = vpop.f32.mrf.mxu0
        %3362 = vmatprep.mubr.f32.mxu0 %v3222
        %3363 = vmatmul.mubr.f32.gmra.mxu0 %v3221
        %v3364 = vpop.f32.mrf.mxu0
        %v3365 = vadd.f32 %v3286, %v3364
        %v3366 = vpop.f32.mrf.mxu0
        %3367 = vmatprep.mubr.f32.mxu0 %v3224
        %3368 = vmatmul.mubr.f32.gmra.mxu0 %v3223
        %v3369 = vpop.f32.mrf.mxu0
        %v3370 = vadd.f32 %v3286, %v3369
        %v3371 = vpop.f32.mrf.mxu0
        %3372 = vmatprep.mubr.f32.mxu0 %v3226
        %3373 = vmatmul.mubr.f32.gmra.mxu0 %v3225
        %v3374 = vpop.f32.mrf.mxu0
        %v3375 = vadd.f32 %v3286, %v3374
        %v3376 = vpop.f32.mrf.mxu0
        %3377 = vmatprep.mubr.f32.mxu0 %v3228
        %3378 = vmatmul.mubr.f32.gmra.mxu0 %v3227
        %v3379 = vpop.f32.mrf.mxu0
        %v3380 = vadd.f32 %v3286, %v3379
        %v3381 = vpop.f32.mrf.mxu0
        %3382 = vmatprep.mubr.f32.mxu0 %v3230
        %3383 = vmatmul.mubr.f32.gmra.mxu0 %v3229
        %v3384 = vpop.f32.mrf.mxu0
        %v3385 = vadd.f32 %v3286, %v3384
        %v3386 = vpop.f32.mrf.mxu0
        %3387 = vmatprep.mubr.f32.mxu0 %v3232
        %3388 = vmatmul.mubr.f32.gmra.mxu0 %v3231
        %v3389 = vpop.f32.mrf.mxu0
        %v3390 = vadd.f32 %v3286, %v3389
        %v3391 = vpop.f32.mrf.mxu0
        %3392 = vmatprep.mubr.f32.mxu0 %v3234
        %3393 = vmatmul.mubr.f32.gmra.mxu0 %v3233
        %v3394 = vpop.f32.mrf.mxu0
        %v3395 = vadd.f32 %v3286, %v3394
        %v3396 = vpop.f32.mrf.mxu0
        %3397 = vmatprep.mubr.f32.mxu0 %v3236
        %3398 = vmatmul.mubr.f32.gmra.mxu0 %v3235
        %v3399 = vpop.f32.mrf.mxu0
        %v3400 = vadd.f32 %v3286, %v3399
        %v3401 = vpop.f32.mrf.mxu0
        %3402 = vmatprep.mubr.f32.mxu0 %v3238
        %3403 = vmatmul.mubr.f32.gmra.mxu0 %v3237
        %v3404 = vpop.f32.mrf.mxu0
        %v3405 = vadd.f32 %v3286, %v3404
        %v3406 = vpop.f32.mrf.mxu0
        %3407 = vmatprep.mubr.f32.mxu0 %v3240
        %3408 = vmatmul.mubr.f32.gmra.mxu0 %v3239
        %v3409 = vpop.f32.mrf.mxu0
        %v3410 = vadd.f32 %v3286, %v3409
        %v3411 = vpop.f32.mrf.mxu0
        %3412 = vmatprep.mubr.f32.mxu0 %v3242
        %3413 = vmatmul.mubr.f32.gmra.mxu0 %v3241
        %v3414 = vpop.f32.mrf.mxu0
        %v3415 = vadd.f32 %v3286, %v3414
        %v3416 = vpop.f32.mrf.mxu0
        %3417 = vmatprep.mubr.f32.mxu0 %v3244
        %3418 = vmatmul.mubr.f32.gmra.mxu0 %v3243
        %v3419 = vpop.f32.mrf.mxu0
        %v3420 = vadd.f32 %v3286, %v3419
        %v3421 = vpop.f32.mrf.mxu0
        %3422 = vmatprep.mubr.f32.mxu0 %v3246
        %3423 = vmatmul.mubr.f32.gmra.mxu0 %v3245
        %v3424 = vpop.f32.mrf.mxu0
        %v3425 = vadd.f32 %v3286, %v3424
        %v3426 = vpop.f32.mrf.mxu0
        %3427 = vmatprep.mubr.f32.mxu0 %v3248
        %3428 = vmatmul.mubr.f32.gmra.mxu0 %v3247
        %v3429 = vpop.f32.mrf.mxu0
        %v3430 = vadd.f32 %v3286, %v3429
        %v3431 = vpop.f32.mrf.mxu0
        %3432 = vdwg.mxu0
        %v3433 = vxor.u32 %v3355, 2147483648
        %v3434 = vxor.u32 %v3360, 2147483648
        %v3435 = vxor.u32 %v3365, 2147483648
        %v3436 = vxor.u32 %v3370, 2147483648
        %v3437 = vxor.u32 %v3375, 2147483648
        %v3438 = vxor.u32 %v3380, 2147483648
        %v3439 = vxor.u32 %v3385, 2147483648
        %v3440 = vxor.u32 %v3390, 2147483648
        %v3441 = vxor.u32 %v3395, 2147483648
        %v3442 = vxor.u32 %v3400, 2147483648
        %v3443 = vxor.u32 %v3405, 2147483648
        %v3444 = vxor.u32 %v3410, 2147483648
        %v3445 = vxor.u32 %v3415, 2147483648
        %v3446 = vxor.u32 %v3420, 2147483648
        %v3447 = vxor.u32 %v3425, 2147483648
        %v3448 = vxor.u32 %v3430, 2147483648
        %v3449 = vmul.f32 %v3433, 1.442695
        %v3450 = vpow.pop %v3449
        %v3451 = vmul.f32 %v3434, 1.442695
        %v3452 = vpow.pop %v3451
        %v3453 = vmul.f32 %v3435, 1.442695
        %v3454 = vpow.pop %v3453
        %v3455 = vmul.f32 %v3436, 1.442695
        %v3456 = vpow.pop %v3455
        %v3457 = vmul.f32 %v3437, 1.442695
        %v3458 = vpow.pop %v3457
        %v3459 = vmul.f32 %v3438, 1.442695
        %v3460 = vpow.pop %v3459
        %v3461 = vmul.f32 %v3439, 1.442695
        %v3462 = vpow.pop %v3461
        %v3463 = vmul.f32 %v3440, 1.442695
        %v3464 = vpow.pop %v3463
        %v3465 = vmul.f32 %v3441, 1.442695
        %v3466 = vpow.pop %v3465
        %v3467 = vmul.f32 %v3442, 1.442695
        %v3468 = vpow.pop %v3467
        %v3469 = vmul.f32 %v3443, 1.442695
        %v3470 = vpow.pop %v3469
        %v3471 = vmul.f32 %v3444, 1.442695
        %v3472 = vpow.pop %v3471
        %v3473 = vmul.f32 %v3445, 1.442695
        %v3474 = vpow.pop %v3473
        %v3475 = vmul.f32 %v3446, 1.442695
        %v3476 = vpow.pop %v3475
        %v3477 = vmul.f32 %v3447, 1.442695
        %v3478 = vpow.pop %v3477
        %v3479 = vmul.f32 %v3448, 1.442695
        %v3480 = vpow.pop %v3479
        %v3481 = vadd.f32 %v3450, 1.0
        %v3482 = vadd.f32 %v3452, 1.0
        %v3483 = vadd.f32 %v3454, 1.0
        %v3484 = vadd.f32 %v3456, 1.0
        %v3485 = vadd.f32 %v3458, 1.0
        %v3486 = vadd.f32 %v3460, 1.0
        %v3487 = vadd.f32 %v3462, 1.0
        %v3488 = vadd.f32 %v3464, 1.0
        %v3489 = vadd.f32 %v3466, 1.0
        %v3490 = vadd.f32 %v3468, 1.0
        %v3491 = vadd.f32 %v3470, 1.0
        %v3492 = vadd.f32 %v3472, 1.0
        %v3493 = vadd.f32 %v3474, 1.0
        %v3494 = vadd.f32 %v3476, 1.0
        %v3495 = vadd.f32 %v3478, 1.0
        %v3496 = vadd.f32 %v3480, 1.0
        %v3497 = vrcp.pop %v3481
        %v3498 = vmul.f32 1.0, %v3497
        %v3499 = vrcp.pop %v3482
        %v3500 = vmul.f32 1.0, %v3499
        %v3501 = vrcp.pop %v3483
        %v3502 = vmul.f32 1.0, %v3501
        %v3503 = vrcp.pop %v3484
        %v3504 = vmul.f32 1.0, %v3503
        %v3505 = vrcp.pop %v3485
        %v3506 = vmul.f32 1.0, %v3505
        %v3507 = vrcp.pop %v3486
        %v3508 = vmul.f32 1.0, %v3507
        %v3509 = vrcp.pop %v3487
        %v3510 = vmul.f32 1.0, %v3509
        %v3511 = vrcp.pop %v3488
        %v3512 = vmul.f32 1.0, %v3511
        %v3513 = vrcp.pop %v3489
        %v3514 = vmul.f32 1.0, %v3513
        %v3515 = vrcp.pop %v3490
        %v3516 = vmul.f32 1.0, %v3515
        %v3517 = vrcp.pop %v3491
        %v3518 = vmul.f32 1.0, %v3517
        %v3519 = vrcp.pop %v3492
        %v3520 = vmul.f32 1.0, %v3519
        %v3521 = vrcp.pop %v3493
        %v3522 = vmul.f32 1.0, %v3521
        %v3523 = vrcp.pop %v3494
        %v3524 = vmul.f32 1.0, %v3523
        %v3525 = vrcp.pop %v3495
        %v3526 = vmul.f32 1.0, %v3525
        %v3527 = vrcp.pop %v3496
        %v3528 = vmul.f32 1.0, %v3527
        %3529 = vst [vmem:[%s188] sm:$0xff] %v3498
        %3530 = vst [vmem:[%s188 + $0x8] sm:$0xff] %v3500
        %3531 = vst [vmem:[%s188 + $0x10] sm:$0xff] %v3502
        %3532 = vst [vmem:[%s188 + $0x18] sm:$0xff] %v3504
        %3533 = vst [vmem:[%s188 + $0x20] sm:$0xff] %v3506
        %3534 = vst [vmem:[%s188 + $0x28] sm:$0xff] %v3508
        %3535 = vst [vmem:[%s188 + $0x30] sm:$0xff] %v3510
        %3536 = vst [vmem:[%s188 + $0x38] sm:$0xff] %v3512
        %3537 = vst [vmem:[%s188 + $0x40] sm:$0xff] %v3514
        %3538 = vst [vmem:[%s188 + $0x48] sm:$0xff] %v3516
        %3539 = vst [vmem:[%s188 + $0x50] sm:$0xff] %v3518
        %3540 = vst [vmem:[%s188 + $0x58] sm:$0xff] %v3520
        %3541 = vst [vmem:[%s188 + $0x60] sm:$0xff] %v3522
        %3542 = vst [vmem:[%s188 + $0x68] sm:$0xff] %v3524
        %3543 = vst [vmem:[%s188 + $0x70] sm:$0xff] %v3526
        %3544 = vst [vmem:[%s188 + $0x78] sm:$0xff] %v3528
        %s3545 = sand.u32 %s115, 1
        %s3546 = scalar_lea.sflag [#allocation4], %s3545
        %s3547 = sand.u32 %s115, 1
        %s3548 = smul.addr %s3547, 128
        %s3549 = scalar_lea.vmem [#allocation3], %s3548
        // Predicated region
        $region37: #{tpu_custom_call.1} parent=35 // pred_check
          %p3550 = pneg %p125
        $region38: #{tpu_custom_call.1} parent=35 // pred_check_branch
          %3552 = sbr.rel (%p3550) target = $region40
        $region39: #{tpu_custom_call.1} parent=35 // pred_region
          %s3553 = smul.u32 16, %s18
          %s3555 = ssub.s32 2048, 2048
          %3556 = vsyncadd %s3546, %s3555
          %s3557 = smul.addr %s3553, 128
          %s3558 = scalar_lea.hbm %s4, %s3557
          %s3559 = sshll.u32 %s3549, 4
          %s3560 = int_to_ptr.vmem [resolvable:$true] %s3559
          %3565 = dma.vmem_to_hbm [thread:$0]  %s3560, 2048, %s3558, %s3546, 128, 128, 8
        $region40: #{tpu_custom_call.1} parent=35 // pred_fallthru
          _
      $region36: #{tpu_custom_call.1} parent=5 // pred_fallthru
        _
      %p3566 = scmp.le.s32.totalorder 2, %s13
      // Predicated region
      $region41: #{tpu_custom_call.1} parent=5 // pred_check
        %p3567 = pneg %p3566
      $region42: #{tpu_custom_call.1} parent=5 // pred_check_branch
        %3569 = sbr.rel (%p3567) target = $region44
      $region43: #{tpu_custom_call.1} parent=5 // pred_region
        %s3570 = ssub.s32 %s13, 2
        // Predicated region
        $region45: #{tpu_custom_call.1} parent=43 // pred_check
          %p3571 = pneg %p131
        $region46: #{tpu_custom_call.1} parent=43 // pred_check_branch
          %3573 = sbr.rel (%p3571) target = $region48
        $region47: #{tpu_custom_call.1} parent=43 // pred_region
          %s3574 = sand.u32 %s116, 1
          %s3575 = scalar_lea.sflag [#allocation4], %s3574
          %s3576 = sand.u32 %s116, 1
          %s3577 = smul.addr %s3576, 128
          %s3578 = scalar_lea.vmem [#allocation3], %s3577
          %3579 = dma.done %s3575, 2048
        $region48: #{tpu_custom_call.1} parent=43 // pred_fallthru
          _
      $region44: #{tpu_custom_call.1} parent=5 // pred_fallthru
        _
    $region6: #{tpu_custom_call.1} parent=1 // loop_footer
      %s17 = sadd.s32 1, %s13
    $region7: #{tpu_custom_call.1} parent=1 // loop_footer_branch
      %12 = sbr.rel target = $region3
    $region8: #{tpu_custom_call.1} parent=1 // loop_exit
      _
    %3580 = vsyncpa [#allocation4], 1
    %s3581 = scalar_lea.sflag [#allocation4], 1
    %3582 = vsyncpa %s3581, 1

</llo_original>
